<compile_context>
chip_gen: v7x
topology: tpu7x:2x2x1
jax: 0.10.0
libtpu: 0.0.40
codegen_flags: <defaults>
</compile_context>

<pallas_src>
import functools

import jax
import jax.numpy as jnp
from jax.experimental import pallas as pl
from jax.experimental.pallas import tpu as pltpu

EPS_BN = 1e-5
ACT_DTYPE = jnp.bfloat16            # streamed activations / matmul operands
VMEM_LIMIT = 32 * 1024 * 1024       # safe on v5e/v6e/v7x


# --------------------------------------------------------------------------
# helpers
# --------------------------------------------------------------------------

def _ru(x, m):
    return (x + m - 1) // m * m


def _pad2(x, rows, cols, val=0.0):
    r, c = x.shape
    if r == rows and c == cols:
        return x
    return jnp.pad(x, ((0, rows - r), (0, cols - c)), constant_values=val)


# --------------------------------------------------------------------------
# tiled matmul:  y = act( [relu(x*scale+shift)] @ W + b )
# --------------------------------------------------------------------------

def _matmul_kernel(*refs, prologue, prologue_relu, relu):
    if prologue:
        x_ref, w_ref, b_ref, sc_ref, sh_ref, o_ref, acc_ref = refs
    else:
        x_ref, w_ref, b_ref, o_ref, acc_ref = refs
    k = pl.program_id(2)

    @pl.when(k == 0)
    def _():
        acc_ref[...] = jnp.zeros_like(acc_ref)

    if prologue:
        x = x_ref[...].astype(jnp.float32) * sc_ref[...] + sh_ref[...]
        if prologue_relu:
            x = jnp.maximum(x, 0.0)
        a = x.astype(ACT_DTYPE)
    else:
        a = x_ref[...]
    acc_ref[...] += jnp.dot(a, w_ref[...], preferred_element_type=jnp.float32)

    @pl.when(k == pl.num_programs(2) - 1)
    def _():
        y = acc_ref[...] + b_ref[...]
        if relu:
            y = jnp.maximum(y, 0.0)
        o_ref[...] = y.astype(o_ref.dtype)


def matmul(x, w, b=None, *, prologue=None, prologue_relu=False, relu=False,
           out_dtype=ACT_DTYPE):
    """Returns the padded (Mp, Np) result; callers slice with logical dims."""
    M, K = x.shape
    N = w.shape[1]
    tm = min(256, _ru(M, 8));   Mp = _ru(M, tm)
    tn = min(256, _ru(N, 128)); Np = _ru(N, tn)
    tk = min(512, _ru(K, 128)); Kp = _ru(K, tk)

    xp = _pad2(x, Mp, Kp).astype(ACT_DTYPE)
    wp = _pad2(w, Kp, Np).astype(ACT_DTYPE)
    bp = (jnp.zeros((1, Np), jnp.float32) if b is None
          else _pad2(jnp.asarray(b, jnp.float32).reshape(1, -1), 1, Np))

    ins = [xp, wp, bp]
    in_specs = [
        pl.BlockSpec((tm, tk), lambda i, j, k: (i, k)),
        pl.BlockSpec((tk, tn), lambda i, j, k: (k, j)),
        pl.BlockSpec((1, tn), lambda i, j, k: (0, j)),
    ]
    if prologue is not None:
        sc, sh = prologue
        ins += [_pad2(sc.astype(jnp.float32), 1, Kp, 1.0),
                _pad2(sh.astype(jnp.float32), 1, Kp, 0.0)]
        in_specs += [pl.BlockSpec((1, tk), lambda i, j, k: (0, k)),
                     pl.BlockSpec((1, tk), lambda i, j, k: (0, k))]

    kern = functools.partial(_matmul_kernel, prologue=prologue is not None,
                             prologue_relu=prologue_relu, relu=relu)
    return pl.pallas_call(
        kern,
        out_shape=jax.ShapeDtypeStruct((Mp, Np), out_dtype),
        grid=(Mp // tm, Np // tn, Kp // tk),
        in_specs=in_specs,
        out_specs=pl.BlockSpec((tm, tn), lambda i, j, k: (i, j)),
        scratch_shapes=[pltpu.VMEM((tm, tn), jnp.float32)],
        compiler_params=pltpu.CompilerParams(
            dimension_semantics=("parallel", "parallel", "arbitrary"),
            vmem_limit_bytes=VMEM_LIMIT),
    )(*ins)


# --------------------------------------------------------------------------
# two-pass BatchNorm: tiled column sum / sumsq reduction (masked rows)
# --------------------------------------------------------------------------

def _colstats_kernel(y_ref, s_ref, q_ref, sacc, qacc, *, m_real, tm):
    m = pl.program_id(1)

    @pl.when(m == 0)
    def _():
        sacc[...] = jnp.zeros_like(sacc)
        qacc[...] = jnp.zeros_like(qacc)

    y = y_ref[...].astype(jnp.float32)
    rows = jax.lax.broadcasted_iota(jnp.int32, y.shape, 0) + m * tm
    y = jnp.where(rows < m_real, y, 0.0)
    sacc[...] += jnp.sum(y, axis=0, keepdims=True)
    qacc[...] += jnp.sum(y * y, axis=0, keepdims=True)

    @pl.when(m == pl.num_programs(1) - 1)
    def _():
        s_ref[...] = sacc[...]
        q_ref[...] = qacc[...]


def col_stats(y, m_real):
    R, C = y.shape
    tm = min(256, _ru(R, 8));   Rp = _ru(R, tm)
    tn = min(256, _ru(C, 128)); Cp = _ru(C, tn)
    yp = _pad2(y, Rp, Cp)
    s, q = pl.pallas_call(
        functools.partial(_colstats_kernel, m_real=m_real, tm=tm),
        out_shape=(jax.ShapeDtypeStruct((1, Cp), jnp.float32),
                   jax.ShapeDtypeStruct((1, Cp), jnp.float32)),
        grid=(Cp // tn, Rp // tm),
        in_specs=[pl.BlockSpec((tm, tn), lambda n, m: (m, n))],
        out_specs=(pl.BlockSpec((1, tn), lambda n, m: (0, n)),
                   pl.BlockSpec((1, tn), lambda n, m: (0, n))),
        scratch_shapes=[pltpu.VMEM((1, tn), jnp.float32),
                        pltpu.VMEM((1, tn), jnp.float32)],
        compiler_params=pltpu.CompilerParams(
            dimension_semantics=("parallel", "arbitrary"),
            vmem_limit_bytes=VMEM_LIMIT),
    )(yp)
    return s[:, :C], q[:, :C]


def bn_scale_shift(s, q, m_real, gamma, beta):
    """Training-mode BN folded to per-column scale/shift (with affine)."""
    C = s.shape[1]
    g = _pad2(jnp.asarray(gamma, jnp.float32).reshape(1, -1), 1, C, 1.0)
    b = _pad2(jnp.asarray(beta, jnp.float32).reshape(1, -1), 1, C, 0.0)
    mean = s / m_real
    var = jnp.maximum(q / m_real - mean * mean, 0.0)
    scale = g * jax.lax.rsqrt(var + EPS_BN)
    shift = b - mean * scale
    return scale, shift


# --------------------------------------------------------------------------
# elementwise y = act(x*scale + shift)  (materializes a BN when needed)
# --------------------------------------------------------------------------

def _ssact_kernel(x_ref, sc_ref, sh_ref, o_ref, *, relu):
    y = x_ref[...].astype(jnp.float32) * sc_ref[...] + sh_ref[...]
    if relu:
        y = jnp.maximum(y, 0.0)
    o_ref[...] = y.astype(o_ref.dtype)


def scale_shift_act(x, scale, shift, *, relu=False, out_dtype=ACT_DTYPE):
    R, C = x.shape
    tm = min(256, _ru(R, 8));   Rp = _ru(R, tm)
    tn = min(256, _ru(C, 128)); Cp = _ru(C, tn)
    out = pl.pallas_call(
        functools.partial(_ssact_kernel, relu=relu),
        out_shape=jax.ShapeDtypeStruct((Rp, Cp), out_dtype),
        grid=(Rp // tm, Cp // tn),
        in_specs=[pl.BlockSpec((tm, tn), lambda i, j: (i, j)),
                  pl.BlockSpec((1, tn), lambda i, j: (0, j)),
                  pl.BlockSpec((1, tn), lambda i, j: (0, j))],
        out_specs=pl.BlockSpec((tm, tn), lambda i, j: (i, j)),
        compiler_params=pltpu.CompilerParams(
            dimension_semantics=("parallel", "parallel"),
            vmem_limit_bytes=VMEM_LIMIT),
    )(_pad2(x, Rp, Cp), _pad2(scale, 1, Cp, 1.0), _pad2(shift, 1, Cp, 0.0))
    return out[:R, :C]


# --------------------------------------------------------------------------
# fused expansion: base[b] = relu(bn(gene_emb)) + 0.2 * pos_stream(sel[b])
# (scalar-prefetch chooses the propagated stream for graph 0, identity else)
# --------------------------------------------------------------------------

def _expand_kernel(sel_ref, gene_ref, pos_ref, sc_ref, sh_ref, o_ref, *, lam):
    g = jnp.maximum(
        gene_ref[...].astype(jnp.float32) * sc_ref[...] + sh_ref[...], 0.0)
    o_ref[...] = (g[None] + lam * pos_ref[...].astype(jnp.float32)
                  ).astype(o_ref.dtype)


def expand_base(gene_emb, pos_streams, scale, shift, sel, *, lam=0.2,
                out_dtype=ACT_DTYPE):
    G, Hp = gene_emb.shape
    B = sel.shape[0]
    grid_spec = pltpu.PrefetchScalarGridSpec(
        num_scalar_prefetch=1,
        grid=(B,),
        in_specs=[
            pl.BlockSpec((G, Hp), lambda b, sel: (0, 0)),
            pl.BlockSpec((1, G, Hp), lambda b, sel: (sel[b], 0, 0)),
            pl.BlockSpec((1, Hp), lambda b, sel: (0, 0)),
            pl.BlockSpec((1, Hp), lambda b, sel: (0, 0)),
        ],
        out_specs=pl.BlockSpec((1, G, Hp), lambda b, sel: (b, 0, 0)),
    )
    return pl.pallas_call(
        functools.partial(_expand_kernel, lam=lam),
        out_shape=jax.ShapeDtypeStruct((B, G, Hp), out_dtype),
        grid_spec=grid_spec,
        compiler_params=pltpu.CompilerParams(
            dimension_semantics=("arbitrary",),
            vmem_limit_bytes=VMEM_LIMIT),
    )(sel, gene_emb, pos_streams, scale, shift)


# --------------------------------------------------------------------------
# fused small-M MLP: Linear-BN-ReLU-Linear-BN in one block (masked stats)
# --------------------------------------------------------------------------

def _mlp2_kernel(x_ref, w1_ref, b1_ref, g1_ref, e1_ref,
                 w2_ref, b2_ref, g2_ref, e2_ref, o_ref, *, m_real):
    inv_m = 1.0 / m_real
    y1 = jnp.dot(x_ref[...], w1_ref[...],
                 preferred_element_type=jnp.float32) + b1_ref[...]
    m1 = (jax.lax.broadcasted_iota(jnp.int32, y1.shape, 0) < m_real
          ).astype(jnp.float32)
    mu = jnp.sum(y1 * m1, axis=0, keepdims=True) * inv_m
    var = jnp.maximum(
        jnp.sum(y1 * y1 * m1, axis=0, keepdims=True) * inv_m - mu * mu, 0.0)
    h = (y1 - mu) * jax.lax.rsqrt(var + EPS_BN) * g1_ref[...] + e1_ref[...]
    h = jnp.maximum(h, 0.0)

    y2 = jnp.dot(h.astype(ACT_DTYPE), w2_ref[...],
                 preferred_element_type=jnp.float32) + b2_ref[...]
    m2 = (jax.lax.broadcasted_iota(jnp.int32, y2.shape, 0) < m_real
          ).astype(jnp.float32)
    mu2 = jnp.sum(y2 * m2, axis=0, keepdims=True) * inv_m
    var2 = jnp.maximum(
        jnp.sum(y2 * y2 * m2, axis=0, keepdims=True) * inv_m - mu2 * mu2, 0.0)
    o_ref[...] = (y2 - mu2) * jax.lax.rsqrt(var2 + EPS_BN) * g2_ref[...] \
        + e2_ref[...]


def mlp2_small(x, w1, b1, g1, e1, w2, b2, g2, e2, *, m_real):
    M, K = x.shape
    N1, N2 = w1.shape[1], w2.shape[1]
    Mp = _ru(max(M, 8), 8)
    Kp, N1p, N2p = _ru(K, 128), _ru(N1, 128), _ru(N2, 128)
    ins = [
        _pad2(x.astype(jnp.float32), Mp, Kp).astype(ACT_DTYPE),
        _pad2(w1, Kp, N1p).astype(ACT_DTYPE),
        _pad2(jnp.asarray(b1, jnp.float32).reshape(1, -1), 1, N1p),
        _pad2(jnp.asarray(g1, jnp.float32).reshape(1, -1), 1, N1p, 1.0),
        _pad2(jnp.asarray(e1, jnp.float32).reshape(1, -1), 1, N1p),
        _pad2(w2, N1p, N2p).astype(ACT_DTYPE),
        _pad2(jnp.asarray(b2, jnp.float32).reshape(1, -1), 1, N2p),
        _pad2(jnp.asarray(g2, jnp.float32).reshape(1, -1), 1, N2p, 1.0),
        _pad2(jnp.asarray(e2, jnp.float32).reshape(1, -1), 1, N2p),
    ]
    in_specs = [pl.BlockSpec(a.shape, lambda *_: (0, 0)) for a in ins]
    return pl.pallas_call(
        functools.partial(_mlp2_kernel, m_real=m_real),
        out_shape=jax.ShapeDtypeStruct((Mp, N2p), jnp.float32),
        grid=(1,),
        in_specs=in_specs,
        out_specs=pl.BlockSpec((Mp, N2p), lambda *_: (0, 0)),
        compiler_params=pltpu.CompilerParams(vmem_limit_bytes=VMEM_LIMIT),
    )(*ins)


# --------------------------------------------------------------------------
# per-gene decoder kernels
# --------------------------------------------------------------------------

def _indv1_kernel(rec_ref, w_ref, b_ref, o_ref):
    prod = rec_ref[...].astype(jnp.float32) * w_ref[...][None]     # (1, G, Hp)
    red = jnp.sum(prod, axis=2)                                    # (1, G)
    o_ref[...] = (red + b_ref[...])[:, None, :]


def indv1(rec, w1, b1):
    """out1[b,g] = sum_h rec[b,g,h]*w1[g,h] + b1[g]  (G lane-dense output)."""
    B, G, Hp = rec.shape
    out = pl.pallas_call(
        _indv1_kernel,
        out_shape=jax.ShapeDtypeStruct((B, 1, G), jnp.float32),
        grid=(B,),
        in_specs=[pl.BlockSpec((1, G, Hp), lambda b: (b, 0, 0)),
                  pl.BlockSpec((G, Hp), lambda b: (0, 0)),
                  pl.BlockSpec((1, G), lambda b: (0, 0))],
        out_specs=pl.BlockSpec((1, 1, G), lambda b: (b, 0, 0)),
        compiler_params=pltpu.CompilerParams(
            dimension_semantics=("parallel",),
            vmem_limit_bytes=VMEM_LIMIT),
    )(rec, w1, b1)
    return out.reshape(B, G)


def _indv2_kernel(o1_ref, c_ref, w2a_ref, w2b_ref, b2_ref, x_ref, o_ref):
    dotp = jnp.dot(c_ref[...], w2b_ref[...], preferred_element_type=jnp.float32)
    o_ref[...] = o1_ref[...] * w2a_ref[...] + dotp + b2_ref[...] + x_ref[...]


def indv2(out1, cross, w2a, w2bT, b2, xres):
    B, G = out1.shape
    Hp = _ru(w2bT.shape[0], 128)
    Bp = _ru(B, 8)
    tg = min(512, _ru(G, 128))
    Gp = _ru(G, tg)
    out = pl.pallas_call(
        _indv2_kernel,
        out_shape=jax.ShapeDtypeStruct((Bp, Gp), jnp.float32),
        grid=(Gp // tg,),
        in_specs=[pl.BlockSpec((Bp, tg), lambda g: (0, g)),
                  pl.BlockSpec((Bp, Hp), lambda g: (0, 0)),
                  pl.BlockSpec((1, tg), lambda g: (0, g)),
                  pl.BlockSpec((Hp, tg), lambda g: (0, g)),
                  pl.BlockSpec((1, tg), lambda g: (0, g)),
                  pl.BlockSpec((Bp, tg), lambda g: (0, g))],
        out_specs=pl.BlockSpec((Bp, tg), lambda g: (0, g)),
        compiler_params=pltpu.CompilerParams(
            dimension_semantics=("parallel",),
            vmem_limit_bytes=VMEM_LIMIT),
    )(_pad2(out1, Bp, Gp),
      _pad2(cross.astype(jnp.float32), Bp, Hp).astype(ACT_DTYPE),
      _pad2(w2a.reshape(1, -1), 1, Gp),
      _pad2(w2bT, Hp, Gp).astype(ACT_DTYPE),
      _pad2(b2.reshape(1, -1), 1, Gp),
      _pad2(xres, Bp, Gp))
    return out[:B, :G]


# --------------------------------------------------------------------------
# plain-JAX glue: torch_geometric gcn_norm as a dense normalized adjacency
# --------------------------------------------------------------------------

def gcn_norm_dense(src, dst, w, num_nodes):
    loops = jnp.arange(num_nodes, dtype=src.dtype)
    src = jnp.concatenate([src, loops])
    dst = jnp.concatenate([dst, loops])
    w = jnp.concatenate([w.astype(jnp.float32),
                         jnp.ones((num_nodes,), jnp.float32)])
    deg = jnp.zeros((num_nodes,), jnp.float32).at[dst].add(w)
    dinv = jnp.where(deg > 0, jax.lax.rsqrt(jnp.where(deg > 0, deg, 1.0)), 0.0)
    norm = dinv[src] * w * dinv[dst]
    return jnp.zeros((num_nodes, num_nodes), jnp.float32).at[dst, src].add(norm)


# --------------------------------------------------------------------------
# GEARS forward (no_perturb=False, uncertainty=False)
# --------------------------------------------------------------------------

def gears_forward(params, x_flat, pert_idx, *, B, G, P, H,
                  n_gene_gnn=1, n_go_gnn=1):
    Hp = _ru(H, 128)
    M = B * G

    # gene embedding + bn_emb + ReLU.  The embedding rows are tiled B times,
    # so the (B*G)-row batch stats equal the (G)-row stats: compute them once.
    gene_p = _pad2(params["gene_emb"], G, Hp)
    s, q = col_stats(gene_p, G)
    sc_e, sh_e = bn_scale_shift(s, q, G, params["bn_emb_g"], params["bn_emb_b"])

    # coexpression SGConv stack.  Only graph 0's rows see neighbour
    # aggregation (edges index genes [0, G)); other graphs' rows reduce to
    # the normalized self-loop (identity) -- two (G, H) streams.
    pos_p = _pad2(params["emb_pos"], G, Hp)
    A_co = params["A_coexpress"]
    s0, sr = pos_p, pos_p
    for i in range(n_gene_gnn):
        prop0 = matmul(A_co, s0)[:G, :Hp]
        stacked = jnp.concatenate(
            [prop0, sr[:G, :Hp].astype(prop0.dtype)], axis=0)
        S = matmul(stacked, params["sg_pos_w"][i], params["sg_pos_b"][i],
                   relu=(i < n_gene_gnn - 1))
        s0, sr = S[:G, :Hp], S[G:2 * G, :Hp]

    # base_emb[b] = relu(bn(gene_emb)) + 0.2 * pos_stream(b)
    sel = jnp.minimum(jnp.arange(B, dtype=jnp.int32), 1)
    base3d = expand_base(gene_p, jnp.stack([s0, sr], axis=0), sc_e, sh_e, sel,
                         lam=0.2)
    X0 = base3d.reshape(M, Hp)

    # emb_trans_v2 : Linear-BN-ReLU-Linear-BN (BN+ReLU folded as prologue)
    y1 = matmul(X0, params["etv2_w1"], params["etv2_b1"])
    s, q = col_stats(y1, M)
    sc1, sh1 = bn_scale_shift(s, q, M, params["etv2_bn1_g"], params["etv2_bn1_b"])
    y2 = matmul(y1, params["etv2_w2"], params["etv2_b2"],
                prologue=(sc1, sh1), prologue_relu=True)
    s, q = col_stats(y2, M)
    sc2, sh2 = bn_scale_shift(s, q, M, params["etv2_bn2_g"], params["etv2_bn2_b"])

    # GO-graph SGConv stack for perturbation embeddings
    pert = _pad2(params["pert_emb"], P, Hp)
    A_sim = params["A_sim"]
    for i in range(n_go_gnn):
        prop = matmul(A_sim, pert)[:P, :Hp]
        pert = matmul(prop, params["sg_sim_w"][i], params["sg_sim_b"][i],
                      relu=(i < n_go_gnn - 1))
    pert = pert[:P, :Hp].astype(jnp.float32)

    # perturbation fusion (python bookkeeping is trace-time glue)
    D = jnp.zeros((B, Hp), jnp.float32)
    pairs = [(gi, pj) for gi, plist in enumerate(pert_idx)
             for pj in plist if pj != -1]
    if pairs:
        track = {}
        for gi, pj in pairs:
            v = pert[pj]
            track[gi] = track[gi] + v if gi in track else v
        vals = list(track.values())
        # reference module duplicates a single row before its training-mode BN
        stacked = jnp.stack(vals * 2 if len(vals) == 1 else vals)
        emb_total = mlp2_small(stacked,
                               params["pf_w1"], params["pf_b1"],
                               params["pf_bn1_g"], params["pf_bn1_b"],
                               params["pf_w2"], params["pf_b2"],
                               params["pf_bn2_g"], params["pf_bn2_b"],
                               m_real=stacked.shape[0])
        for idx, gi in enumerate(track.keys()):
            D = D.at[gi].set(emb_total[idx, :Hp])

    # materialize emb_trans_v2's final BN, add per-graph perturbation vectors
    z = scale_shift_act(y2, sc2, sh2, relu=False, out_dtype=jnp.float32)
    base3 = (z[:M].reshape(B, G, Hp) + D[:, None, :]).reshape(M, Hp)

    # bn_pert_base + ReLU folded into recovery_w's first matmul
    s, q = col_stats(base3, M)
    sc3, sh3 = bn_scale_shift(s, q, M, params["bn_pert_base_g"],
                              params["bn_pert_base_b"])
    r1 = matmul(base3, params["rec_w1"], params["rec_b1"],
                prologue=(sc3, sh3), prologue_relu=True)
    s, q = col_stats(r1, M)
    sc4, sh4 = bn_scale_shift(s, q, M, params["rec_bn1_g"], params["rec_bn1_b"])
    r2 = matmul(r1, params["rec_w2"], params["rec_b2"],
                prologue=(sc4, sh4), prologue_relu=True)
    s, q = col_stats(r2, M)
    sc5, sh5 = bn_scale_shift(s, q, M, params["rec_bn2_g"], params["rec_bn2_b"])

    # per-gene decoder stage 1; recovery_w's final BN folded into indv_w1/b1
    w1_pad = _pad2(params["indv_w1"], G, Hp)
    w1f = w1_pad * sc5
    b1f = (params["indv_b1"].reshape(1, G)
           + jnp.sum(w1_pad * sh5, axis=1).reshape(1, G))
    out1 = indv1(r2[:M].reshape(B, G, Hp), w1f, b1f)          # (B, G)

    # cross_gene_state MLP (tiny M -> single fused kernel)
    cross = mlp2_small(out1, params["cg_w1"], params["cg_b1"],
                       params["cg_bn1_g"], params["cg_bn1_b"],
                       params["cg_w2"], params["cg_b2"],
                       params["cg_bn2_g"], params["cg_bn2_b"], m_real=B)

    # per-gene decoder stage 2 + residual x
    out = indv2(out1, cross, params["indv_w2a"], params["indv_w2bT"],
                params["indv_b2"], x_flat.reshape(B, G))
    return out                                                # (B, G)


# --------------------------------------------------------------------------
# parameter init (fresh, torch-like init; BN affine = 1/0 as at torch init)
# --------------------------------------------------------------------------

def init_params(key, *, B, G, P, H, E_co=24, E_sim=12,
                n_gene_gnn=1, n_go_gnn=1):
    keys = iter(jax.random.split(key, 96))
    nxt = lambda: next(keys)

    def nrm(shape, scale=0.1):
        return (scale * jax.random.normal(nxt(), shape)).astype(jnp.float32)

    def renorm(e, max_norm=1.0):  # nn.Embedding(max_norm=True) row renorm
        n = jnp.linalg.norm(e, axis=1, keepdims=True)
        return e * jnp.minimum(1.0, max_norm / jnp.maximum(n, 1e-7))

    p = {}
    p["gene_emb"] = renorm(nrm((G, H), 1.0))
    p["emb_pos"] = renorm(nrm((G, H), 1.0))
    p["pert_emb"] = renorm(nrm((P, H), 1.0))

    # random edge lists: G_coexpress over genes [0, G), G_go over perts [0, P)
    src_co = jax.random.randint(nxt(), (E_co,), 0, G)
    dst_co = (src_co + jax.random.randint(nxt(), (E_co,), 1, G)) % G
    w_co = jax.random.uniform(nxt(), (E_co,), jnp.float32, 0.1, 1.0)
    p["A_coexpress"] = gcn_norm_dense(src_co, dst_co, w_co, G)

    src_si = jax.random.randint(nxt(), (E_sim,), 0, P)
    dst_si = (src_si + jax.random.randint(nxt(), (E_sim,), 1, P)) % P
    w_si = jax.random.uniform(nxt(), (E_sim,), jnp.float32, 0.1, 1.0)
    p["A_sim"] = gcn_norm_dense(src_si, dst_si, w_si, P)

    p["sg_pos_w"] = [nrm((H, H)) for _ in range(n_gene_gnn)]
    p["sg_pos_b"] = [nrm((H,)) for _ in range(n_gene_gnn)]
    p["sg_sim_w"] = [nrm((H, H)) for _ in range(n_go_gnn)]
    p["sg_sim_b"] = [nrm((H,)) for _ in range(n_go_gnn)]

    def bn(name, dim):
        p[name + "_g"] = jnp.ones((dim,), jnp.float32)
        p[name + "_b"] = jnp.zeros((dim,), jnp.float32)

    bn("bn_emb", H)
    bn("bn_pert_base", H)

    p["etv2_w1"], p["etv2_b1"] = nrm((H, H)), nrm((H,)); bn("etv2_bn1", H)
    p["etv2_w2"], p["etv2_b2"] = nrm((H, H)), nrm((H,)); bn("etv2_bn2", H)
    p["pf_w1"], p["pf_b1"] = nrm((H, H)), nrm((H,)); bn("pf_bn1", H)
    p["pf_w2"], p["pf_b2"] = nrm((H, H)), nrm((H,)); bn("pf_bn2", H)
    p["rec_w1"], p["rec_b1"] = nrm((H, 2 * H)), nrm((2 * H,)); bn("rec_bn1", 2 * H)
    p["rec_w2"], p["rec_b2"] = nrm((2 * H, H)), nrm((H,)); bn("rec_bn2", H)
    p["cg_w1"], p["cg_b1"] = nrm((G, H)), nrm((H,)); bn("cg_bn1", H)
    p["cg_w2"], p["cg_b2"] = nrm((H, H)), nrm((H,)); bn("cg_bn2", H)

    p["indv_w1"] = nrm((G, H))                 # torch (G, H, 1) squeezed
    p["indv_b1"] = nrm((G,))                   # torch (G, 1) squeezed
    w2 = nrm((G, H + 1))                       # torch (1, G, H+1)
    p["indv_w2a"] = w2[:, 0].reshape(1, G)
    p["indv_w2bT"] = jnp.transpose(w2[:, 1:])  # (H, G)
    p["indv_b2"] = nrm((1, G))
    return p


if __name__ == "__main__":
    B, G, P, H = 2, 16, 8, 32   # num_graphs, num_genes, num_perts, hidden_size
    key = jax.random.PRNGKey(0)
    kp, kx = jax.random.split(key)
    params = init_params(kp, B=B, G=G, P=P, H=H)
    x = jax.random.normal(kx, (B * G,), jnp.float32)   # data.x (expression)
    pert_idx = [[1], [3, -1]]                          # data.pert_idx

    # pert_idx / shapes are baked in at trace time; jit fuses the glue ops
    # around the pallas_calls and removes per-call host dispatch overhead.
    fwd = jax.jit(lambda p, xf: gears_forward(p, xf, pert_idx,
                                              B=B, G=G, P=P, H=H))
    out = jax.block_until_ready(fwd(params, x))
    assert out.shape == (B, G)
    assert bool(jnp.all(jnp.isfinite(out)))
    print("KERNEL_OK")
</pallas_src>

<mosaic_0001>
module attributes {stable_mosaic.version = 11 : i64} {
  func.func @_matmul_kernel(%arg0: i32, %arg1: i32, %arg2: i32, %arg3: memref<16x128xbf16, #tpu.memory_space<vmem>>, %arg4: memref<128x128xbf16, #tpu.memory_space<vmem>>, %arg5: memref<1x128xf32, #tpu.memory_space<vmem>>, %arg6: memref<16x128xbf16, #tpu.memory_space<vmem>>, %arg7: memref<16x128xf32, #tpu.memory_space<vmem>>) attributes {dimension_semantics = [#tpu.dimension_semantics<parallel>, #tpu.dimension_semantics<parallel>, #tpu.dimension_semantics<arbitrary>], iteration_bounds = array<i64: 1, 1, 1>, scalar_prefetch = 0 : i64, scratch_operands = 1 : i64, tpu.core_type = #tpu.core_type<tc>, window_params = [{transform_indices = @transform_0, window_bounds = array<i64: 16, 128>}, {transform_indices = @transform_1, window_bounds = array<i64: 128, 128>}, {transform_indices = @transform_2, window_bounds = array<i64: 1, 128>}, {transform_indices = @transform_3, window_bounds = array<i64: 16, 128>}]} {
    %c0_i32 = arith.constant 0 : i32
    %0 = arith.cmpi eq, %arg2, %c0_i32 : i32
    %1 = arith.extui %0 : i1 to i32
    %c0_i32_0 = arith.constant 0 : i32
    %2 = arith.cmpi ne, %1, %c0_i32_0 : i32
    scf.if %2 {
      %cst_10 = arith.constant 0.000000e+00 : f32
      %12 = vector.broadcast %cst_10 : f32 to vector<16x128xf32>
      %c0_11 = arith.constant 0 : index
      %c0_12 = arith.constant 0 : index
      %13 = vector.load %arg7[%c0_11, %c0_12] : memref<16x128xf32, #tpu.memory_space<vmem>>, vector<16x128xf32>
      tpu.vector_store %arg7[%c0_11, %c0_12], %12 {strides = array<i32>} : memref<16x128xf32, #tpu.memory_space<vmem>>, vector<16x128xf32>,
    } else {
    }
    %c0 = arith.constant 0 : index
    %c0_1 = arith.constant 0 : index
    %3 = vector.load %arg3[%c0, %c0_1] : memref<16x128xbf16, #tpu.memory_space<vmem>>, vector<16x128xbf16>
    %c0_2 = arith.constant 0 : index
    %c0_3 = arith.constant 0 : index
    %4 = vector.load %arg7[%c0_2, %c0_3] : memref<16x128xf32, #tpu.memory_space<vmem>>, vector<16x128xf32>
    %c0_4 = arith.constant 0 : index
    %c0_5 = arith.constant 0 : index
    %5 = vector.load %arg4[%c0_4, %c0_5] : memref<128x128xbf16, #tpu.memory_space<vmem>>, vector<128x128xbf16>
    %cst = arith.constant dense<0.000000e+00> : vector<16x128xf32>
    %6 = tpu.matmul %3, %5, %cst {dimension_numbers = #tpu.dot_dimension_numbers<[1], [0], [0], [1], [0, 0, 1, 1], [], []>} : vector<16x128xbf16>, vector<128x128xbf16>, vector<16x128xf32> -> vector<16x128xf32>
    %7 = arith.addf %4, %6 : vector<16x128xf32>
    %c0_6 = arith.constant 0 : index
    %c0_7 = arith.constant 0 : index
    %8 = vector.load %arg7[%c0_6, %c0_7] : memref<16x128xf32, #tpu.memory_space<vmem>>, vector<16x128xf32>
    tpu.vector_store %arg7[%c0_6, %c0_7], %7 {strides = array<i32>} : memref<16x128xf32, #tpu.memory_space<vmem>>, vector<16x128xf32>,
    %c0_i32_8 = arith.constant 0 : i32
    %9 = arith.cmpi eq, %arg2, %c0_i32_8 : i32
    %10 = arith.extui %9 : i1 to i32
    %c0_i32_9 = arith.constant 0 : i32
    %11 = arith.cmpi ne, %10, %c0_i32_9 : i32
    scf.if %11 {
      %c0_10 = arith.constant 0 : index
      %c0_11 = arith.constant 0 : index
      %12 = vector.load %arg7[%c0_10, %c0_11] : memref<16x128xf32, #tpu.memory_space<vmem>>, vector<16x128xf32>
      %c0_12 = arith.constant 0 : index
      %c0_13 = arith.constant 0 : index
      %13 = vector.load %arg5[%c0_12, %c0_13] : memref<1x128xf32, #tpu.memory_space<vmem>>, vector<1x128xf32>
      %14 = vector.broadcast %13 : vector<1x128xf32> to vector<16x128xf32>
      %15 = arith.addf %12, %14 : vector<16x128xf32>
      %16 = arith.truncf %15 : vector<16x128xf32> to vector<16x128xbf16>
      %c0_14 = arith.constant 0 : index
      %c0_15 = arith.constant 0 : index
      %17 = vector.load %arg6[%c0_14, %c0_15] : memref<16x128xbf16, #tpu.memory_space<vmem>>, vector<16x128xbf16>
      tpu.vector_store %arg6[%c0_14, %c0_15], %16 {strides = array<i32>} : memref<16x128xbf16, #tpu.memory_space<vmem>>, vector<16x128xbf16>,
    } else {
    }
    return
  }
  func.func @transform_0(%arg0: i32, %arg1: i32, %arg2: i32) -> (i32, i32) {
    %c0_i32 = arith.constant 0 : i32
    return %arg0, %arg2 : i32, i32
  }
  func.func @transform_1(%arg0: i32, %arg1: i32, %arg2: i32) -> (i32, i32) {
    %c0_i32 = arith.constant 0 : i32
    return %arg2, %arg1 : i32, i32
  }
  func.func @transform_2(%arg0: i32, %arg1: i32, %arg2: i32) -> (i32, i32) {
    %c0_i32 = arith.constant 0 : i32
    %c0_i32_0 = arith.constant 0 : i32
    return %c0_i32, %arg1 : i32, i32
  }
  func.func @transform_3(%arg0: i32, %arg1: i32, %arg2: i32) -> (i32, i32) {
    %c0_i32 = arith.constant 0 : i32
    return %arg0, %arg1 : i32, i32
  }
}

module attributes {stable_mosaic.version = 11 : i64} {
  func.func @_matmul_kernel(%arg0: i32, %arg1: i32, %arg2: i32, %arg3: memref<32x128xbf16, #tpu.memory_space<vmem>>, %arg4: memref<128x128xbf16, #tpu.memory_space<vmem>>, %arg5: memref<1x128xf32, #tpu.memory_space<vmem>>, %arg6: memref<32x128xbf16, #tpu.memory_space<vmem>>, %arg7: memref<32x128xf32, #tpu.memory_space<vmem>>) attributes {dimension_semantics = [#tpu.dimension_semantics<parallel>, #tpu.dimension_semantics<parallel>, #tpu.dimension_semantics<arbitrary>], iteration_bounds = array<i64: 1, 1, 1>, scalar_prefetch = 0 : i64, scratch_operands = 1 : i64, tpu.core_type = #tpu.core_type<tc>, window_params = [{transform_indices = @transform_0, window_bounds = array<i64: 32, 128>}, {transform_indices = @transform_1, window_bounds = array<i64: 128, 128>}, {transform_indices = @transform_2, window_bounds = array<i64: 1, 128>}, {transform_indices = @transform_3, window_bounds = array<i64: 32, 128>}]} {
    %c0_i32 = arith.constant 0 : i32
    %0 = arith.cmpi eq, %arg2, %c0_i32 : i32
    %1 = arith.extui %0 : i1 to i32
    %c0_i32_0 = arith.constant 0 : i32
    %2 = arith.cmpi ne, %1, %c0_i32_0 : i32
    scf.if %2 {
      %cst_10 = arith.constant 0.000000e+00 : f32
      %12 = vector.broadcast %cst_10 : f32 to vector<32x128xf32>
      %c0_11 = arith.constant 0 : index
      %c0_12 = arith.constant 0 : index
      %13 = vector.load %arg7[%c0_11, %c0_12] : memref<32x128xf32, #tpu.memory_space<vmem>>, vector<32x128xf32>
      tpu.vector_store %arg7[%c0_11, %c0_12], %12 {strides = array<i32>} : memref<32x128xf32, #tpu.memory_space<vmem>>, vector<32x128xf32>,
    } else {
    }
    %c0 = arith.constant 0 : index
    %c0_1 = arith.constant 0 : index
    %3 = vector.load %arg3[%c0, %c0_1] : memref<32x128xbf16, #tpu.memory_space<vmem>>, vector<32x128xbf16>
    %c0_2 = arith.constant 0 : index
    %c0_3 = arith.constant 0 : index
    %4 = vector.load %arg7[%c0_2, %c0_3] : memref<32x128xf32, #tpu.memory_space<vmem>>, vector<32x128xf32>
    %c0_4 = arith.constant 0 : index
    %c0_5 = arith.constant 0 : index
    %5 = vector.load %arg4[%c0_4, %c0_5] : memref<128x128xbf16, #tpu.memory_space<vmem>>, vector<128x128xbf16>
    %cst = arith.constant dense<0.000000e+00> : vector<32x128xf32>
    %6 = tpu.matmul %3, %5, %cst {dimension_numbers = #tpu.dot_dimension_numbers<[1], [0], [0], [1], [0, 0, 1, 1], [], []>} : vector<32x128xbf16>, vector<128x128xbf16>, vector<32x128xf32> -> vector<32x128xf32>
    %7 = arith.addf %4, %6 : vector<32x128xf32>
    %c0_6 = arith.constant 0 : index
    %c0_7 = arith.constant 0 : index
    %8 = vector.load %arg7[%c0_6, %c0_7] : memref<32x128xf32, #tpu.memory_space<vmem>>, vector<32x128xf32>
    tpu.vector_store %arg7[%c0_6, %c0_7], %7 {strides = array<i32>} : memref<32x128xf32, #tpu.memory_space<vmem>>, vector<32x128xf32>,
    %c0_i32_8 = arith.constant 0 : i32
    %9 = arith.cmpi eq, %arg2, %c0_i32_8 : i32
    %10 = arith.extui %9 : i1 to i32
    %c0_i32_9 = arith.constant 0 : i32
    %11 = arith.cmpi ne, %10, %c0_i32_9 : i32
    scf.if %11 {
      %c0_10 = arith.constant 0 : index
      %c0_11 = arith.constant 0 : index
      %12 = vector.load %arg7[%c0_10, %c0_11] : memref<32x128xf32, #tpu.memory_space<vmem>>, vector<32x128xf32>
      %c0_12 = arith.constant 0 : index
      %c0_13 = arith.constant 0 : index
      %13 = vector.load %arg5[%c0_12, %c0_13] : memref<1x128xf32, #tpu.memory_space<vmem>>, vector<1x128xf32>
      %14 = vector.broadcast %13 : vector<1x128xf32> to vector<32x128xf32>
      %15 = arith.addf %12, %14 : vector<32x128xf32>
      %16 = arith.truncf %15 : vector<32x128xf32> to vector<32x128xbf16>
      %c0_14 = arith.constant 0 : index
      %c0_15 = arith.constant 0 : index
      %17 = vector.load %arg6[%c0_14, %c0_15] : memref<32x128xbf16, #tpu.memory_space<vmem>>, vector<32x128xbf16>
      tpu.vector_store %arg6[%c0_14, %c0_15], %16 {strides = array<i32>} : memref<32x128xbf16, #tpu.memory_space<vmem>>, vector<32x128xbf16>,
    } else {
    }
    return
  }
  func.func @transform_0(%arg0: i32, %arg1: i32, %arg2: i32) -> (i32, i32) {
    %c0_i32 = arith.constant 0 : i32
    return %arg0, %arg2 : i32, i32
  }
  func.func @transform_1(%arg0: i32, %arg1: i32, %arg2: i32) -> (i32, i32) {
    %c0_i32 = arith.constant 0 : i32
    return %arg2, %arg1 : i32, i32
  }
  func.func @transform_2(%arg0: i32, %arg1: i32, %arg2: i32) -> (i32, i32) {
    %c0_i32 = arith.constant 0 : i32
    %c0_i32_0 = arith.constant 0 : i32
    return %c0_i32, %arg1 : i32, i32
  }
  func.func @transform_3(%arg0: i32, %arg1: i32, %arg2: i32) -> (i32, i32) {
    %c0_i32 = arith.constant 0 : i32
    return %arg0, %arg1 : i32, i32
  }
}

module attributes {stable_mosaic.version = 11 : i64} {
  func.func @_colstats_kernel(%arg0: i32, %arg1: i32, %arg2: memref<16x128xf32, #tpu.memory_space<vmem>>, %arg3: memref<1x128xf32, #tpu.memory_space<vmem>>, %arg4: memref<1x128xf32, #tpu.memory_space<vmem>>, %arg5: memref<1x128xf32, #tpu.memory_space<vmem>>, %arg6: memref<1x128xf32, #tpu.memory_space<vmem>>) attributes {dimension_semantics = [#tpu.dimension_semantics<parallel>, #tpu.dimension_semantics<arbitrary>], iteration_bounds = array<i64: 1, 1>, scalar_prefetch = 0 : i64, scratch_operands = 2 : i64, tpu.core_type = #tpu.core_type<tc>, window_params = [{transform_indices = @transform_0, window_bounds = array<i64: 16, 128>}, {transform_indices = @transform_1, window_bounds = array<i64: 1, 128>}, {transform_indices = @transform_2, window_bounds = array<i64: 1, 128>}]} {
    %c0_i32 = arith.constant 0 : i32
    %0 = arith.cmpi eq, %arg1, %c0_i32 : i32
    %1 = arith.extui %0 : i1 to i32
    %c0_i32_0 = arith.constant 0 : i32
    %2 = arith.cmpi ne, %1, %c0_i32_0 : i32
    scf.if %2 {
      %cst_15 = arith.constant 0.000000e+00 : f32
      %26 = vector.broadcast %cst_15 : f32 to vector<1x128xf32>
      %c0_16 = arith.constant 0 : index
      %c0_17 = arith.constant 0 : index
      %27 = vector.load %arg5[%c0_16, %c0_17] : memref<1x128xf32, #tpu.memory_space<vmem>>, vector<1x128xf32>
      tpu.vector_store %arg5[%c0_16, %c0_17], %26 {strides = array<i32>} : memref<1x128xf32, #tpu.memory_space<vmem>>, vector<1x128xf32>,
      %cst_18 = arith.constant 0.000000e+00 : f32
      %28 = vector.broadcast %cst_18 : f32 to vector<1x128xf32>
      %c0_19 = arith.constant 0 : index
      %c0_20 = arith.constant 0 : index
      %29 = vector.load %arg6[%c0_19, %c0_20] : memref<1x128xf32, #tpu.memory_space<vmem>>, vector<1x128xf32>
      tpu.vector_store %arg6[%c0_19, %c0_20], %28 {strides = array<i32>} : memref<1x128xf32, #tpu.memory_space<vmem>>, vector<1x128xf32>,
    } else {
    }
    %c0 = arith.constant 0 : index
    %c0_1 = arith.constant 0 : index
    %3 = vector.load %arg2[%c0, %c0_1] : memref<16x128xf32, #tpu.memory_space<vmem>>, vector<16x128xf32>
    %4 = tpu.iota {dimensions = array<i32: 0>} : vector<16x128xi32>
    %c16_i32 = arith.constant 16 : i32
    %5 = arith.muli %arg1, %c16_i32 : i32
    %6 = vector.broadcast %5 : i32 to vector<16x128xi32>
    %7 = arith.addi %4, %6 : vector<16x128xi32>
    %c16_i32_2 = arith.constant 16 : i32
    %8 = vector.broadcast %c16_i32_2 : i32 to vector<16x128xi32>
    %9 = arith.cmpi slt, %7, %8 : vector<16x128xi32>
    %cst = arith.constant 0.000000e+00 : f32
    %10 = vector.broadcast %cst : f32 to vector<16x128xf32>
    %11 = arith.select %9, %3, %10 : vector<16x128xi1>, vector<16x128xf32>
    %c0_3 = arith.constant 0 : index
    %c0_4 = arith.constant 0 : index
    %12 = vector.load %arg5[%c0_3, %c0_4] : memref<1x128xf32, #tpu.memory_space<vmem>>, vector<1x128xf32>
    %cst_5 = arith.constant dense<0.000000e+00> : vector<128xf32>
    %13 = vector.multi_reduction <add>, %11, %cst_5 [0] : vector<16x128xf32> to vector<128xf32>
    %14 = vector.shape_cast %13 : vector<128xf32> to vector<1x128xf32>
    %15 = arith.addf %12, %14 : vector<1x128xf32>
    %c0_6 = arith.constant 0 : index
    %c0_7 = arith.constant 0 : index
    %16 = vector.load %arg5[%c0_6, %c0_7] : memref<1x128xf32, #tpu.memory_space<vmem>>, vector<1x128xf32>
    tpu.vector_store %arg5[%c0_6, %c0_7], %15 {strides = array<i32>} : memref<1x128xf32, #tpu.memory_space<vmem>>, vector<1x128xf32>,
    %c0_8 = arith.constant 0 : index
    %c0_9 = arith.constant 0 : index
    %17 = vector.load %arg6[%c0_8, %c0_9] : memref<1x128xf32, #tpu.memory_space<vmem>>, vector<1x128xf32>
    %18 = arith.mulf %11, %11 : vector<16x128xf32>
    %cst_10 = arith.constant dense<0.000000e+00> : vector<128xf32>
    %19 = vector.multi_reduction <add>, %18, %cst_10 [0] : vector<16x128xf32> to vector<128xf32>
    %20 = vector.shape_cast %19 : vector<128xf32> to vector<1x128xf32>
    %21 = arith.addf %17, %20 : vector<1x128xf32>
    %c0_11 = arith.constant 0 : index
    %c0_12 = arith.constant 0 : index
    %22 = vector.load %arg6[%c0_11, %c0_12] : memref<1x128xf32, #tpu.memory_space<vmem>>, vector<1x128xf32>
    tpu.vector_store %arg6[%c0_11, %c0_12], %21 {strides = array<i32>} : memref<1x128xf32, #tpu.memory_space<vmem>>, vector<1x128xf32>,
    %c0_i32_13 = arith.constant 0 : i32
    %23 = arith.cmpi eq, %arg1, %c0_i32_13 : i32
    %24 = arith.extui %23 : i1 to i32
    %c0_i32_14 = arith.constant 0 : i32
    %25 = arith.cmpi ne, %24, %c0_i32_14 : i32
    scf.if %25 {
      %c0_15 = arith.constant 0 : index
      %c0_16 = arith.constant 0 : index
      %26 = vector.load %arg5[%c0_15, %c0_16] : memref<1x128xf32, #tpu.memory_space<vmem>>, vector<1x128xf32>
      %c0_17 = arith.constant 0 : index
      %c0_18 = arith.constant 0 : index
      %27 = vector.load %arg3[%c0_17, %c0_18] : memref<1x128xf32, #tpu.memory_space<vmem>>, vector<1x128xf32>
      tpu.vector_store %arg3[%c0_17, %c0_18], %26 {strides = array<i32>} : memref<1x128xf32, #tpu.memory_space<vmem>>, vector<1x128xf32>,
      %c0_19 = arith.constant 0 : index
      %c0_20 = arith.constant 0 : index
      %28 = vector.load %arg6[%c0_19, %c0_20] : memref<1x128xf32, #tpu.memory_space<vmem>>, vector<1x128xf32>
      %c0_21 = arith.constant 0 : index
      %c0_22 = arith.constant 0 : index
      %29 = vector.load %arg4[%c0_21, %c0_22] : memref<1x128xf32, #tpu.memory_space<vmem>>, vector<1x128xf32>
      tpu.vector_store %arg4[%c0_21, %c0_22], %28 {strides = array<i32>} : memref<1x128xf32, #tpu.memory_space<vmem>>, vector<1x128xf32>,
    } else {
    }
    return
  }
  func.func @transform_0(%arg0: i32, %arg1: i32) -> (i32, i32) {
    %c0_i32 = arith.constant 0 : i32
    return %arg1, %arg0 : i32, i32
  }
  func.func @transform_1(%arg0: i32, %arg1: i32) -> (i32, i32) {
    %c0_i32 = arith.constant 0 : i32
    %c0_i32_0 = arith.constant 0 : i32
    return %c0_i32, %arg0 : i32, i32
  }
  func.func @transform_2(%arg0: i32, %arg1: i32) -> (i32, i32) {
    %c0_i32 = arith.constant 0 : i32
    %c0_i32_0 = arith.constant 0 : i32
    return %c0_i32, %arg0 : i32, i32
  }
}

module attributes {stable_mosaic.version = 11 : i64} {
  func.func @_expand_kernel(%arg0: i32, %arg1: memref<2xi32, #tpu.memory_space<smem>>, %arg2: memref<16x128xf32, #tpu.memory_space<vmem>>, %arg3: memref<1x16x128xbf16, #tpu.memory_space<vmem>>, %arg4: memref<1x128xf32, #tpu.memory_space<vmem>>, %arg5: memref<1x128xf32, #tpu.memory_space<vmem>>, %arg6: memref<1x16x128xbf16, #tpu.memory_space<vmem>>) attributes {dimension_semantics = [#tpu.dimension_semantics<arbitrary>], iteration_bounds = array<i64: 2>, scalar_prefetch = 1 : i64, scratch_operands = 0 : i64, tpu.core_type = #tpu.core_type<tc>, window_params = [{pipeline_mode = #tpu.pipeline_mode<synchronous>, transform_indices = @transform_0, window_bounds = array<i64: 16, 128>}, {transform_indices = @transform_1, window_bounds = array<i64: 1, 16, 128>}, {pipeline_mode = #tpu.pipeline_mode<synchronous>, transform_indices = @transform_2, window_bounds = array<i64: 1, 128>}, {pipeline_mode = #tpu.pipeline_mode<synchronous>, transform_indices = @transform_3, window_bounds = array<i64: 1, 128>}, {transform_indices = @transform_4, window_bounds = array<i64: 1, 16, 128>}]} {
    %c0 = arith.constant 0 : index
    %c0_0 = arith.constant 0 : index
    %0 = vector.load %arg2[%c0, %c0_0] : memref<16x128xf32, #tpu.memory_space<vmem>>, vector<16x128xf32>
    %c0_1 = arith.constant 0 : index
    %c0_2 = arith.constant 0 : index
    %1 = vector.load %arg4[%c0_1, %c0_2] : memref<1x128xf32, #tpu.memory_space<vmem>>, vector<1x128xf32>
    %2 = vector.broadcast %1 : vector<1x128xf32> to vector<16x128xf32>
    %3 = arith.mulf %0, %2 : vector<16x128xf32>
    %c0_3 = arith.constant 0 : index
    %c0_4 = arith.constant 0 : index
    %4 = vector.load %arg5[%c0_3, %c0_4] : memref<1x128xf32, #tpu.memory_space<vmem>>, vector<1x128xf32>
    %5 = vector.broadcast %4 : vector<1x128xf32> to vector<16x128xf32>
    %6 = arith.addf %3, %5 : vector<16x128xf32>
    %cst = arith.constant 0.000000e+00 : f32
    %7 = vector.broadcast %cst : f32 to vector<16x128xf32>
    %8 = arith.maximumf %6, %7 : vector<16x128xf32>
    %9 = vector.shape_cast %8 : vector<16x128xf32> to vector<1x16x128xf32>
    %c0_5 = arith.constant 0 : index
    %c0_6 = arith.constant 0 : index
    %c0_7 = arith.constant 0 : index
    %10 = vector.load %arg3[%c0_5, %c0_6, %c0_7] : memref<1x16x128xbf16, #tpu.memory_space<vmem>>, vector<1x16x128xbf16>
    %11 = arith.extf %10 : vector<1x16x128xbf16> to vector<1x16x128xf32>
    %cst_8 = arith.constant 2.000000e-01 : f32
    %12 = vector.broadcast %cst_8 : f32 to vector<1x16x128xf32>
    %13 = arith.mulf %12, %11 : vector<1x16x128xf32>
    %14 = arith.addf %9, %13 : vector<1x16x128xf32>
    %15 = arith.truncf %14 : vector<1x16x128xf32> to vector<1x16x128xbf16>
    %c0_9 = arith.constant 0 : index
    %c0_10 = arith.constant 0 : index
    %c0_11 = arith.constant 0 : index
    %16 = vector.load %arg6[%c0_9, %c0_10, %c0_11] : memref<1x16x128xbf16, #tpu.memory_space<vmem>>, vector<1x16x128xbf16>
    tpu.vector_store %arg6[%c0_9, %c0_10, %c0_11], %15 {strides = array<i32>} : memref<1x16x128xbf16, #tpu.memory_space<vmem>>, vector<1x16x128xbf16>,
    return
  }
  func.func @transform_0(%arg0: i32, %arg1: memref<2xi32, #tpu.memory_space<smem>>) -> (i32, i32) {
    %c0_i32 = arith.constant 0 : i32
    %c0_i32_0 = arith.constant 0 : i32
    %c0_i32_1 = arith.constant 0 : i32
    return %c0_i32, %c0_i32_0 : i32, i32
  }
  func.func @transform_1(%arg0: i32, %arg1: memref<2xi32, #tpu.memory_space<smem>>) -> (i32, i32, i32) {
    %0 = arith.index_cast %arg0 : i32 to index
    %1 = memref.load %arg1[%0] : memref<2xi32, #tpu.memory_space<smem>>
    %c0_i32 = arith.constant 0 : i32
    %c0_i32_0 = arith.constant 0 : i32
    %c0_i32_1 = arith.constant 0 : i32
    return %1, %c0_i32, %c0_i32_0 : i32, i32, i32
  }
  func.func @transform_2(%arg0: i32, %arg1: memref<2xi32, #tpu.memory_space<smem>>) -> (i32, i32) {
    %c0_i32 = arith.constant 0 : i32
    %c0_i32_0 = arith.constant 0 : i32
    %c0_i32_1 = arith.constant 0 : i32
    return %c0_i32, %c0_i32_0 : i32, i32
  }
  func.func @transform_3(%arg0: i32, %arg1: memref<2xi32, #tpu.memory_space<smem>>) -> (i32, i32) {
    %c0_i32 = arith.constant 0 : i32
    %c0_i32_0 = arith.constant 0 : i32
    %c0_i32_1 = arith.constant 0 : i32
    return %c0_i32, %c0_i32_0 : i32, i32
  }
  func.func @transform_4(%arg0: i32, %arg1: memref<2xi32, #tpu.memory_space<smem>>) -> (i32, i32, i32) {
    %c0_i32 = arith.constant 0 : i32
    %c0_i32_0 = arith.constant 0 : i32
    %c0_i32_1 = arith.constant 0 : i32
    return %arg0, %c0_i32, %c0_i32_0 : i32, i32, i32
  }
}

module attributes {stable_mosaic.version = 11 : i64} {
  func.func @_colstats_kernel(%arg0: i32, %arg1: i32, %arg2: memref<32x128xbf16, #tpu.memory_space<vmem>>, %arg3: memref<1x128xf32, #tpu.memory_space<vmem>>, %arg4: memref<1x128xf32, #tpu.memory_space<vmem>>, %arg5: memref<1x128xf32, #tpu.memory_space<vmem>>, %arg6: memref<1x128xf32, #tpu.memory_space<vmem>>) attributes {dimension_semantics = [#tpu.dimension_semantics<parallel>, #tpu.dimension_semantics<arbitrary>], iteration_bounds = array<i64: 1, 1>, scalar_prefetch = 0 : i64, scratch_operands = 2 : i64, tpu.core_type = #tpu.core_type<tc>, window_params = [{transform_indices = @transform_0, window_bounds = array<i64: 32, 128>}, {transform_indices = @transform_1, window_bounds = array<i64: 1, 128>}, {transform_indices = @transform_2, window_bounds = array<i64: 1, 128>}]} {
    %c0_i32 = arith.constant 0 : i32
    %0 = arith.cmpi eq, %arg1, %c0_i32 : i32
    %1 = arith.extui %0 : i1 to i32
    %c0_i32_0 = arith.constant 0 : i32
    %2 = arith.cmpi ne, %1, %c0_i32_0 : i32
    scf.if %2 {
      %cst_15 = arith.constant 0.000000e+00 : f32
      %27 = vector.broadcast %cst_15 : f32 to vector<1x128xf32>
      %c0_16 = arith.constant 0 : index
      %c0_17 = arith.constant 0 : index
      %28 = vector.load %arg5[%c0_16, %c0_17] : memref<1x128xf32, #tpu.memory_space<vmem>>, vector<1x128xf32>
      tpu.vector_store %arg5[%c0_16, %c0_17], %27 {strides = array<i32>} : memref<1x128xf32, #tpu.memory_space<vmem>>, vector<1x128xf32>,
      %cst_18 = arith.constant 0.000000e+00 : f32
      %29 = vector.broadcast %cst_18 : f32 to vector<1x128xf32>
      %c0_19 = arith.constant 0 : index
      %c0_20 = arith.constant 0 : index
      %30 = vector.load %arg6[%c0_19, %c0_20] : memref<1x128xf32, #tpu.memory_space<vmem>>, vector<1x128xf32>
      tpu.vector_store %arg6[%c0_19, %c0_20], %29 {strides = array<i32>} : memref<1x128xf32, #tpu.memory_space<vmem>>, vector<1x128xf32>,
    } else {
    }
    %c0 = arith.constant 0 : index
    %c0_1 = arith.constant 0 : index
    %3 = vector.load %arg2[%c0, %c0_1] : memref<32x128xbf16, #tpu.memory_space<vmem>>, vector<32x128xbf16>
    %4 = arith.extf %3 : vector<32x128xbf16> to vector<32x128xf32>
    %5 = tpu.iota {dimensions = array<i32: 0>} : vector<32x128xi32>
    %c32_i32 = arith.constant 32 : i32
    %6 = arith.muli %arg1, %c32_i32 : i32
    %7 = vector.broadcast %6 : i32 to vector<32x128xi32>
    %8 = arith.addi %5, %7 : vector<32x128xi32>
    %c32_i32_2 = arith.constant 32 : i32
    %9 = vector.broadcast %c32_i32_2 : i32 to vector<32x128xi32>
    %10 = arith.cmpi slt, %8, %9 : vector<32x128xi32>
    %cst = arith.constant 0.000000e+00 : f32
    %11 = vector.broadcast %cst : f32 to vector<32x128xf32>
    %12 = arith.select %10, %4, %11 : vector<32x128xi1>, vector<32x128xf32>
    %c0_3 = arith.constant 0 : index
    %c0_4 = arith.constant 0 : index
    %13 = vector.load %arg5[%c0_3, %c0_4] : memref<1x128xf32, #tpu.memory_space<vmem>>, vector<1x128xf32>
    %cst_5 = arith.constant dense<0.000000e+00> : vector<128xf32>
    %14 = vector.multi_reduction <add>, %12, %cst_5 [0] : vector<32x128xf32> to vector<128xf32>
    %15 = vector.shape_cast %14 : vector<128xf32> to vector<1x128xf32>
    %16 = arith.addf %13, %15 : vector<1x128xf32>
    %c0_6 = arith.constant 0 : index
    %c0_7 = arith.constant 0 : index
    %17 = vector.load %arg5[%c0_6, %c0_7] : memref<1x128xf32, #tpu.memory_space<vmem>>, vector<1x128xf32>
    tpu.vector_store %arg5[%c0_6, %c0_7], %16 {strides = array<i32>} : memref<1x128xf32, #tpu.memory_space<vmem>>, vector<1x128xf32>,
    %c0_8 = arith.constant 0 : index
    %c0_9 = arith.constant 0 : index
    %18 = vector.load %arg6[%c0_8, %c0_9] : memref<1x128xf32, #tpu.memory_space<vmem>>, vector<1x128xf32>
    %19 = arith.mulf %12, %12 : vector<32x128xf32>
    %cst_10 = arith.constant dense<0.000000e+00> : vector<128xf32>
    %20 = vector.multi_reduction <add>, %19, %cst_10 [0] : vector<32x128xf32> to vector<128xf32>
    %21 = vector.shape_cast %20 : vector<128xf32> to vector<1x128xf32>
    %22 = arith.addf %18, %21 : vector<1x128xf32>
    %c0_11 = arith.constant 0 : index
    %c0_12 = arith.constant 0 : index
    %23 = vector.load %arg6[%c0_11, %c0_12] : memref<1x128xf32, #tpu.memory_space<vmem>>, vector<1x128xf32>
    tpu.vector_store %arg6[%c0_11, %c0_12], %22 {strides = array<i32>} : memref<1x128xf32, #tpu.memory_space<vmem>>, vector<1x128xf32>,
    %c0_i32_13 = arith.constant 0 : i32
    %24 = arith.cmpi eq, %arg1, %c0_i32_13 : i32
    %25 = arith.extui %24 : i1 to i32
    %c0_i32_14 = arith.constant 0 : i32
    %26 = arith.cmpi ne, %25, %c0_i32_14 : i32
    scf.if %26 {
      %c0_15 = arith.constant 0 : index
      %c0_16 = arith.constant 0 : index
      %27 = vector.load %arg5[%c0_15, %c0_16] : memref<1x128xf32, #tpu.memory_space<vmem>>, vector<1x128xf32>
      %c0_17 = arith.constant 0 : index
      %c0_18 = arith.constant 0 : index
      %28 = vector.load %arg3[%c0_17, %c0_18] : memref<1x128xf32, #tpu.memory_space<vmem>>, vector<1x128xf32>
      tpu.vector_store %arg3[%c0_17, %c0_18], %27 {strides = array<i32>} : memref<1x128xf32, #tpu.memory_space<vmem>>, vector<1x128xf32>,
      %c0_19 = arith.constant 0 : index
      %c0_20 = arith.constant 0 : index
      %29 = vector.load %arg6[%c0_19, %c0_20] : memref<1x128xf32, #tpu.memory_space<vmem>>, vector<1x128xf32>
      %c0_21 = arith.constant 0 : index
      %c0_22 = arith.constant 0 : index
      %30 = vector.load %arg4[%c0_21, %c0_22] : memref<1x128xf32, #tpu.memory_space<vmem>>, vector<1x128xf32>
      tpu.vector_store %arg4[%c0_21, %c0_22], %29 {strides = array<i32>} : memref<1x128xf32, #tpu.memory_space<vmem>>, vector<1x128xf32>,
    } else {
    }
    return
  }
  func.func @transform_0(%arg0: i32, %arg1: i32) -> (i32, i32) {
    %c0_i32 = arith.constant 0 : i32
    return %arg1, %arg0 : i32, i32
  }
  func.func @transform_1(%arg0: i32, %arg1: i32) -> (i32, i32) {
    %c0_i32 = arith.constant 0 : i32
    %c0_i32_0 = arith.constant 0 : i32
    return %c0_i32, %arg0 : i32, i32
  }
  func.func @transform_2(%arg0: i32, %arg1: i32) -> (i32, i32) {
    %c0_i32 = arith.constant 0 : i32
    %c0_i32_0 = arith.constant 0 : i32
    return %c0_i32, %arg0 : i32, i32
  }
}

module attributes {stable_mosaic.version = 11 : i64} {
  func.func @_matmul_kernel(%arg0: i32, %arg1: i32, %arg2: i32, %arg3: memref<8x128xbf16, #tpu.memory_space<vmem>>, %arg4: memref<128x128xbf16, #tpu.memory_space<vmem>>, %arg5: memref<1x128xf32, #tpu.memory_space<vmem>>, %arg6: memref<8x128xbf16, #tpu.memory_space<vmem>>, %arg7: memref<8x128xf32, #tpu.memory_space<vmem>>) attributes {dimension_semantics = [#tpu.dimension_semantics<parallel>, #tpu.dimension_semantics<parallel>, #tpu.dimension_semantics<arbitrary>], iteration_bounds = array<i64: 1, 1, 1>, scalar_prefetch = 0 : i64, scratch_operands = 1 : i64, tpu.core_type = #tpu.core_type<tc>, window_params = [{transform_indices = @transform_0, window_bounds = array<i64: 8, 128>}, {transform_indices = @transform_1, window_bounds = array<i64: 128, 128>}, {transform_indices = @transform_2, window_bounds = array<i64: 1, 128>}, {transform_indices = @transform_3, window_bounds = array<i64: 8, 128>}]} {
    %c0_i32 = arith.constant 0 : i32
    %0 = arith.cmpi eq, %arg2, %c0_i32 : i32
    %1 = arith.extui %0 : i1 to i32
    %c0_i32_0 = arith.constant 0 : i32
    %2 = arith.cmpi ne, %1, %c0_i32_0 : i32
    scf.if %2 {
      %cst_10 = arith.constant 0.000000e+00 : f32
      %12 = vector.broadcast %cst_10 : f32 to vector<8x128xf32>
      %c0_11 = arith.constant 0 : index
      %c0_12 = arith.constant 0 : index
      %13 = vector.load %arg7[%c0_11, %c0_12] : memref<8x128xf32, #tpu.memory_space<vmem>>, vector<8x128xf32>
      tpu.vector_store %arg7[%c0_11, %c0_12], %12 {strides = array<i32>} : memref<8x128xf32, #tpu.memory_space<vmem>>, vector<8x128xf32>,
    } else {
    }
    %c0 = arith.constant 0 : index
    %c0_1 = arith.constant 0 : index
    %3 = vector.load %arg3[%c0, %c0_1] : memref<8x128xbf16, #tpu.memory_space<vmem>>, vector<8x128xbf16>
    %c0_2 = arith.constant 0 : index
    %c0_3 = arith.constant 0 : index
    %4 = vector.load %arg7[%c0_2, %c0_3] : memref<8x128xf32, #tpu.memory_space<vmem>>, vector<8x128xf32>
    %c0_4 = arith.constant 0 : index
    %c0_5 = arith.constant 0 : index
    %5 = vector.load %arg4[%c0_4, %c0_5] : memref<128x128xbf16, #tpu.memory_space<vmem>>, vector<128x128xbf16>
    %cst = arith.constant dense<0.000000e+00> : vector<8x128xf32>
    %6 = tpu.matmul %3, %5, %cst {dimension_numbers = #tpu.dot_dimension_numbers<[1], [0], [0], [1], [0, 0, 1, 1], [], []>} : vector<8x128xbf16>, vector<128x128xbf16>, vector<8x128xf32> -> vector<8x128xf32>
    %7 = arith.addf %4, %6 : vector<8x128xf32>
    %c0_6 = arith.constant 0 : index
    %c0_7 = arith.constant 0 : index
    %8 = vector.load %arg7[%c0_6, %c0_7] : memref<8x128xf32, #tpu.memory_space<vmem>>, vector<8x128xf32>
    tpu.vector_store %arg7[%c0_6, %c0_7], %7 {strides = array<i32>} : memref<8x128xf32, #tpu.memory_space<vmem>>, vector<8x128xf32>,
    %c0_i32_8 = arith.constant 0 : i32
    %9 = arith.cmpi eq, %arg2, %c0_i32_8 : i32
    %10 = arith.extui %9 : i1 to i32
    %c0_i32_9 = arith.constant 0 : i32
    %11 = arith.cmpi ne, %10, %c0_i32_9 : i32
    scf.if %11 {
      %c0_10 = arith.constant 0 : index
      %c0_11 = arith.constant 0 : index
      %12 = vector.load %arg7[%c0_10, %c0_11] : memref<8x128xf32, #tpu.memory_space<vmem>>, vector<8x128xf32>
      %c0_12 = arith.constant 0 : index
      %c0_13 = arith.constant 0 : index
      %13 = vector.load %arg5[%c0_12, %c0_13] : memref<1x128xf32, #tpu.memory_space<vmem>>, vector<1x128xf32>
      %14 = vector.broadcast %13 : vector<1x128xf32> to vector<8x128xf32>
      %15 = arith.addf %12, %14 : vector<8x128xf32>
      %16 = arith.truncf %15 : vector<8x128xf32> to vector<8x128xbf16>
      %c0_14 = arith.constant 0 : index
      %c0_15 = arith.constant 0 : index
      %17 = vector.load %arg6[%c0_14, %c0_15] : memref<8x128xbf16, #tpu.memory_space<vmem>>, vector<8x128xbf16>
      tpu.vector_store %arg6[%c0_14, %c0_15], %16 {strides = array<i32>} : memref<8x128xbf16, #tpu.memory_space<vmem>>, vector<8x128xbf16>,
    } else {
    }
    return
  }
  func.func @transform_0(%arg0: i32, %arg1: i32, %arg2: i32) -> (i32, i32) {
    %c0_i32 = arith.constant 0 : i32
    return %arg0, %arg2 : i32, i32
  }
  func.func @transform_1(%arg0: i32, %arg1: i32, %arg2: i32) -> (i32, i32) {
    %c0_i32 = arith.constant 0 : i32
    return %arg2, %arg1 : i32, i32
  }
  func.func @transform_2(%arg0: i32, %arg1: i32, %arg2: i32) -> (i32, i32) {
    %c0_i32 = arith.constant 0 : i32
    %c0_i32_0 = arith.constant 0 : i32
    return %c0_i32, %arg1 : i32, i32
  }
  func.func @transform_3(%arg0: i32, %arg1: i32, %arg2: i32) -> (i32, i32) {
    %c0_i32 = arith.constant 0 : i32
    return %arg0, %arg1 : i32, i32
  }
}

module attributes {stable_mosaic.version = 11 : i64} {
  func.func @_matmul_kernel(%arg0: i32, %arg1: i32, %arg2: i32, %arg3: memref<32x128xbf16, #tpu.memory_space<vmem>>, %arg4: memref<128x128xbf16, #tpu.memory_space<vmem>>, %arg5: memref<1x128xf32, #tpu.memory_space<vmem>>, %arg6: memref<1x128xf32, #tpu.memory_space<vmem>>, %arg7: memref<1x128xf32, #tpu.memory_space<vmem>>, %arg8: memref<32x128xbf16, #tpu.memory_space<vmem>>, %arg9: memref<32x128xf32, #tpu.memory_space<vmem>>) attributes {dimension_semantics = [#tpu.dimension_semantics<parallel>, #tpu.dimension_semantics<parallel>, #tpu.dimension_semantics<arbitrary>], iteration_bounds = array<i64: 1, 1, 1>, scalar_prefetch = 0 : i64, scratch_operands = 1 : i64, tpu.core_type = #tpu.core_type<tc>, window_params = [{transform_indices = @transform_0, window_bounds = array<i64: 32, 128>}, {transform_indices = @transform_1, window_bounds = array<i64: 128, 128>}, {transform_indices = @transform_2, window_bounds = array<i64: 1, 128>}, {transform_indices = @transform_3, window_bounds = array<i64: 1, 128>}, {transform_indices = @transform_4, window_bounds = array<i64: 1, 128>}, {transform_indices = @transform_5, window_bounds = array<i64: 32, 128>}]} {
    %c0_i32 = arith.constant 0 : i32
    %0 = arith.cmpi eq, %arg2, %c0_i32 : i32
    %1 = arith.extui %0 : i1 to i32
    %c0_i32_0 = arith.constant 0 : i32
    %2 = arith.cmpi ne, %1, %c0_i32_0 : i32
    scf.if %2 {
      %cst_15 = arith.constant 0.000000e+00 : f32
      %22 = vector.broadcast %cst_15 : f32 to vector<32x128xf32>
      %c0_16 = arith.constant 0 : index
      %c0_17 = arith.constant 0 : index
      %23 = vector.load %arg9[%c0_16, %c0_17] : memref<32x128xf32, #tpu.memory_space<vmem>>, vector<32x128xf32>
      tpu.vector_store %arg9[%c0_16, %c0_17], %22 {strides = array<i32>} : memref<32x128xf32, #tpu.memory_space<vmem>>, vector<32x128xf32>,
    } else {
    }
    %c0 = arith.constant 0 : index
    %c0_1 = arith.constant 0 : index
    %3 = vector.load %arg3[%c0, %c0_1] : memref<32x128xbf16, #tpu.memory_space<vmem>>, vector<32x128xbf16>
    %4 = arith.extf %3 : vector<32x128xbf16> to vector<32x128xf32>
    %c0_2 = arith.constant 0 : index
    %c0_3 = arith.constant 0 : index
    %5 = vector.load %arg6[%c0_2, %c0_3] : memref<1x128xf32, #tpu.memory_space<vmem>>, vector<1x128xf32>
    %6 = vector.broadcast %5 : vector<1x128xf32> to vector<32x128xf32>
    %7 = arith.mulf %4, %6 : vector<32x128xf32>
    %c0_4 = arith.constant 0 : index
    %c0_5 = arith.constant 0 : index
    %8 = vector.load %arg7[%c0_4, %c0_5] : memref<1x128xf32, #tpu.memory_space<vmem>>, vector<1x128xf32>
    %9 = vector.broadcast %8 : vector<1x128xf32> to vector<32x128xf32>
    %10 = arith.addf %7, %9 : vector<32x128xf32>
    %cst = arith.constant 0.000000e+00 : f32
    %11 = vector.broadcast %cst : f32 to vector<32x128xf32>
    %12 = arith.maximumf %10, %11 : vector<32x128xf32>
    %13 = arith.truncf %12 : vector<32x128xf32> to vector<32x128xbf16>
    %c0_6 = arith.constant 0 : index
    %c0_7 = arith.constant 0 : index
    %14 = vector.load %arg9[%c0_6, %c0_7] : memref<32x128xf32, #tpu.memory_space<vmem>>, vector<32x128xf32>
    %c0_8 = arith.constant 0 : index
    %c0_9 = arith.constant 0 : index
    %15 = vector.load %arg4[%c0_8, %c0_9] : memref<128x128xbf16, #tpu.memory_space<vmem>>, vector<128x128xbf16>
    %cst_10 = arith.constant dense<0.000000e+00> : vector<32x128xf32>
    %16 = tpu.matmul %13, %15, %cst_10 {dimension_numbers = #tpu.dot_dimension_numbers<[1], [0], [0], [1], [0, 0, 1, 1], [], []>} : vector<32x128xbf16>, vector<128x128xbf16>, vector<32x128xf32> -> vector<32x128xf32>
    %17 = arith.addf %14, %16 : vector<32x128xf32>
    %c0_11 = arith.constant 0 : index
    %c0_12 = arith.constant 0 : index
    %18 = vector.load %arg9[%c0_11, %c0_12] : memref<32x128xf32, #tpu.memory_space<vmem>>, vector<32x128xf32>
    tpu.vector_store %arg9[%c0_11, %c0_12], %17 {strides = array<i32>} : memref<32x128xf32, #tpu.memory_space<vmem>>, vector<32x128xf32>,
    %c0_i32_13 = arith.constant 0 : i32
    %19 = arith.cmpi eq, %arg2, %c0_i32_13 : i32
    %20 = arith.extui %19 : i1 to i32
    %c0_i32_14 = arith.constant 0 : i32
    %21 = arith.cmpi ne, %20, %c0_i32_14 : i32
    scf.if %21 {
      %c0_15 = arith.constant 0 : index
      %c0_16 = arith.constant 0 : index
      %22 = vector.load %arg9[%c0_15, %c0_16] : memref<32x128xf32, #tpu.memory_space<vmem>>, vector<32x128xf32>
      %c0_17 = arith.constant 0 : index
      %c0_18 = arith.constant 0 : index
      %23 = vector.load %arg5[%c0_17, %c0_18] : memref<1x128xf32, #tpu.memory_space<vmem>>, vector<1x128xf32>
      %24 = vector.broadcast %23 : vector<1x128xf32> to vector<32x128xf32>
      %25 = arith.addf %22, %24 : vector<32x128xf32>
      %26 = arith.truncf %25 : vector<32x128xf32> to vector<32x128xbf16>
      %c0_19 = arith.constant 0 : index
      %c0_20 = arith.constant 0 : index
      %27 = vector.load %arg8[%c0_19, %c0_20] : memref<32x128xbf16, #tpu.memory_space<vmem>>, vector<32x128xbf16>
      tpu.vector_store %arg8[%c0_19, %c0_20], %26 {strides = array<i32>} : memref<32x128xbf16, #tpu.memory_space<vmem>>, vector<32x128xbf16>,
    } else {
    }
    return
  }
  func.func @transform_0(%arg0: i32, %arg1: i32, %arg2: i32) -> (i32, i32) {
    %c0_i32 = arith.constant 0 : i32
    return %arg0, %arg2 : i32, i32
  }
  func.func @transform_1(%arg0: i32, %arg1: i32, %arg2: i32) -> (i32, i32) {
    %c0_i32 = arith.constant 0 : i32
    return %arg2, %arg1 : i32, i32
  }
  func.func @transform_2(%arg0: i32, %arg1: i32, %arg2: i32) -> (i32, i32) {
    %c0_i32 = arith.constant 0 : i32
    %c0_i32_0 = arith.constant 0 : i32
    return %c0_i32, %arg1 : i32, i32
  }
  func.func @transform_3(%arg0: i32, %arg1: i32, %arg2: i32) -> (i32, i32) {
    %c0_i32 = arith.constant 0 : i32
    %c0_i32_0 = arith.constant 0 : i32
    return %c0_i32, %arg2 : i32, i32
  }
  func.func @transform_4(%arg0: i32, %arg1: i32, %arg2: i32) -> (i32, i32) {
    %c0_i32 = arith.constant 0 : i32
    %c0_i32_0 = arith.constant 0 : i32
    return %c0_i32, %arg2 : i32, i32
  }
  func.func @transform_5(%arg0: i32, %arg1: i32, %arg2: i32) -> (i32, i32) {
    %c0_i32 = arith.constant 0 : i32
    return %arg0, %arg1 : i32, i32
  }
}

module attributes {stable_mosaic.version = 11 : i64} {
  func.func @_ssact_kernel(%arg0: i32, %arg1: i32, %arg2: memref<32x128xbf16, #tpu.memory_space<vmem>>, %arg3: memref<1x128xf32, #tpu.memory_space<vmem>>, %arg4: memref<1x128xf32, #tpu.memory_space<vmem>>, %arg5: memref<32x128xf32, #tpu.memory_space<vmem>>) attributes {dimension_semantics = [#tpu.dimension_semantics<parallel>, #tpu.dimension_semantics<parallel>], iteration_bounds = array<i64: 1, 1>, scalar_prefetch = 0 : i64, scratch_operands = 0 : i64, tpu.core_type = #tpu.core_type<tc>, window_params = [{transform_indices = @transform_0, window_bounds = array<i64: 32, 128>}, {transform_indices = @transform_1, window_bounds = array<i64: 1, 128>}, {transform_indices = @transform_2, window_bounds = array<i64: 1, 128>}, {transform_indices = @transform_3, window_bounds = array<i64: 32, 128>}]} {
    %c0 = arith.constant 0 : index
    %c0_0 = arith.constant 0 : index
    %0 = vector.load %arg2[%c0, %c0_0] : memref<32x128xbf16, #tpu.memory_space<vmem>>, vector<32x128xbf16>
    %1 = arith.extf %0 : vector<32x128xbf16> to vector<32x128xf32>
    %c0_1 = arith.constant 0 : index
    %c0_2 = arith.constant 0 : index
    %2 = vector.load %arg3[%c0_1, %c0_2] : memref<1x128xf32, #tpu.memory_space<vmem>>, vector<1x128xf32>
    %3 = vector.broadcast %2 : vector<1x128xf32> to vector<32x128xf32>
    %4 = arith.mulf %1, %3 : vector<32x128xf32>
    %c0_3 = arith.constant 0 : index
    %c0_4 = arith.constant 0 : index
    %5 = vector.load %arg4[%c0_3, %c0_4] : memref<1x128xf32, #tpu.memory_space<vmem>>, vector<1x128xf32>
    %6 = vector.broadcast %5 : vector<1x128xf32> to vector<32x128xf32>
    %7 = arith.addf %4, %6 : vector<32x128xf32>
    %c0_5 = arith.constant 0 : index
    %c0_6 = arith.constant 0 : index
    %8 = vector.load %arg5[%c0_5, %c0_6] : memref<32x128xf32, #tpu.memory_space<vmem>>, vector<32x128xf32>
    tpu.vector_store %arg5[%c0_5, %c0_6], %7 {strides = array<i32>} : memref<32x128xf32, #tpu.memory_space<vmem>>, vector<32x128xf32>,
    return
  }
  func.func @transform_0(%arg0: i32, %arg1: i32) -> (i32, i32) {
    %c0_i32 = arith.constant 0 : i32
    return %arg0, %arg1 : i32, i32
  }
  func.func @transform_1(%arg0: i32, %arg1: i32) -> (i32, i32) {
    %c0_i32 = arith.constant 0 : i32
    %c0_i32_0 = arith.constant 0 : i32
    return %c0_i32, %arg1 : i32, i32
  }
  func.func @transform_2(%arg0: i32, %arg1: i32) -> (i32, i32) {
    %c0_i32 = arith.constant 0 : i32
    %c0_i32_0 = arith.constant 0 : i32
    return %c0_i32, %arg1 : i32, i32
  }
  func.func @transform_3(%arg0: i32, %arg1: i32) -> (i32, i32) {
    %c0_i32 = arith.constant 0 : i32
    return %arg0, %arg1 : i32, i32
  }
}

module attributes {stable_mosaic.version = 11 : i64} {
  func.func @_mlp2_kernel(%arg0: i32, %arg1: memref<8x128xbf16, #tpu.memory_space<vmem>>, %arg2: memref<128x128xbf16, #tpu.memory_space<vmem>>, %arg3: memref<1x128xf32, #tpu.memory_space<vmem>>, %arg4: memref<1x128xf32, #tpu.memory_space<vmem>>, %arg5: memref<1x128xf32, #tpu.memory_space<vmem>>, %arg6: memref<128x128xbf16, #tpu.memory_space<vmem>>, %arg7: memref<1x128xf32, #tpu.memory_space<vmem>>, %arg8: memref<1x128xf32, #tpu.memory_space<vmem>>, %arg9: memref<1x128xf32, #tpu.memory_space<vmem>>, %arg10: memref<8x128xf32, #tpu.memory_space<vmem>>) attributes {dimension_semantics = [#tpu.dimension_semantics<arbitrary>], iteration_bounds = array<i64: 1>, scalar_prefetch = 0 : i64, scratch_operands = 0 : i64, tpu.core_type = #tpu.core_type<tc>, window_params = [{pipeline_mode = #tpu.pipeline_mode<synchronous>, transform_indices = @transform_0, window_bounds = array<i64: 8, 128>}, {pipeline_mode = #tpu.pipeline_mode<synchronous>, transform_indices = @transform_1, window_bounds = array<i64: 128, 128>}, {pipeline_mode = #tpu.pipeline_mode<synchronous>, transform_indices = @transform_2, window_bounds = array<i64: 1, 128>}, {pipeline_mode = #tpu.pipeline_mode<synchronous>, transform_indices = @transform_3, window_bounds = array<i64: 1, 128>}, {pipeline_mode = #tpu.pipeline_mode<synchronous>, transform_indices = @transform_4, window_bounds = array<i64: 1, 128>}, {pipeline_mode = #tpu.pipeline_mode<synchronous>, transform_indices = @transform_5, window_bounds = array<i64: 128, 128>}, {pipeline_mode = #tpu.pipeline_mode<synchronous>, transform_indices = @transform_6, window_bounds = array<i64: 1, 128>}, {pipeline_mode = #tpu.pipeline_mode<synchronous>, transform_indices = @transform_7, window_bounds = array<i64: 1, 128>}, {pipeline_mode = #tpu.pipeline_mode<synchronous>, transform_indices = @transform_8, window_bounds = array<i64: 1, 128>}, {pipeline_mode = #tpu.pipeline_mode<synchronous>, transform_indices = @transform_9, window_bounds = array<i64: 8, 128>}]} {
    %c0 = arith.constant 0 : index
    %c0_0 = arith.constant 0 : index
    %0 = vector.load %arg1[%c0, %c0_0] : memref<8x128xbf16, #tpu.memory_space<vmem>>, vector<8x128xbf16>
    %c0_1 = arith.constant 0 : index
    %c0_2 = arith.constant 0 : index
    %1 = vector.load %arg2[%c0_1, %c0_2] : memref<128x128xbf16, #tpu.memory_space<vmem>>, vector<128x128xbf16>
    %cst = arith.constant dense<0.000000e+00> : vector<8x128xf32>
    %2 = tpu.matmul %0, %1, %cst {dimension_numbers = #tpu.dot_dimension_numbers<[1], [0], [0], [1], [0, 0, 1, 1], [], []>} : vector<8x128xbf16>, vector<128x128xbf16>, vector<8x128xf32> -> vector<8x128xf32>
    %c0_3 = arith.constant 0 : index
    %c0_4 = arith.constant 0 : index
    %3 = vector.load %arg3[%c0_3, %c0_4] : memref<1x128xf32, #tpu.memory_space<vmem>>, vector<1x128xf32>
    %4 = vector.broadcast %3 : vector<1x128xf32> to vector<8x128xf32>
    %5 = arith.addf %2, %4 : vector<8x128xf32>
    %6 = tpu.iota {dimensions = array<i32: 0>} : vector<8x128xi32>
    %c2_i32 = arith.constant 2 : i32
    %7 = vector.broadcast %c2_i32 : i32 to vector<8x128xi32>
    %8 = arith.cmpi slt, %6, %7 : vector<8x128xi32>
    %9 = arith.extui %8 : vector<8x128xi1> to vector<8x128xi32>
    %10 = arith.sitofp %9 : vector<8x128xi32> to vector<8x128xf32>
    %11 = arith.mulf %5, %10 : vector<8x128xf32>
    %cst_5 = arith.constant dense<0.000000e+00> : vector<128xf32>
    %12 = vector.multi_reduction <add>, %11, %cst_5 [0] : vector<8x128xf32> to vector<128xf32>
    %13 = vector.shape_cast %12 : vector<128xf32> to vector<1x128xf32>
    %cst_6 = arith.constant 5.000000e-01 : f32
    %14 = vector.broadcast %cst_6 : f32 to vector<1x128xf32>
    %15 = arith.mulf %13, %14 : vector<1x128xf32>
    %16 = arith.mulf %5, %5 : vector<8x128xf32>
    %17 = arith.mulf %16, %10 : vector<8x128xf32>
    %cst_7 = arith.constant dense<0.000000e+00> : vector<128xf32>
    %18 = vector.multi_reduction <add>, %17, %cst_7 [0] : vector<8x128xf32> to vector<128xf32>
    %19 = vector.shape_cast %18 : vector<128xf32> to vector<1x128xf32>
    %cst_8 = arith.constant 5.000000e-01 : f32
    %20 = vector.broadcast %cst_8 : f32 to vector<1x128xf32>
    %21 = arith.mulf %19, %20 : vector<1x128xf32>
    %22 = arith.mulf %15, %15 : vector<1x128xf32>
    %23 = arith.subf %21, %22 : vector<1x128xf32>
    %cst_9 = arith.constant 0.000000e+00 : f32
    %24 = vector.broadcast %cst_9 : f32 to vector<1x128xf32>
    %25 = arith.maximumf %23, %24 : vector<1x128xf32>
    %26 = vector.broadcast %15 : vector<1x128xf32> to vector<8x128xf32>
    %27 = arith.subf %5, %26 : vector<8x128xf32>
    %cst_10 = arith.constant 9.99999974E-6 : f32
    %28 = vector.broadcast %cst_10 : f32 to vector<1x128xf32>
    %29 = arith.addf %25, %28 : vector<1x128xf32>
    %30 = math.rsqrt %29 : vector<1x128xf32>
    %31 = vector.broadcast %30 : vector<1x128xf32> to vector<8x128xf32>
    %32 = arith.mulf %27, %31 : vector<8x128xf32>
    %c0_11 = arith.constant 0 : index
    %c0_12 = arith.constant 0 : index
    %33 = vector.load %arg4[%c0_11, %c0_12] : memref<1x128xf32, #tpu.memory_space<vmem>>, vector<1x128xf32>
    %34 = vector.broadcast %33 : vector<1x128xf32> to vector<8x128xf32>
    %35 = arith.mulf %32, %34 : vector<8x128xf32>
    %c0_13 = arith.constant 0 : index
    %c0_14 = arith.constant 0 : index
    %36 = vector.load %arg5[%c0_13, %c0_14] : memref<1x128xf32, #tpu.memory_space<vmem>>, vector<1x128xf32>
    %37 = vector.broadcast %36 : vector<1x128xf32> to vector<8x128xf32>
    %38 = arith.addf %35, %37 : vector<8x128xf32>
    %cst_15 = arith.constant 0.000000e+00 : f32
    %39 = vector.broadcast %cst_15 : f32 to vector<8x128xf32>
    %40 = arith.maximumf %38, %39 : vector<8x128xf32>
    %41 = arith.truncf %40 : vector<8x128xf32> to vector<8x128xbf16>
    %c0_16 = arith.constant 0 : index
    %c0_17 = arith.constant 0 : index
    %42 = vector.load %arg6[%c0_16, %c0_17] : memref<128x128xbf16, #tpu.memory_space<vmem>>, vector<128x128xbf16>
    %cst_18 = arith.constant dense<0.000000e+00> : vector<8x128xf32>
    %43 = tpu.matmul %41, %42, %cst_18 {dimension_numbers = #tpu.dot_dimension_numbers<[1], [0], [0], [1], [0, 0, 1, 1], [], []>} : vector<8x128xbf16>, vector<128x128xbf16>, vector<8x128xf32> -> vector<8x128xf32>
    %c0_19 = arith.constant 0 : index
    %c0_20 = arith.constant 0 : index
    %44 = vector.load %arg7[%c0_19, %c0_20] : memref<1x128xf32, #tpu.memory_space<vmem>>, vector<1x128xf32>
    %45 = vector.broadcast %44 : vector<1x128xf32> to vector<8x128xf32>
    %46 = arith.addf %43, %45 : vector<8x128xf32>
    %47 = tpu.iota {dimensions = array<i32: 0>} : vector<8x128xi32>
    %c2_i32_21 = arith.constant 2 : i32
    %48 = vector.broadcast %c2_i32_21 : i32 to vector<8x128xi32>
    %49 = arith.cmpi slt, %47, %48 : vector<8x128xi32>
    %50 = arith.extui %49 : vector<8x128xi1> to vector<8x128xi32>
    %51 = arith.sitofp %50 : vector<8x128xi32> to vector<8x128xf32>
    %52 = arith.mulf %46, %51 : vector<8x128xf32>
    %cst_22 = arith.constant dense<0.000000e+00> : vector<128xf32>
    %53 = vector.multi_reduction <add>, %52, %cst_22 [0] : vector<8x128xf32> to vector<128xf32>
    %54 = vector.shape_cast %53 : vector<128xf32> to vector<1x128xf32>
    %cst_23 = arith.constant 5.000000e-01 : f32
    %55 = vector.broadcast %cst_23 : f32 to vector<1x128xf32>
    %56 = arith.mulf %54, %55 : vector<1x128xf32>
    %57 = arith.mulf %46, %46 : vector<8x128xf32>
    %58 = arith.mulf %57, %51 : vector<8x128xf32>
    %cst_24 = arith.constant dense<0.000000e+00> : vector<128xf32>
    %59 = vector.multi_reduction <add>, %58, %cst_24 [0] : vector<8x128xf32> to vector<128xf32>
    %60 = vector.shape_cast %59 : vector<128xf32> to vector<1x128xf32>
    %cst_25 = arith.constant 5.000000e-01 : f32
    %61 = vector.broadcast %cst_25 : f32 to vector<1x128xf32>
    %62 = arith.mulf %60, %61 : vector<1x128xf32>
    %63 = arith.mulf %56, %56 : vector<1x128xf32>
    %64 = arith.subf %62, %63 : vector<1x128xf32>
    %cst_26 = arith.constant 0.000000e+00 : f32
    %65 = vector.broadcast %cst_26 : f32 to vector<1x128xf32>
    %66 = arith.maximumf %64, %65 : vector<1x128xf32>
    %67 = vector.broadcast %56 : vector<1x128xf32> to vector<8x128xf32>
    %68 = arith.subf %46, %67 : vector<8x128xf32>
    %cst_27 = arith.constant 9.99999974E-6 : f32
    %69 = vector.broadcast %cst_27 : f32 to vector<1x128xf32>
    %70 = arith.addf %66, %69 : vector<1x128xf32>
    %71 = math.rsqrt %70 : vector<1x128xf32>
    %72 = vector.broadcast %71 : vector<1x128xf32> to vector<8x128xf32>
    %73 = arith.mulf %68, %72 : vector<8x128xf32>
    %c0_28 = arith.constant 0 : index
    %c0_29 = arith.constant 0 : index
    %74 = vector.load %arg8[%c0_28, %c0_29] : memref<1x128xf32, #tpu.memory_space<vmem>>, vector<1x128xf32>
    %75 = vector.broadcast %74 : vector<1x128xf32> to vector<8x128xf32>
    %76 = arith.mulf %73, %75 : vector<8x128xf32>
    %c0_30 = arith.constant 0 : index
    %c0_31 = arith.constant 0 : index
    %77 = vector.load %arg9[%c0_30, %c0_31] : memref<1x128xf32, #tpu.memory_space<vmem>>, vector<1x128xf32>
    %78 = vector.broadcast %77 : vector<1x128xf32> to vector<8x128xf32>
    %79 = arith.addf %76, %78 : vector<8x128xf32>
    %c0_32 = arith.constant 0 : index
    %c0_33 = arith.constant 0 : index
    %80 = vector.load %arg10[%c0_32, %c0_33] : memref<8x128xf32, #tpu.memory_space<vmem>>, vector<8x128xf32>
    tpu.vector_store %arg10[%c0_32, %c0_33], %79 {strides = array<i32>} : memref<8x128xf32, #tpu.memory_space<vmem>>, vector<8x128xf32>,
    return
  }
  func.func @transform_0(%arg0: i32) -> (i32, i32) {
    %c0_i32 = arith.constant 0 : i32
    %c0_i32_0 = arith.constant 0 : i32
    %c0_i32_1 = arith.constant 0 : i32
    return %c0_i32, %c0_i32_0 : i32, i32
  }
  func.func @transform_1(%arg0: i32) -> (i32, i32) {
    %c0_i32 = arith.constant 0 : i32
    %c0_i32_0 = arith.constant 0 : i32
    %c0_i32_1 = arith.constant 0 : i32
    return %c0_i32, %c0_i32_0 : i32, i32
  }
  func.func @transform_2(%arg0: i32) -> (i32, i32) {
    %c0_i32 = arith.constant 0 : i32
    %c0_i32_0 = arith.constant 0 : i32
    %c0_i32_1 = arith.constant 0 : i32
    return %c0_i32, %c0_i32_0 : i32, i32
  }
  func.func @transform_3(%arg0: i32) -> (i32, i32) {
    %c0_i32 = arith.constant 0 : i32
    %c0_i32_0 = arith.constant 0 : i32
    %c0_i32_1 = arith.constant 0 : i32
    return %c0_i32, %c0_i32_0 : i32, i32
  }
  func.func @transform_4(%arg0: i32) -> (i32, i32) {
    %c0_i32 = arith.constant 0 : i32
    %c0_i32_0 = arith.constant 0 : i32
    %c0_i32_1 = arith.constant 0 : i32
    return %c0_i32, %c0_i32_0 : i32, i32
  }
  func.func @transform_5(%arg0: i32) -> (i32, i32) {
    %c0_i32 = arith.constant 0 : i32
    %c0_i32_0 = arith.constant 0 : i32
    %c0_i32_1 = arith.constant 0 : i32
    return %c0_i32, %c0_i32_0 : i32, i32
  }
  func.func @transform_6(%arg0: i32) -> (i32, i32) {
    %c0_i32 = arith.constant 0 : i32
    %c0_i32_0 = arith.constant 0 : i32
    %c0_i32_1 = arith.constant 0 : i32
    return %c0_i32, %c0_i32_0 : i32, i32
  }
  func.func @transform_7(%arg0: i32) -> (i32, i32) {
    %c0_i32 = arith.constant 0 : i32
    %c0_i32_0 = arith.constant 0 : i32
    %c0_i32_1 = arith.constant 0 : i32
    return %c0_i32, %c0_i32_0 : i32, i32
  }
  func.func @transform_8(%arg0: i32) -> (i32, i32) {
    %c0_i32 = arith.constant 0 : i32
    %c0_i32_0 = arith.constant 0 : i32
    %c0_i32_1 = arith.constant 0 : i32
    return %c0_i32, %c0_i32_0 : i32, i32
  }
  func.func @transform_9(%arg0: i32) -> (i32, i32) {
    %c0_i32 = arith.constant 0 : i32
    %c0_i32_0 = arith.constant 0 : i32
    %c0_i32_1 = arith.constant 0 : i32
    return %c0_i32, %c0_i32_0 : i32, i32
  }
}

module attributes {stable_mosaic.version = 11 : i64} {
  func.func @_colstats_kernel(%arg0: i32, %arg1: i32, %arg2: memref<32x128xf32, #tpu.memory_space<vmem>>, %arg3: memref<1x128xf32, #tpu.memory_space<vmem>>, %arg4: memref<1x128xf32, #tpu.memory_space<vmem>>, %arg5: memref<1x128xf32, #tpu.memory_space<vmem>>, %arg6: memref<1x128xf32, #tpu.memory_space<vmem>>) attributes {dimension_semantics = [#tpu.dimension_semantics<parallel>, #tpu.dimension_semantics<arbitrary>], iteration_bounds = array<i64: 1, 1>, scalar_prefetch = 0 : i64, scratch_operands = 2 : i64, tpu.core_type = #tpu.core_type<tc>, window_params = [{transform_indices = @transform_0, window_bounds = array<i64: 32, 128>}, {transform_indices = @transform_1, window_bounds = array<i64: 1, 128>}, {transform_indices = @transform_2, window_bounds = array<i64: 1, 128>}]} {
    %c0_i32 = arith.constant 0 : i32
    %0 = arith.cmpi eq, %arg1, %c0_i32 : i32
    %1 = arith.extui %0 : i1 to i32
    %c0_i32_0 = arith.constant 0 : i32
    %2 = arith.cmpi ne, %1, %c0_i32_0 : i32
    scf.if %2 {
      %cst_15 = arith.constant 0.000000e+00 : f32
      %26 = vector.broadcast %cst_15 : f32 to vector<1x128xf32>
      %c0_16 = arith.constant 0 : index
      %c0_17 = arith.constant 0 : index
      %27 = vector.load %arg5[%c0_16, %c0_17] : memref<1x128xf32, #tpu.memory_space<vmem>>, vector<1x128xf32>
      tpu.vector_store %arg5[%c0_16, %c0_17], %26 {strides = array<i32>} : memref<1x128xf32, #tpu.memory_space<vmem>>, vector<1x128xf32>,
      %cst_18 = arith.constant 0.000000e+00 : f32
      %28 = vector.broadcast %cst_18 : f32 to vector<1x128xf32>
      %c0_19 = arith.constant 0 : index
      %c0_20 = arith.constant 0 : index
      %29 = vector.load %arg6[%c0_19, %c0_20] : memref<1x128xf32, #tpu.memory_space<vmem>>, vector<1x128xf32>
      tpu.vector_store %arg6[%c0_19, %c0_20], %28 {strides = array<i32>} : memref<1x128xf32, #tpu.memory_space<vmem>>, vector<1x128xf32>,
    } else {
    }
    %c0 = arith.constant 0 : index
    %c0_1 = arith.constant 0 : index
    %3 = vector.load %arg2[%c0, %c0_1] : memref<32x128xf32, #tpu.memory_space<vmem>>, vector<32x128xf32>
    %4 = tpu.iota {dimensions = array<i32: 0>} : vector<32x128xi32>
    %c32_i32 = arith.constant 32 : i32
    %5 = arith.muli %arg1, %c32_i32 : i32
    %6 = vector.broadcast %5 : i32 to vector<32x128xi32>
    %7 = arith.addi %4, %6 : vector<32x128xi32>
    %c32_i32_2 = arith.constant 32 : i32
    %8 = vector.broadcast %c32_i32_2 : i32 to vector<32x128xi32>
    %9 = arith.cmpi slt, %7, %8 : vector<32x128xi32>
    %cst = arith.constant 0.000000e+00 : f32
    %10 = vector.broadcast %cst : f32 to vector<32x128xf32>
    %11 = arith.select %9, %3, %10 : vector<32x128xi1>, vector<32x128xf32>
    %c0_3 = arith.constant 0 : index
    %c0_4 = arith.constant 0 : index
    %12 = vector.load %arg5[%c0_3, %c0_4] : memref<1x128xf32, #tpu.memory_space<vmem>>, vector<1x128xf32>
    %cst_5 = arith.constant dense<0.000000e+00> : vector<128xf32>
    %13 = vector.multi_reduction <add>, %11, %cst_5 [0] : vector<32x128xf32> to vector<128xf32>
    %14 = vector.shape_cast %13 : vector<128xf32> to vector<1x128xf32>
    %15 = arith.addf %12, %14 : vector<1x128xf32>
    %c0_6 = arith.constant 0 : index
    %c0_7 = arith.constant 0 : index
    %16 = vector.load %arg5[%c0_6, %c0_7] : memref<1x128xf32, #tpu.memory_space<vmem>>, vector<1x128xf32>
    tpu.vector_store %arg5[%c0_6, %c0_7], %15 {strides = array<i32>} : memref<1x128xf32, #tpu.memory_space<vmem>>, vector<1x128xf32>,
    %c0_8 = arith.constant 0 : index
    %c0_9 = arith.constant 0 : index
    %17 = vector.load %arg6[%c0_8, %c0_9] : memref<1x128xf32, #tpu.memory_space<vmem>>, vector<1x128xf32>
    %18 = arith.mulf %11, %11 : vector<32x128xf32>
    %cst_10 = arith.constant dense<0.000000e+00> : vector<128xf32>
    %19 = vector.multi_reduction <add>, %18, %cst_10 [0] : vector<32x128xf32> to vector<128xf32>
    %20 = vector.shape_cast %19 : vector<128xf32> to vector<1x128xf32>
    %21 = arith.addf %17, %20 : vector<1x128xf32>
    %c0_11 = arith.constant 0 : index
    %c0_12 = arith.constant 0 : index
    %22 = vector.load %arg6[%c0_11, %c0_12] : memref<1x128xf32, #tpu.memory_space<vmem>>, vector<1x128xf32>
    tpu.vector_store %arg6[%c0_11, %c0_12], %21 {strides = array<i32>} : memref<1x128xf32, #tpu.memory_space<vmem>>, vector<1x128xf32>,
    %c0_i32_13 = arith.constant 0 : i32
    %23 = arith.cmpi eq, %arg1, %c0_i32_13 : i32
    %24 = arith.extui %23 : i1 to i32
    %c0_i32_14 = arith.constant 0 : i32
    %25 = arith.cmpi ne, %24, %c0_i32_14 : i32
    scf.if %25 {
      %c0_15 = arith.constant 0 : index
      %c0_16 = arith.constant 0 : index
      %26 = vector.load %arg5[%c0_15, %c0_16] : memref<1x128xf32, #tpu.memory_space<vmem>>, vector<1x128xf32>
      %c0_17 = arith.constant 0 : index
      %c0_18 = arith.constant 0 : index
      %27 = vector.load %arg3[%c0_17, %c0_18] : memref<1x128xf32, #tpu.memory_space<vmem>>, vector<1x128xf32>
      tpu.vector_store %arg3[%c0_17, %c0_18], %26 {strides = array<i32>} : memref<1x128xf32, #tpu.memory_space<vmem>>, vector<1x128xf32>,
      %c0_19 = arith.constant 0 : index
      %c0_20 = arith.constant 0 : index
      %28 = vector.load %arg6[%c0_19, %c0_20] : memref<1x128xf32, #tpu.memory_space<vmem>>, vector<1x128xf32>
      %c0_21 = arith.constant 0 : index
      %c0_22 = arith.constant 0 : index
      %29 = vector.load %arg4[%c0_21, %c0_22] : memref<1x128xf32, #tpu.memory_space<vmem>>, vector<1x128xf32>
      tpu.vector_store %arg4[%c0_21, %c0_22], %28 {strides = array<i32>} : memref<1x128xf32, #tpu.memory_space<vmem>>, vector<1x128xf32>,
    } else {
    }
    return
  }
  func.func @transform_0(%arg0: i32, %arg1: i32) -> (i32, i32) {
    %c0_i32 = arith.constant 0 : i32
    return %arg1, %arg0 : i32, i32
  }
  func.func @transform_1(%arg0: i32, %arg1: i32) -> (i32, i32) {
    %c0_i32 = arith.constant 0 : i32
    %c0_i32_0 = arith.constant 0 : i32
    return %c0_i32, %arg0 : i32, i32
  }
  func.func @transform_2(%arg0: i32, %arg1: i32) -> (i32, i32) {
    %c0_i32 = arith.constant 0 : i32
    %c0_i32_0 = arith.constant 0 : i32
    return %c0_i32, %arg0 : i32, i32
  }
}

module attributes {stable_mosaic.version = 11 : i64} {
  func.func @_indv1_kernel(%arg0: i32, %arg1: memref<1x16x128xbf16, #tpu.memory_space<vmem>>, %arg2: memref<16x128xf32, #tpu.memory_space<vmem>>, %arg3: memref<1x16xf32, #tpu.memory_space<vmem>>, %arg4: memref<1x1x16xf32, #tpu.memory_space<vmem>>) attributes {dimension_semantics = [#tpu.dimension_semantics<parallel>], iteration_bounds = array<i64: 2>, scalar_prefetch = 0 : i64, scratch_operands = 0 : i64, tpu.core_type = #tpu.core_type<tc>, window_params = [{transform_indices = @transform_0, window_bounds = array<i64: 1, 16, 128>}, {pipeline_mode = #tpu.pipeline_mode<synchronous>, transform_indices = @transform_1, window_bounds = array<i64: 16, 128>}, {pipeline_mode = #tpu.pipeline_mode<synchronous>, transform_indices = @transform_2, window_bounds = array<i64: 1, 16>}, {transform_indices = @transform_3, window_bounds = array<i64: 1, 1, 16>}]} {
    %c0 = arith.constant 0 : index
    %c0_0 = arith.constant 0 : index
    %c0_1 = arith.constant 0 : index
    %0 = vector.load %arg1[%c0, %c0_0, %c0_1] : memref<1x16x128xbf16, #tpu.memory_space<vmem>>, vector<1x16x128xbf16>
    %1 = arith.extf %0 : vector<1x16x128xbf16> to vector<1x16x128xf32>
    %c0_2 = arith.constant 0 : index
    %c0_3 = arith.constant 0 : index
    %2 = vector.load %arg2[%c0_2, %c0_3] : memref<16x128xf32, #tpu.memory_space<vmem>>, vector<16x128xf32>
    %3 = vector.shape_cast %2 : vector<16x128xf32> to vector<1x16x128xf32>
    %4 = arith.mulf %1, %3 : vector<1x16x128xf32>
    %cst = arith.constant dense<0.000000e+00> : vector<1x16xf32>
    %5 = vector.multi_reduction <add>, %4, %cst [2] : vector<1x16x128xf32> to vector<1x16xf32>
    %c0_4 = arith.constant 0 : index
    %c0_5 = arith.constant 0 : index
    %6 = vector.load %arg3[%c0_4, %c0_5] : memref<1x16xf32, #tpu.memory_space<vmem>>, vector<1x16xf32>
    %7 = arith.addf %5, %6 : vector<1x16xf32>
    %8 = vector.shape_cast %7 : vector<1x16xf32> to vector<1x1x16xf32>
    %c0_6 = arith.constant 0 : index
    %c0_7 = arith.constant 0 : index
    %c0_8 = arith.constant 0 : index
    %9 = vector.load %arg4[%c0_6, %c0_7, %c0_8] : memref<1x1x16xf32, #tpu.memory_space<vmem>>, vector<1x1x16xf32>
    tpu.vector_store %arg4[%c0_6, %c0_7, %c0_8], %8 {strides = array<i32>} : memref<1x1x16xf32, #tpu.memory_space<vmem>>, vector<1x1x16xf32>,
    return
  }
  func.func @transform_0(%arg0: i32) -> (i32, i32, i32) {
    %c0_i32 = arith.constant 0 : i32
    %c0_i32_0 = arith.constant 0 : i32
    %c0_i32_1 = arith.constant 0 : i32
    return %arg0, %c0_i32, %c0_i32_0 : i32, i32, i32
  }
  func.func @transform_1(%arg0: i32) -> (i32, i32) {
    %c0_i32 = arith.constant 0 : i32
    %c0_i32_0 = arith.constant 0 : i32
    %c0_i32_1 = arith.constant 0 : i32
    return %c0_i32, %c0_i32_0 : i32, i32
  }
  func.func @transform_2(%arg0: i32) -> (i32, i32) {
    %c0_i32 = arith.constant 0 : i32
    %c0_i32_0 = arith.constant 0 : i32
    %c0_i32_1 = arith.constant 0 : i32
    return %c0_i32, %c0_i32_0 : i32, i32
  }
  func.func @transform_3(%arg0: i32) -> (i32, i32, i32) {
    %c0_i32 = arith.constant 0 : i32
    %c0_i32_0 = arith.constant 0 : i32
    %c0_i32_1 = arith.constant 0 : i32
    return %arg0, %c0_i32, %c0_i32_0 : i32, i32, i32
  }
}

module attributes {stable_mosaic.version = 11 : i64} {
  func.func @_indv2_kernel(%arg0: i32, %arg1: memref<8x128xf32, #tpu.memory_space<vmem>>, %arg2: memref<8x128xbf16, #tpu.memory_space<vmem>>, %arg3: memref<1x128xf32, #tpu.memory_space<vmem>>, %arg4: memref<128x128xbf16, #tpu.memory_space<vmem>>, %arg5: memref<1x128xf32, #tpu.memory_space<vmem>>, %arg6: memref<8x128xf32, #tpu.memory_space<vmem>>, %arg7: memref<8x128xf32, #tpu.memory_space<vmem>>) attributes {dimension_semantics = [#tpu.dimension_semantics<parallel>], iteration_bounds = array<i64: 1>, scalar_prefetch = 0 : i64, scratch_operands = 0 : i64, tpu.core_type = #tpu.core_type<tc>, window_params = [{transform_indices = @transform_0, window_bounds = array<i64: 8, 128>}, {pipeline_mode = #tpu.pipeline_mode<synchronous>, transform_indices = @transform_1, window_bounds = array<i64: 8, 128>}, {transform_indices = @transform_2, window_bounds = array<i64: 1, 128>}, {transform_indices = @transform_3, window_bounds = array<i64: 128, 128>}, {transform_indices = @transform_4, window_bounds = array<i64: 1, 128>}, {transform_indices = @transform_5, window_bounds = array<i64: 8, 128>}, {transform_indices = @transform_6, window_bounds = array<i64: 8, 128>}]} {
    %c0 = arith.constant 0 : index
    %c0_0 = arith.constant 0 : index
    %0 = vector.load %arg2[%c0, %c0_0] : memref<8x128xbf16, #tpu.memory_space<vmem>>, vector<8x128xbf16>
    %c0_1 = arith.constant 0 : index
    %c0_2 = arith.constant 0 : index
    %1 = vector.load %arg4[%c0_1, %c0_2] : memref<128x128xbf16, #tpu.memory_space<vmem>>, vector<128x128xbf16>
    %cst = arith.constant dense<0.000000e+00> : vector<8x128xf32>
    %2 = tpu.matmul %0, %1, %cst {dimension_numbers = #tpu.dot_dimension_numbers<[1], [0], [0], [1], [0, 0, 1, 1], [], []>} : vector<8x128xbf16>, vector<128x128xbf16>, vector<8x128xf32> -> vector<8x128xf32>
    %c0_3 = arith.constant 0 : index
    %c0_4 = arith.constant 0 : index
    %3 = vector.load %arg1[%c0_3, %c0_4] : memref<8x128xf32, #tpu.memory_space<vmem>>, vector<8x128xf32>
    %c0_5 = arith.constant 0 : index
    %c0_6 = arith.constant 0 : index
    %4 = vector.load %arg3[%c0_5, %c0_6] : memref<1x128xf32, #tpu.memory_space<vmem>>, vector<1x128xf32>
    %5 = vector.broadcast %4 : vector<1x128xf32> to vector<8x128xf32>
    %6 = arith.mulf %3, %5 : vector<8x128xf32>
    %7 = arith.addf %6, %2 : vector<8x128xf32>
    %c0_7 = arith.constant 0 : index
    %c0_8 = arith.constant 0 : index
    %8 = vector.load %arg5[%c0_7, %c0_8] : memref<1x128xf32, #tpu.memory_space<vmem>>, vector<1x128xf32>
    %9 = vector.broadcast %8 : vector<1x128xf32> to vector<8x128xf32>
    %10 = arith.addf %7, %9 : vector<8x128xf32>
    %c0_9 = arith.constant 0 : index
    %c0_10 = arith.constant 0 : index
    %11 = vector.load %arg6[%c0_9, %c0_10] : memref<8x128xf32, #tpu.memory_space<vmem>>, vector<8x128xf32>
    %12 = arith.addf %10, %11 : vector<8x128xf32>
    %c0_11 = arith.constant 0 : index
    %c0_12 = arith.constant 0 : index
    %13 = vector.load %arg7[%c0_11, %c0_12] : memref<8x128xf32, #tpu.memory_space<vmem>>, vector<8x128xf32>
    tpu.vector_store %arg7[%c0_11, %c0_12], %12 {strides = array<i32>} : memref<8x128xf32, #tpu.memory_space<vmem>>, vector<8x128xf32>,
    return
  }
  func.func @transform_0(%arg0: i32) -> (i32, i32) {
    %c0_i32 = arith.constant 0 : i32
    %c0_i32_0 = arith.constant 0 : i32
    return %c0_i32, %arg0 : i32, i32
  }
  func.func @transform_1(%arg0: i32) -> (i32, i32) {
    %c0_i32 = arith.constant 0 : i32
    %c0_i32_0 = arith.constant 0 : i32
    %c0_i32_1 = arith.constant 0 : i32
    return %c0_i32, %c0_i32_0 : i32, i32
  }
  func.func @transform_2(%arg0: i32) -> (i32, i32) {
    %c0_i32 = arith.constant 0 : i32
    %c0_i32_0 = arith.constant 0 : i32
    return %c0_i32, %arg0 : i32, i32
  }
  func.func @transform_3(%arg0: i32) -> (i32, i32) {
    %c0_i32 = arith.constant 0 : i32
    %c0_i32_0 = arith.constant 0 : i32
    return %c0_i32, %arg0 : i32, i32
  }
  func.func @transform_4(%arg0: i32) -> (i32, i32) {
    %c0_i32 = arith.constant 0 : i32
    %c0_i32_0 = arith.constant 0 : i32
    return %c0_i32, %arg0 : i32, i32
  }
  func.func @transform_5(%arg0: i32) -> (i32, i32) {
    %c0_i32 = arith.constant 0 : i32
    %c0_i32_0 = arith.constant 0 : i32
    return %c0_i32, %arg0 : i32, i32
  }
  func.func @transform_6(%arg0: i32) -> (i32, i32) {
    %c0_i32 = arith.constant 0 : i32
    %c0_i32_0 = arith.constant 0 : i32
    return %c0_i32, %arg0 : i32, i32
  }
}

</mosaic_0001>

<llo_original>
// kernel: _lambda_.21
$region0: #{_lambda_.21}
  #allocation0 [shape = 'u32[]', space=smem, size = 0x4, offset = 0x4, fixed_abs, tag = 'smem constant byte address 0x4 - core index']
  #allocation1 [shape = 'u32[144,128]{1,0:T(1,128)}', space=vmem, size = 0x12000, scoped, tag = 'internal scratch']
  #allocation2 [shape = 'f32[16,128]{1,0:T(8,128)}', space=vmem, size = 0x2000, scoped, tag = 'scratch operand']
  %s0 = inlined_call_operand.vmem [shape: bf16[16,128], index: 0, kind: input, shape index: {}]
  %s1 = inlined_call_operand.vmem [shape: bf16[128,128], index: 1, kind: input, shape index: {}]
  %s2 = inlined_call_operand.vmem [shape: f32[1,128], index: 2, kind: input, shape index: {}]
  %s3 = inlined_call_operand.vmem [shape: bf16[16,128], index: 3, kind: output, shape index: {}]
  %s4 = sld [smem:[#allocation0]]
  $region30: #{_lambda_.21} parent=0
    _
  %s6 = ssub.s32 1, %s4
  %s7 = scalar_select 0, %s6, %s4
  // Predicated region
  $region2: #{_lambda_.21} parent=0 // pred_check
    _
  $region3: #{_lambda_.21} parent=0 // pred_check_branch
    %9 = sbr.rel (0) target = $region5
  $region4: #{_lambda_.21} parent=0 // pred_region
    _
  $region5: #{_lambda_.21} parent=0 // pred_fallthru
    _
  // Predicated region
  $region6: #{_lambda_.21} parent=0 // pred_check
    _
  $region7: #{_lambda_.21} parent=0 // pred_check_branch
    %11 = sbr.rel (0) target = $region9
  $region8: #{_lambda_.21} parent=0 // pred_region
    _
  $region9: #{_lambda_.21} parent=0 // pred_fallthru
    _
  // Predicated region
  $region10: #{_lambda_.21} parent=0 // pred_check
    _
  $region11: #{_lambda_.21} parent=0 // pred_check_branch
    %13 = sbr.rel (0) target = $region13
  $region12: #{_lambda_.21} parent=0 // pred_region
    _
  $region13: #{_lambda_.21} parent=0 // pred_fallthru
    _
  %p15 = scmp.eq.s32.totalorder 0, 0
  // Predicated region
  $region14: #{_lambda_.21} parent=0 // pred_check
    %p16 = pneg %p15
  $region15: #{_lambda_.21} parent=0 // pred_check_branch
    %18 = sbr.rel (%p16) target = $region17
  $region16: #{_lambda_.21} parent=0 // pred_region
    %19 = vst [vmem:[#allocation2] sm:$0xff] 0.0
    %20 = vst [vmem:[#allocation2 + $0x8] sm:$0xff] 0.0
  $region17: #{_lambda_.21} parent=0 // pred_fallthru
    _
  %v21 = vld [vmem:[%s0] sm:$0xf]
  %v22 = vld [vmem:[%s0 + $0x4] sm:$0xf]
  %v23 = vld [vmem:[#allocation2] sm:$0xff]
  %v24 = vld [vmem:[#allocation2 + $0x8] sm:$0xff]
  %v25 = vld [vmem:[%s1] sm:$0xf]
  %v26 = vld [vmem:[%s1 + $0x4] sm:$0xf]
  %v27 = vld [vmem:[%s1 + $0x8] sm:$0xf]
  %v28 = vld [vmem:[%s1 + $0xc] sm:$0xf]
  %v29 = vld [vmem:[%s1 + $0x10] sm:$0xf]
  %v30 = vld [vmem:[%s1 + $0x14] sm:$0xf]
  %v31 = vld [vmem:[%s1 + $0x18] sm:$0xf]
  %v32 = vld [vmem:[%s1 + $0x1c] sm:$0xf]
  %v33 = vld [vmem:[%s1 + $0x20] sm:$0xf]
  %v34 = vld [vmem:[%s1 + $0x24] sm:$0xf]
  %v35 = vld [vmem:[%s1 + $0x28] sm:$0xf]
  %v36 = vld [vmem:[%s1 + $0x2c] sm:$0xf]
  %v37 = vld [vmem:[%s1 + $0x30] sm:$0xf]
  %v38 = vld [vmem:[%s1 + $0x34] sm:$0xf]
  %v39 = vld [vmem:[%s1 + $0x38] sm:$0xf]
  %v40 = vld [vmem:[%s1 + $0x3c] sm:$0xf]
  %v43 = vunpack.c.l.b16 %v21
  %v44 = vunpack.c.l.b16 %v22
  %v45 = vpack.c.b16 %v44, %v43
  %v63 = vunpack.c.l.b16 %v25
  %v64 = vunpack.c.l.b16 %v26
  %v65 = vunpack.c.l.b16 %v27
  %v66 = vunpack.c.l.b16 %v28
  %v67 = vunpack.c.l.b16 %v29
  %v68 = vunpack.c.l.b16 %v30
  %v69 = vunpack.c.l.b16 %v31
  %v70 = vunpack.c.l.b16 %v32
  %v71 = vunpack.c.l.b16 %v33
  %v72 = vunpack.c.l.b16 %v34
  %v73 = vunpack.c.l.b16 %v35
  %v74 = vunpack.c.l.b16 %v36
  %v75 = vunpack.c.l.b16 %v37
  %v76 = vunpack.c.l.b16 %v38
  %v77 = vunpack.c.l.b16 %v39
  %v78 = vunpack.c.l.b16 %v40
  %v79 = vpack.c.b16 %v64, %v63
  %v80 = vpack.c.b16 %v66, %v65
  %v81 = vpack.c.b16 %v68, %v67
  %v82 = vpack.c.b16 %v70, %v69
  %v83 = vpack.c.b16 %v72, %v71
  %v84 = vpack.c.b16 %v74, %v73
  %v85 = vpack.c.b16 %v76, %v75
  %v86 = vpack.c.b16 %v78, %v77
  %95 = vmatprep.subr.bf16.mxu0 0
  %96 = vmatpush1.bf16.msra.mxu0 %v79
  %97 = vmatprep.subr.bf16.mxu0 0
  %98 = vmatpush1.bf16.msra.mxu0 %v80
  %99 = vmatprep.subr.bf16.mxu0 0
  %100 = vmatpush1.bf16.msra.mxu0 %v81
  %101 = vmatprep.subr.bf16.mxu0 0
  %102 = vmatpush1.bf16.msra.mxu0 %v82
  %103 = vmatprep.subr.bf16.mxu0 0
  %104 = vmatpush1.bf16.msra.mxu0 %v83
  %105 = vmatprep.subr.bf16.mxu0 0
  %106 = vmatpush1.bf16.msra.mxu0 %v84
  %107 = vmatprep.subr.bf16.mxu0 0
  %108 = vmatpush1.bf16.msra.mxu0 %v85
  %109 = vmatprep.subr.bf16.mxu0 0
  %110 = vmatpush1.bf16.msra.mxu0 %v86
  %111 = vmatprep.subr.bf16.mxu0 0
  %112 = vmatpush1.bf16.msra.mxu0 0
  %113 = vmatprep.subr.bf16.mxu0 0
  %114 = vmatpush1.bf16.msra.mxu0 0
  %115 = vmatprep.subr.bf16.mxu0 0
  %116 = vmatpush1.bf16.msra.mxu0 0
  %117 = vmatprep.subr.bf16.mxu0 0
  %118 = vmatpush1.bf16.msra.mxu0 0
  %119 = vmatprep.subr.bf16.mxu0 0
  %120 = vmatpush1.bf16.msra.mxu0 0
  %121 = vmatprep.subr.bf16.mxu0 0
  %122 = vmatpush1.bf16.msra.mxu0 0
  %123 = vmatprep.subr.bf16.mxu0 0
  %124 = vmatpush1.bf16.msra.mxu0 0
  %125 = vmatprep.subr.bf16.mxu0 0
  %126 = vmatpush1.bf16.msra.mxu0 0
  %127 = vmatprep.mubr.bf16.mxu0 0
  %128 = vmatmul.mubr.bf16.gmra.mrb[0].mxu0 %v45
  %v129 = vpop.f32.mrb[0].mxu0
  %v130 = vadd.f32 0.0, %v129
  %v131 = vpop.f32.mrb[0].mxu0
  %v132 = vpop.f32.mrb[0].mxu0
  %v133 = vadd.f32 0.0, %v132
  %v134 = vpop.f32.mrb[0].mxu0
  %135 = vdwg.mxu0
  %v136 = vadd.f32 %v23, %v130
  %v137 = vadd.f32 %v24, %v133
  %138 = vst [vmem:[#allocation2] sm:$0xff] %v136
  %139 = vst [vmem:[#allocation2 + $0x8] sm:$0xff] %v137
  // Predicated region
  $region18: #{_lambda_.21} parent=0 // pred_check
    %p140 = pneg %p15
  $region19: #{_lambda_.21} parent=0 // pred_check_branch
    %142 = sbr.rel (%p140) target = $region21
  $region20: #{_lambda_.21} parent=0 // pred_region
    %v143 = vld [vmem:[#allocation2] sm:$0xff]
    %v144 = vld [vmem:[#allocation2 + $0x8] sm:$0xff]
    %v145 = vld [vmem:[%s2] sm:$0x1]
    %v147 = vlaneseq
    %v148 = vshrl.u32 %v147, 7
    %v149 = vsub.s32 0, %v148
    %v150 = vrot.slane %v145, %v149
    %v152 = vadd.f32 %v143, %v150
    %v153 = vadd.f32 %v144, %v150
    %v154 = vpack.c.bf16 %v153, %v152
    %v156 = vunpack.c.l.b16 %v154
    %v157 = vunpack.c.h.b16 %v154
    %v158 = vpack.c.b16 %v156, %v156
    %v159 = vpack.c.b16 %v157, %v157
    %162 = vst [vmem:[%s3] sm:$0xf] %v158
    %163 = vst [vmem:[%s3 + $0x4] sm:$0xf] %v159
  $region21: #{_lambda_.21} parent=0 // pred_fallthru
    _
  // Predicated region
  $region22: #{_lambda_.21} parent=0 // pred_check
    _
  $region23: #{_lambda_.21} parent=0 // pred_check_branch
    %165 = sbr.rel (0) target = $region25
  $region24: #{_lambda_.21} parent=0 // pred_region
    _
  $region25: #{_lambda_.21} parent=0 // pred_fallthru
    _
  // Predicated region
  $region26: #{_lambda_.21} parent=0 // pred_check
    _
  $region27: #{_lambda_.21} parent=0 // pred_check_branch
    %167 = sbr.rel (0) target = $region29
  $region28: #{_lambda_.21} parent=0 // pred_region
    _
  $region29: #{_lambda_.21} parent=0 // pred_fallthru
    _

// kernel: _lambda_.20
$region0: #{_lambda_.20}
  #allocation0 [shape = 'u32[]', space=smem, size = 0x4, offset = 0x4, fixed_abs, tag = 'smem constant byte address 0x4 - core index']
  #allocation1 [shape = 'u32[144,128]{1,0:T(1,128)}', space=vmem, size = 0x12000, scoped, tag = 'internal scratch']
  #allocation2 [shape = 'f32[1,128]{1,0:T(1,128)}', space=vmem, size = 0x200, scoped, tag = 'scratch operand']
  #allocation3 [shape = 'f32[1,128]{1,0:T(1,128)}', space=vmem, size = 0x200, scoped, tag = 'scratch operand']
  %s0 = inlined_call_operand.vmem [shape: f32[16,128], index: 0, kind: input, shape index: {}]
  %s1 = inlined_call_operand.vmem [shape: f32[1,128], index: 1, kind: output, shape index: {0}]
  %s2 = inlined_call_operand.vmem [shape: f32[1,128], index: 2, kind: output, shape index: {1}]
  %3 = xla_tuple %s1, %s2
  %s4 = sld [smem:[#allocation0]]
  $region30: #{_lambda_.20} parent=0
    _
  %s6 = ssub.s32 1, %s4
  %s7 = scalar_select 0, %s6, %s4
  // Predicated region
  $region2: #{_lambda_.20} parent=0 // pred_check
    _
  $region3: #{_lambda_.20} parent=0 // pred_check_branch
    %9 = sbr.rel (0) target = $region5
  $region4: #{_lambda_.20} parent=0 // pred_region
    _
  $region5: #{_lambda_.20} parent=0 // pred_fallthru
    _
  %p10 = scmp.eq.s32.totalorder 0, 0
  // Predicated region
  $region6: #{_lambda_.20} parent=0 // pred_check
    %p11 = pneg %p10
  $region7: #{_lambda_.20} parent=0 // pred_check_branch
    %13 = sbr.rel (%p11) target = $region9
  $region8: #{_lambda_.20} parent=0 // pred_region
    %14 = vst [vmem:[#allocation2] sm:$0x1] 0.0
    %15 = vst [vmem:[#allocation3] sm:$0x1] 0.0
  $region9: #{_lambda_.20} parent=0 // pred_fallthru
    _
  %v16 = vld [vmem:[%s0] sm:$0xff]
  %v17 = vld [vmem:[%s0 + $0x8] sm:$0xff]
  %v18 = vlaneseq
  %v19 = vshrl.u32 %v18, 7
  %v20 = vadd.s32 %v19, 8
  %s21 = smul.u32 0, 16
  %v22 = vstv %s21
  %v23 = vadd.s32 %v19, %v22
  %v24 = vadd.s32 %v20, %v22
  %vm25 = vcmp.lt.s32.totalorder %v23, 16
  %vm26 = vcmp.lt.s32.totalorder %v24, 16
  %v27 = vsel %vm25, %v16, 0.0
  %v28 = vsel %vm26, %v17, 0.0
  %v29 = vld [vmem:[#allocation2] sm:$0x1]
  %v30 = vadd.f32 %v27, %v28
  %v31 = vrot.slane %v30, 4
  %v32 = vadd.f32 %v30, %v31
  %v33 = vrot.slane %v32, 2
  %v34 = vadd.f32 %v32, %v33
  %v35 = vrot.slane %v34, 1
  %v36 = vadd.f32 %v34, %v35
  %v37 = vadd.f32 %v29, %v36
  %38 = vst [vmem:[#allocation2] sm:$0x1] %v37
  %v39 = vld [vmem:[#allocation3] sm:$0x1]
  %v40 = vmul.f32 %v27, %v27
  %v41 = vmul.f32 %v28, %v28
  %v42 = vadd.f32 %v40, %v41
  %v43 = vrot.slane %v42, 4
  %v44 = vadd.f32 %v42, %v43
  %v45 = vrot.slane %v44, 2
  %v46 = vadd.f32 %v44, %v45
  %v47 = vrot.slane %v46, 1
  %v48 = vadd.f32 %v46, %v47
  %v49 = vadd.f32 %v39, %v48
  %50 = vst [vmem:[#allocation3] sm:$0x1] %v49
  // Predicated region
  $region10: #{_lambda_.20} parent=0 // pred_check
    %p51 = pneg %p10
  $region11: #{_lambda_.20} parent=0 // pred_check_branch
    %53 = sbr.rel (%p51) target = $region13
  $region12: #{_lambda_.20} parent=0 // pred_region
    %v54 = vld [vmem:[#allocation2] sm:$0x1]
    %55 = vst [vmem:[%s1] sm:$0x1] %v54
    %v56 = vld [vmem:[#allocation3] sm:$0x1]
    %57 = vst [vmem:[%s2] sm:$0x1] %v56
  $region13: #{_lambda_.20} parent=0 // pred_fallthru
    _
  // Predicated region
  $region14: #{_lambda_.20} parent=0 // pred_check
    _
  $region15: #{_lambda_.20} parent=0 // pred_check_branch
    %59 = sbr.rel (0) target = $region17
  $region16: #{_lambda_.20} parent=0 // pred_region
    _
  $region17: #{_lambda_.20} parent=0 // pred_fallthru
    _
  // Predicated region
  $region18: #{_lambda_.20} parent=0 // pred_check
    _
  $region19: #{_lambda_.20} parent=0 // pred_check_branch
    %61 = sbr.rel (0) target = $region21
  $region20: #{_lambda_.20} parent=0 // pred_region
    _
  $region21: #{_lambda_.20} parent=0 // pred_fallthru
    _
  // Predicated region
  $region22: #{_lambda_.20} parent=0 // pred_check
    _
  $region23: #{_lambda_.20} parent=0 // pred_check_branch
    %63 = sbr.rel (0) target = $region25
  $region24: #{_lambda_.20} parent=0 // pred_region
    _
  $region25: #{_lambda_.20} parent=0 // pred_fallthru
    _
  // Predicated region
  $region26: #{_lambda_.20} parent=0 // pred_check
    _
  $region27: #{_lambda_.20} parent=0 // pred_check_branch
    %65 = sbr.rel (0) target = $region29
  $region28: #{_lambda_.20} parent=0 // pred_region
    _
  $region29: #{_lambda_.20} parent=0 // pred_fallthru
    _

// kernel: _lambda_.22
$region0: #{_lambda_.22}
  #allocation0 [shape = 'u32[]', space=smem, size = 0x4, offset = 0x4, fixed_abs, tag = 'smem constant byte address 0x4 - core index']
  #allocation1 [shape = 'u32[144,128]{1,0:T(1,128)}', space=vmem, size = 0x12000, scoped, tag = 'internal scratch']
  #allocation2 [shape = 'f32[32,128]{1,0:T(8,128)}', space=vmem, size = 0x4000, scoped, tag = 'scratch operand']
  %s0 = inlined_call_operand.vmem [shape: bf16[32,128], index: 0, kind: input, shape index: {}]
  %s1 = inlined_call_operand.vmem [shape: bf16[128,128], index: 1, kind: input, shape index: {}]
  %s2 = inlined_call_operand.vmem [shape: f32[1,128], index: 2, kind: input, shape index: {}]
  %s3 = inlined_call_operand.vmem [shape: bf16[32,128], index: 3, kind: output, shape index: {}]
  %s4 = sld [smem:[#allocation0]]
  $region30: #{_lambda_.22} parent=0
    _
  %s6 = ssub.s32 1, %s4
  %s7 = scalar_select 0, %s6, %s4
  // Predicated region
  $region2: #{_lambda_.22} parent=0 // pred_check
    _
  $region3: #{_lambda_.22} parent=0 // pred_check_branch
    %9 = sbr.rel (0) target = $region5
  $region4: #{_lambda_.22} parent=0 // pred_region
    _
  $region5: #{_lambda_.22} parent=0 // pred_fallthru
    _
  // Predicated region
  $region6: #{_lambda_.22} parent=0 // pred_check
    _
  $region7: #{_lambda_.22} parent=0 // pred_check_branch
    %11 = sbr.rel (0) target = $region9
  $region8: #{_lambda_.22} parent=0 // pred_region
    _
  $region9: #{_lambda_.22} parent=0 // pred_fallthru
    _
  // Predicated region
  $region10: #{_lambda_.22} parent=0 // pred_check
    _
  $region11: #{_lambda_.22} parent=0 // pred_check_branch
    %13 = sbr.rel (0) target = $region13
  $region12: #{_lambda_.22} parent=0 // pred_region
    _
  $region13: #{_lambda_.22} parent=0 // pred_fallthru
    _
  %p15 = scmp.eq.s32.totalorder 0, 0
  // Predicated region
  $region14: #{_lambda_.22} parent=0 // pred_check
    %p16 = pneg %p15
  $region15: #{_lambda_.22} parent=0 // pred_check_branch
    %18 = sbr.rel (%p16) target = $region17
  $region16: #{_lambda_.22} parent=0 // pred_region
    %19 = vst [vmem:[#allocation2] sm:$0xff] 0.0
    %20 = vst [vmem:[#allocation2 + $0x8] sm:$0xff] 0.0
    %21 = vst [vmem:[#allocation2 + $0x10] sm:$0xff] 0.0
    %22 = vst [vmem:[#allocation2 + $0x18] sm:$0xff] 0.0
  $region17: #{_lambda_.22} parent=0 // pred_fallthru
    _
  %v23 = vld [vmem:[%s0] sm:$0xf]
  %v24 = vld [vmem:[%s0 + $0x4] sm:$0xf]
  %v25 = vld [vmem:[%s0 + $0x8] sm:$0xf]
  %v26 = vld [vmem:[%s0 + $0xc] sm:$0xf]
  %v27 = vld [vmem:[#allocation2] sm:$0xff]
  %v28 = vld [vmem:[#allocation2 + $0x8] sm:$0xff]
  %v29 = vld [vmem:[#allocation2 + $0x10] sm:$0xff]
  %v30 = vld [vmem:[#allocation2 + $0x18] sm:$0xff]
  %v31 = vld [vmem:[%s1] sm:$0xf]
  %v32 = vld [vmem:[%s1 + $0x4] sm:$0xf]
  %v33 = vld [vmem:[%s1 + $0x8] sm:$0xf]
  %v34 = vld [vmem:[%s1 + $0xc] sm:$0xf]
  %v35 = vld [vmem:[%s1 + $0x10] sm:$0xf]
  %v36 = vld [vmem:[%s1 + $0x14] sm:$0xf]
  %v37 = vld [vmem:[%s1 + $0x18] sm:$0xf]
  %v38 = vld [vmem:[%s1 + $0x1c] sm:$0xf]
  %v39 = vld [vmem:[%s1 + $0x20] sm:$0xf]
  %v40 = vld [vmem:[%s1 + $0x24] sm:$0xf]
  %v41 = vld [vmem:[%s1 + $0x28] sm:$0xf]
  %v42 = vld [vmem:[%s1 + $0x2c] sm:$0xf]
  %v43 = vld [vmem:[%s1 + $0x30] sm:$0xf]
  %v44 = vld [vmem:[%s1 + $0x34] sm:$0xf]
  %v45 = vld [vmem:[%s1 + $0x38] sm:$0xf]
  %v46 = vld [vmem:[%s1 + $0x3c] sm:$0xf]
  %v51 = vunpack.c.l.b16 %v23
  %v52 = vunpack.c.l.b16 %v24
  %v53 = vunpack.c.l.b16 %v25
  %v54 = vunpack.c.l.b16 %v26
  %v55 = vpack.c.b16 %v52, %v51
  %v56 = vpack.c.b16 %v54, %v53
  %v75 = vunpack.c.l.b16 %v31
  %v76 = vunpack.c.l.b16 %v32
  %v77 = vunpack.c.l.b16 %v33
  %v78 = vunpack.c.l.b16 %v34
  %v79 = vunpack.c.l.b16 %v35
  %v80 = vunpack.c.l.b16 %v36
  %v81 = vunpack.c.l.b16 %v37
  %v82 = vunpack.c.l.b16 %v38
  %v83 = vunpack.c.l.b16 %v39
  %v84 = vunpack.c.l.b16 %v40
  %v85 = vunpack.c.l.b16 %v41
  %v86 = vunpack.c.l.b16 %v42
  %v87 = vunpack.c.l.b16 %v43
  %v88 = vunpack.c.l.b16 %v44
  %v89 = vunpack.c.l.b16 %v45
  %v90 = vunpack.c.l.b16 %v46
  %v91 = vpack.c.b16 %v76, %v75
  %v92 = vpack.c.b16 %v78, %v77
  %v93 = vpack.c.b16 %v80, %v79
  %v94 = vpack.c.b16 %v82, %v81
  %v95 = vpack.c.b16 %v84, %v83
  %v96 = vpack.c.b16 %v86, %v85
  %v97 = vpack.c.b16 %v88, %v87
  %v98 = vpack.c.b16 %v90, %v89
  %107 = vmatprep.subr.bf16.mxu0 0
  %108 = vmatpush1.bf16.msra.mxu0 %v91
  %109 = vmatprep.subr.bf16.mxu0 0
  %110 = vmatpush1.bf16.msra.mxu0 %v92
  %111 = vmatprep.subr.bf16.mxu0 0
  %112 = vmatpush1.bf16.msra.mxu0 %v93
  %113 = vmatprep.subr.bf16.mxu0 0
  %114 = vmatpush1.bf16.msra.mxu0 %v94
  %115 = vmatprep.subr.bf16.mxu0 0
  %116 = vmatpush1.bf16.msra.mxu0 %v95
  %117 = vmatprep.subr.bf16.mxu0 0
  %118 = vmatpush1.bf16.msra.mxu0 %v96
  %119 = vmatprep.subr.bf16.mxu0 0
  %120 = vmatpush1.bf16.msra.mxu0 %v97
  %121 = vmatprep.subr.bf16.mxu0 0
  %122 = vmatpush1.bf16.msra.mxu0 %v98
  %123 = vmatprep.subr.bf16.mxu0 0
  %124 = vmatpush1.bf16.msra.mxu0 0
  %125 = vmatprep.subr.bf16.mxu0 0
  %126 = vmatpush1.bf16.msra.mxu0 0
  %127 = vmatprep.subr.bf16.mxu0 0
  %128 = vmatpush1.bf16.msra.mxu0 0
  %129 = vmatprep.subr.bf16.mxu0 0
  %130 = vmatpush1.bf16.msra.mxu0 0
  %131 = vmatprep.subr.bf16.mxu0 0
  %132 = vmatpush1.bf16.msra.mxu0 0
  %133 = vmatprep.subr.bf16.mxu0 0
  %134 = vmatpush1.bf16.msra.mxu0 0
  %135 = vmatprep.subr.bf16.mxu0 0
  %136 = vmatpush1.bf16.msra.mxu0 0
  %137 = vmatprep.subr.bf16.mxu0 0
  %138 = vmatpush1.bf16.msra.mxu0 0
  %139 = vmatprep.mubr.bf16.mxu0 0
  %140 = vmatmul.mubr.bf16.gmra.mrb[0].mxu0 %v55
  %v141 = vpop.f32.mrb[0].mxu0
  %v142 = vadd.f32 0.0, %v141
  %v143 = vpop.f32.mrb[0].mxu0
  %v144 = vpop.f32.mrb[0].mxu0
  %v145 = vadd.f32 0.0, %v144
  %v146 = vpop.f32.mrb[0].mxu0
  %147 = vmatprep.mubr.bf16.mxu0 0
  %148 = vmatmul.mubr.bf16.gmra.mrb[0].mxu0 %v56
  %v149 = vpop.f32.mrb[0].mxu0
  %v150 = vadd.f32 0.0, %v149
  %v151 = vpop.f32.mrb[0].mxu0
  %v152 = vpop.f32.mrb[0].mxu0
  %v153 = vadd.f32 0.0, %v152
  %v154 = vpop.f32.mrb[0].mxu0
  %155 = vdwg.mxu0
  %v156 = vadd.f32 %v27, %v142
  %v157 = vadd.f32 %v28, %v145
  %v158 = vadd.f32 %v29, %v150
  %v159 = vadd.f32 %v30, %v153
  %160 = vst [vmem:[#allocation2] sm:$0xff] %v156
  %161 = vst [vmem:[#allocation2 + $0x8] sm:$0xff] %v157
  %162 = vst [vmem:[#allocation2 + $0x10] sm:$0xff] %v158
  %163 = vst [vmem:[#allocation2 + $0x18] sm:$0xff] %v159
  // Predicated region
  $region18: #{_lambda_.22} parent=0 // pred_check
    %p164 = pneg %p15
  $region19: #{_lambda_.22} parent=0 // pred_check_branch
    %166 = sbr.rel (%p164) target = $region21
  $region20: #{_lambda_.22} parent=0 // pred_region
    %v167 = vld [vmem:[#allocation2] sm:$0xff]
    %v168 = vld [vmem:[#allocation2 + $0x8] sm:$0xff]
    %v169 = vld [vmem:[#allocation2 + $0x10] sm:$0xff]
    %v170 = vld [vmem:[#allocation2 + $0x18] sm:$0xff]
    %v171 = vld [vmem:[%s2] sm:$0x1]
    %v173 = vlaneseq
    %v174 = vshrl.u32 %v173, 7
    %v175 = vsub.s32 0, %v174
    %v176 = vrot.slane %v171, %v175
    %v178 = vadd.f32 %v167, %v176
    %v179 = vadd.f32 %v168, %v176
    %v180 = vadd.f32 %v169, %v176
    %v181 = vadd.f32 %v170, %v176
    %v182 = vpack.c.bf16 %v179, %v178
    %v183 = vpack.c.bf16 %v181, %v180
    %v186 = vunpack.c.l.b16 %v182
    %v187 = vunpack.c.h.b16 %v182
    %v188 = vunpack.c.l.b16 %v183
    %v189 = vunpack.c.h.b16 %v183
    %v190 = vpack.c.b16 %v186, %v186
    %v191 = vpack.c.b16 %v187, %v187
    %v192 = vpack.c.b16 %v188, %v188
    %v193 = vpack.c.b16 %v189, %v189
    %198 = vst [vmem:[%s3] sm:$0xf] %v190
    %199 = vst [vmem:[%s3 + $0x4] sm:$0xf] %v191
    %200 = vst [vmem:[%s3 + $0x8] sm:$0xf] %v192
    %201 = vst [vmem:[%s3 + $0xc] sm:$0xf] %v193
  $region21: #{_lambda_.22} parent=0 // pred_fallthru
    _
  // Predicated region
  $region22: #{_lambda_.22} parent=0 // pred_check
    _
  $region23: #{_lambda_.22} parent=0 // pred_check_branch
    %203 = sbr.rel (0) target = $region25
  $region24: #{_lambda_.22} parent=0 // pred_region
    _
  $region25: #{_lambda_.22} parent=0 // pred_fallthru
    _
  // Predicated region
  $region26: #{_lambda_.22} parent=0 // pred_check
    _
  $region27: #{_lambda_.22} parent=0 // pred_check_branch
    %205 = sbr.rel (0) target = $region29
  $region28: #{_lambda_.22} parent=0 // pred_region
    _
  $region29: #{_lambda_.22} parent=0 // pred_fallthru
    _

// kernel: _lambda_.23
$region0: #{_lambda_.23}
  #allocation0 [shape = 'u32[]', space=smem, size = 0x4, offset = 0x4, fixed_abs, tag = 'smem constant byte address 0x4 - core index']
  #allocation1 [shape = 'u32[144,128]{1,0:T(1,128)}', space=vmem, size = 0x12000, scoped, tag = 'internal scratch']
  #allocation2 [shape = 's32[1]{0}', space=sflag, size = 0x4, scoped, tag = 'scoped memory for _lambda_.23']
  #allocation3 [shape = 'u8[512]{0}', space=smem, size = 0x200, scoped, tag = 'prefetched SMEM operand 0']
  %s0 = inlined_call_operand.vmem [shape: s32[2], index: 0, kind: input, shape index: {}]
  %s1 = inlined_call_operand.vmem [shape: f32[16,128], index: 1, kind: input, shape index: {}]
  %s2 = inlined_call_operand.vmem [shape: bf16[2,16,128], index: 2, kind: input, shape index: {}]
  %s3 = inlined_call_operand.vmem [shape: f32[1,128], index: 3, kind: input, shape index: {}]
  %s4 = inlined_call_operand.vmem [shape: f32[1,128], index: 4, kind: input, shape index: {}]
  %s5 = inlined_call_operand.vmem [shape: bf16[2,16,128], index: 5, kind: output, shape index: {}]
  %s6 = sld [smem:[#allocation0]]
  $region49: #{_lambda_.23} parent=0
    _
  %s8 = ssub.s32 1, %s6
  %s9 = scalar_select 0, %s8, %s6
  %s10 = sshll.u32 %s0, 4
  %s11 = int_to_ptr.vmem [resolvable:$true] %s10
  %13 = dma.vmem_to_smem %s11, 16, [#allocation3], [#allocation2]
  %14 = dma.done [#allocation2], 16
  %15 = sfence
  loop: start=0, step=1, limit=4
  $region2: #{_lambda_.23} parent=0 // loop_pre_header
    _
  $region3: #{_lambda_.23} parent=0 // loop_header
    %s17 = sphi 0, %s21
    %p18 = scmp.ge.s32.totalorder %s17, 4
    %s25 = sphi 0, %s25
    %s27 = sphi 0, %s25
    %s28 = sphi 0, %s27
    %s42 = sphi 0, %s28
    %s50 = sphi 0, %s52
    %s53 = sphi 0, %s50
    %s54 = sphi 0, %s53
    %s70 = sphi 0, %s54
    %s74 = sphi 0, %s74
    %s76 = sphi 0, %s74
    %s77 = sphi 0, %s76
    %s91 = sphi 0, %s77
    %s95 = sphi 0, %s95
    %s97 = sphi 0, %s95
    %s98 = sphi 0, %s97
    %s112 = sphi 0, %s98
    %s118 = sphi 0, %s120
    %s121 = sphi 0, %s118
    %s122 = sphi 0, %s121
    %s138 = sphi 0, %s122
  $region4: #{_lambda_.23} parent=0 // loop_header_branch
    %20 = sbr.rel (%p18) target = $region8
  $region5: #{_lambda_.23} parent=0 // loop_body
    %s22 = ssub.s32 %s17, 1
    %s23 = ssub.s32 %s17, 2
    %s24 = sadd.s32 %s17, 1
    %s26 = sadd.s32 %s25, 1
    %p29 = scmp.eq.s32.totalorder %s17, 1
    %p30 = scmp.ne.s32.totalorder %s25, %s27
    %p31 = scmp.eq.s32.totalorder %s17, 0
    %p32 = por %p30, %p31
    %p33 = scmp.ne.s32.totalorder %s25, %s27
    %p34 = scmp.eq.s32.totalorder %s22, 1
    %p35 = por %p33, %p34
    %p36 = scmp.ne.s32.totalorder %s27, %s28
    %p37 = scmp.eq.s32.totalorder %s22, 0
    %p38 = por %p36, %p37
    %p39 = scmp.ne.s32.totalorder %s27, %s28
    %p40 = scmp.eq.s32.totalorder %s23, 1
    %p41 = por %p39, %p40
    %p43 = scmp.ne.s32.totalorder %s28, %s42
    %p44 = scmp.eq.s32.totalorder %s23, 0
    %p45 = por %p43, %p44
    %s46 = sld [smem:[#allocation3 + %s17]]
    %s47 = sld [smem:[#allocation3 + %s24]]
    %s48 = ssub.s32 %s46, %s47
    %p49 = scmp.eq.s32.totalorder %s48, 0
    %s51 = sadd.s32 %s50, 1
    %s52 = scalar_select %p49, %s50, %s51
    %p55 = pneg %p49
    %p56 = scmp.eq.s32.totalorder %s17, 1
    %p57 = por %p55, %p56
    %p58 = scmp.ne.s32.totalorder %s50, %s53
    %p59 = scmp.eq.s32.totalorder %s17, 0
    %p60 = por %p58, %p59
    %p61 = scmp.ne.s32.totalorder %s50, %s53
    %p62 = scmp.eq.s32.totalorder %s22, 1
    %p63 = por %p61, %p62
    %p64 = scmp.ne.s32.totalorder %s53, %s54
    %p65 = scmp.eq.s32.totalorder %s22, 0
    %p66 = por %p64, %p65
    %p67 = scmp.ne.s32.totalorder %s53, %s54
    %p68 = scmp.eq.s32.totalorder %s23, 1
    %p69 = por %p67, %p68
    %p71 = scmp.ne.s32.totalorder %s54, %s70
    %p72 = scmp.eq.s32.totalorder %s23, 0
    %p73 = por %p71, %p72
    %s75 = sadd.s32 %s74, 1
    %p78 = scmp.eq.s32.totalorder %s17, 1
    %p79 = scmp.ne.s32.totalorder %s74, %s76
    %p80 = scmp.eq.s32.totalorder %s17, 0
    %p81 = por %p79, %p80
    %p82 = scmp.ne.s32.totalorder %s74, %s76
    %p83 = scmp.eq.s32.totalorder %s22, 1
    %p84 = por %p82, %p83
    %p85 = scmp.ne.s32.totalorder %s76, %s77
    %p86 = scmp.eq.s32.totalorder %s22, 0
    %p87 = por %p85, %p86
    %p88 = scmp.ne.s32.totalorder %s76, %s77
    %p89 = scmp.eq.s32.totalorder %s23, 1
    %p90 = por %p88, %p89
    %p92 = scmp.ne.s32.totalorder %s77, %s91
    %p93 = scmp.eq.s32.totalorder %s23, 0
    %p94 = por %p92, %p93
    %s96 = sadd.s32 %s95, 1
    %p99 = scmp.eq.s32.totalorder %s17, 1
    %p100 = scmp.ne.s32.totalorder %s95, %s97
    %p101 = scmp.eq.s32.totalorder %s17, 0
    %p102 = por %p100, %p101
    %p103 = scmp.ne.s32.totalorder %s95, %s97
    %p104 = scmp.eq.s32.totalorder %s22, 1
    %p105 = por %p103, %p104
    %p106 = scmp.ne.s32.totalorder %s97, %s98
    %p107 = scmp.eq.s32.totalorder %s22, 0
    %p108 = por %p106, %p107
    %p109 = scmp.ne.s32.totalorder %s97, %s98
    %p110 = scmp.eq.s32.totalorder %s23, 1
    %p111 = por %p109, %p110
    %p113 = scmp.ne.s32.totalorder %s98, %s112
    %p114 = scmp.eq.s32.totalorder %s23, 0
    %p115 = por %p113, %p114
    %s116 = ssub.s32 %s17, %s24
    %p117 = scmp.eq.s32.totalorder %s116, 0
    %s119 = sadd.s32 %s118, 1
    %s120 = scalar_select %p117, %s118, %s119
    %p123 = pneg %p117
    %p124 = scmp.eq.s32.totalorder %s17, 1
    %p125 = por %p123, %p124
    %p126 = scmp.ne.s32.totalorder %s118, %s121
    %p127 = scmp.eq.s32.totalorder %s17, 0
    %p128 = por %p126, %p127
    %p129 = scmp.ne.s32.totalorder %s118, %s121
    %p130 = scmp.eq.s32.totalorder %s22, 1
    %p131 = por %p129, %p130
    %p132 = scmp.ne.s32.totalorder %s121, %s122
    %p133 = scmp.eq.s32.totalorder %s22, 0
    %p134 = por %p132, %p133
    %p135 = scmp.ne.s32.totalorder %s121, %s122
    %p136 = scmp.eq.s32.totalorder %s23, 1
    %p137 = por %p135, %p136
    %p139 = scmp.ne.s32.totalorder %s122, %s138
    %p140 = scmp.eq.s32.totalorder %s23, 0
    %p141 = por %p139, %p140
    %p142 = scmp.le.s32.totalorder 1, %s17
    %p143 = scmp.lt.s32.totalorder %s17, 3
    %p144 = pnand %p142, %p143
    %p145 = pneg %p144
    // Predicated region
    $region9: #{_lambda_.23} parent=5 // pred_check
      _
    $region10: #{_lambda_.23} parent=5 // pred_check_branch
      %147 = sbr.rel (%p144) target = $region12
    $region11: #{_lambda_.23} parent=5 // pred_region
      %s148 = ssub.s32 %s17, 1
      // Predicated region
      $region13: #{_lambda_.23} parent=11 // pred_check
        %p149 = pneg %p38
      $region14: #{_lambda_.23} parent=11 // pred_check_branch
        %151 = sbr.rel (%p149) target = $region16
      $region15: #{_lambda_.23} parent=11 // pred_region
        _
      $region16: #{_lambda_.23} parent=11 // pred_fallthru
        _
      // Predicated region
      $region17: #{_lambda_.23} parent=11 // pred_check
        %p152 = pneg %p87
      $region18: #{_lambda_.23} parent=11 // pred_check_branch
        %154 = sbr.rel (%p152) target = $region20
      $region19: #{_lambda_.23} parent=11 // pred_region
        _
      $region20: #{_lambda_.23} parent=11 // pred_fallthru
        _
      // Predicated region
      $region21: #{_lambda_.23} parent=11 // pred_check
        %p155 = pneg %p108
      $region22: #{_lambda_.23} parent=11 // pred_check_branch
        %157 = sbr.rel (%p155) target = $region24
      $region23: #{_lambda_.23} parent=11 // pred_region
        _
      $region24: #{_lambda_.23} parent=11 // pred_fallthru
        _
    $region12: #{_lambda_.23} parent=5 // pred_fallthru
      _
    %p158 = scmp.lt.s32.totalorder %s17, 2
    // Predicated region
    $region25: #{_lambda_.23} parent=5 // pred_check
      %p159 = pneg %p158
    $region26: #{_lambda_.23} parent=5 // pred_check_branch
      %161 = sbr.rel (%p159) target = $region28
    $region27: #{_lambda_.23} parent=5 // pred_region
      // Predicated region
      $region29: #{_lambda_.23} parent=27 // pred_check
        %p162 = pneg %p60
      $region30: #{_lambda_.23} parent=27 // pred_check_branch
        %164 = sbr.rel (%p162) target = $region32
      $region31: #{_lambda_.23} parent=27 // pred_region
        %s165 = sld [smem:[#allocation3 + %s17]]
        %p166 = scmp.lt.s32.totalorder %s165, 1
        %s167 = scalar_select %p166, %s165, 1
        %s168 = smul.addr %s167, 2
        %s169 = smul.addr %s168, 4
        %s170 = scalar_lea.vmem %s2, %s169
        %s171 = sld [smem:[#allocation3 + %s17]]
      $region32: #{_lambda_.23} parent=27 // pred_fallthru
        _
    $region28: #{_lambda_.23} parent=5 // pred_fallthru
      _
    %p172 = scmp.le.s32.totalorder 1, %s17
    %p173 = scmp.lt.s32.totalorder %s17, 3
    %p174 = pnand %p172, %p173
    %p175 = pneg %p174
    // Predicated region
    $region33: #{_lambda_.23} parent=5 // pred_check
      _
    $region34: #{_lambda_.23} parent=5 // pred_check_branch
      %177 = sbr.rel (%p174) target = $region36
    $region35: #{_lambda_.23} parent=5 // pred_region
      %s178 = ssub.s32 %s17, 1
      %p179 = pneg %p38
      %p180 = pneg %p35
      %s181 = sld [smem:[#allocation3 + %s22]]
      %p182 = scmp.lt.s32.totalorder %s181, 1
      %s183 = scalar_select %p182, %s181, 1
      %s184 = smul.addr %s183, 2
      %s185 = smul.addr %s184, 4
      %s186 = scalar_lea.vmem %s2, %s185
      %p187 = pneg %p66
      %p188 = pneg %p63
      %p189 = pneg %p87
      %p190 = pneg %p84
      %p191 = pneg %p108
      %p192 = pneg %p105
      %p193 = pneg %p134
      %p194 = pneg %p131
      %p195 = scmp.lt.s32.totalorder %s22, 1
      %s196 = scalar_select %p195, %s22, 1
      %s197 = smul.addr %s196, 2
      %s198 = smul.addr %s197, 4
      %s199 = scalar_lea.vmem %s5, %s198
      %s200 = sld [smem:[#allocation3 + %s22]]
      %p201 = scmp.lt.s32.totalorder %s200, 1
      %s202 = scalar_select %p201, %s200, 1
      %s203 = smul.addr %s202, 2
      %s204 = smul.addr %s203, 4
      %s205 = scalar_lea.vmem %s2, %s204
      %s206 = sld [smem:[#allocation3 + %s22]]
      %p207 = scmp.lt.s32.totalorder %s22, 1
      %s208 = scalar_select %p207, %s22, 1
      %s209 = smul.addr %s208, 2
      %s210 = smul.addr %s209, 4
      %s211 = scalar_lea.vmem %s5, %s210
      %v212 = vld [vmem:[%s1] sm:$0xff]
      %v213 = vld [vmem:[%s1 + $0x8] sm:$0xff]
      %v214 = vld [vmem:[%s3] sm:$0x1]
      %v216 = vlaneseq
      %v217 = vshrl.u32 %v216, 7
      %v218 = vsub.s32 0, %v217
      %v219 = vrot.slane %v214, %v218
      %v221 = vmul.f32 %v212, %v219
      %v222 = vmul.f32 %v213, %v219
      %v223 = vld [vmem:[%s4] sm:$0x1]
      %v225 = vlaneseq
      %v226 = vshrl.u32 %v225, 7
      %v227 = vsub.s32 0, %v226
      %v228 = vrot.slane %v223, %v227
      %v230 = vadd.f32 %v221, %v228
      %v231 = vadd.f32 %v222, %v228
      %v232 = vmax.f32 %v230, 0.0
      %v233 = vmax.f32 %v231, 0.0
      %v234 = vld [vmem:[%s205] sm:$0xf]
      %v235 = vld [vmem:[%s205 + $0x4] sm:$0xf]
      %v236 = vunpack.c.l.bf16 %v234
      %v237 = vunpack.c.l.bf16 %v235
      %v238 = vmul.f32 %v236, 0.2
      %v239 = vmul.f32 %v237, 0.2
      %v240 = vadd.f32 %v232, %v238
      %v241 = vadd.f32 %v233, %v239
      %v242 = vpack.c.bf16 %v241, %v240
      %v244 = vunpack.c.l.b16 %v242
      %v245 = vunpack.c.h.b16 %v242
      %v246 = vpack.c.b16 %v244, %v244
      %v247 = vpack.c.b16 %v245, %v245
      %250 = vst [vmem:[%s211] sm:$0xf] %v246
      %251 = vst [vmem:[%s211 + $0x4] sm:$0xf] %v247
      %p252 = scmp.lt.s32.totalorder %s22, 1
      %s253 = scalar_select %p252, %s22, 1
      %s254 = smul.addr %s253, 2
      %s255 = smul.addr %s254, 4
      %s256 = scalar_lea.vmem %s5, %s255
      // Predicated region
      $region37: #{_lambda_.23} parent=35 // pred_check
        %p257 = pneg %p131
      $region38: #{_lambda_.23} parent=35 // pred_check_branch
        %259 = sbr.rel (%p257) target = $region40
      $region39: #{_lambda_.23} parent=35 // pred_region
        _
      $region40: #{_lambda_.23} parent=35 // pred_fallthru
        _
    $region36: #{_lambda_.23} parent=5 // pred_fallthru
      _
    %p260 = scmp.le.s32.totalorder 2, %s17
    // Predicated region
    $region41: #{_lambda_.23} parent=5 // pred_check
      %p261 = pneg %p260
    $region42: #{_lambda_.23} parent=5 // pred_check_branch
      %263 = sbr.rel (%p261) target = $region44
    $region43: #{_lambda_.23} parent=5 // pred_region
      %s264 = ssub.s32 %s17, 2
      // Predicated region
      $region45: #{_lambda_.23} parent=43 // pred_check
        %p265 = pneg %p137
      $region46: #{_lambda_.23} parent=43 // pred_check_branch
        %267 = sbr.rel (%p265) target = $region48
      $region47: #{_lambda_.23} parent=43 // pred_region
        %p268 = scmp.lt.s32.totalorder %s23, 1
        %s269 = scalar_select %p268, %s23, 1
        %s270 = smul.addr %s269, 2
        %s271 = smul.addr %s270, 4
        %s272 = scalar_lea.vmem %s5, %s271
      $region48: #{_lambda_.23} parent=43 // pred_fallthru
        _
    $region44: #{_lambda_.23} parent=5 // pred_fallthru
      _
  $region6: #{_lambda_.23} parent=0 // loop_footer
    %s21 = sadd.s32 1, %s17
  $region7: #{_lambda_.23} parent=0 // loop_footer_branch
    %16 = sbr.rel target = $region3
  $region8: #{_lambda_.23} parent=0 // loop_exit
    _

// kernel: _lambda_.25
$region0: #{_lambda_.25}
  #allocation0 [shape = 'u32[]', space=smem, size = 0x4, offset = 0x4, fixed_abs, tag = 'smem constant byte address 0x4 - core index']
  #allocation1 [shape = 'u32[144,128]{1,0:T(1,128)}', space=vmem, size = 0x12000, scoped, tag = 'internal scratch']
  #allocation2 [shape = 'f32[1,128]{1,0:T(1,128)}', space=vmem, size = 0x200, scoped, tag = 'scratch operand']
  #allocation3 [shape = 'f32[1,128]{1,0:T(1,128)}', space=vmem, size = 0x200, scoped, tag = 'scratch operand']
  %s0 = inlined_call_operand.vmem [shape: bf16[32,128], index: 0, kind: input, shape index: {}]
  %s1 = inlined_call_operand.vmem [shape: f32[1,128], index: 1, kind: output, shape index: {0}]
  %s2 = inlined_call_operand.vmem [shape: f32[1,128], index: 2, kind: output, shape index: {1}]
  %3 = xla_tuple %s1, %s2
  %s4 = sld [smem:[#allocation0]]
  $region30: #{_lambda_.25} parent=0
    _
  %s6 = ssub.s32 1, %s4
  %s7 = scalar_select 0, %s6, %s4
  // Predicated region
  $region2: #{_lambda_.25} parent=0 // pred_check
    _
  $region3: #{_lambda_.25} parent=0 // pred_check_branch
    %9 = sbr.rel (0) target = $region5
  $region4: #{_lambda_.25} parent=0 // pred_region
    _
  $region5: #{_lambda_.25} parent=0 // pred_fallthru
    _
  %p10 = scmp.eq.s32.totalorder 0, 0
  // Predicated region
  $region6: #{_lambda_.25} parent=0 // pred_check
    %p11 = pneg %p10
  $region7: #{_lambda_.25} parent=0 // pred_check_branch
    %13 = sbr.rel (%p11) target = $region9
  $region8: #{_lambda_.25} parent=0 // pred_region
    %14 = vst [vmem:[#allocation2] sm:$0x1] 0.0
    %15 = vst [vmem:[#allocation3] sm:$0x1] 0.0
  $region9: #{_lambda_.25} parent=0 // pred_fallthru
    _
  %v16 = vld [vmem:[%s0] sm:$0xf]
  %v17 = vld [vmem:[%s0 + $0x4] sm:$0xf]
  %v18 = vld [vmem:[%s0 + $0x8] sm:$0xf]
  %v19 = vld [vmem:[%s0 + $0xc] sm:$0xf]
  %v20 = vunpack.c.l.bf16 %v16
  %v21 = vunpack.c.l.bf16 %v17
  %v22 = vunpack.c.l.bf16 %v18
  %v23 = vunpack.c.l.bf16 %v19
  %v24 = vlaneseq
  %v25 = vshrl.u32 %v24, 7
  %v26 = vadd.s32 %v25, 8
  %v27 = vadd.s32 %v25, 16
  %v28 = vadd.s32 %v25, 24
  %s29 = smul.u32 0, 32
  %v30 = vstv %s29
  %v31 = vadd.s32 %v25, %v30
  %v32 = vadd.s32 %v26, %v30
  %v33 = vadd.s32 %v27, %v30
  %v34 = vadd.s32 %v28, %v30
  %vm35 = vcmp.lt.s32.totalorder %v31, 32
  %vm36 = vcmp.lt.s32.totalorder %v32, 32
  %vm37 = vcmp.lt.s32.totalorder %v33, 32
  %vm38 = vcmp.lt.s32.totalorder %v34, 32
  %v39 = vsel %vm35, %v20, 0.0
  %v40 = vsel %vm36, %v21, 0.0
  %v41 = vsel %vm37, %v22, 0.0
  %v42 = vsel %vm38, %v23, 0.0
  %v43 = vld [vmem:[#allocation2] sm:$0x1]
  %v44 = vadd.f32 %v39, %v40
  %v45 = vadd.f32 %v44, %v41
  %v46 = vadd.f32 %v45, %v42
  %v47 = vrot.slane %v46, 4
  %v48 = vadd.f32 %v46, %v47
  %v49 = vrot.slane %v48, 2
  %v50 = vadd.f32 %v48, %v49
  %v51 = vrot.slane %v50, 1
  %v52 = vadd.f32 %v50, %v51
  %v53 = vadd.f32 %v43, %v52
  %54 = vst [vmem:[#allocation2] sm:$0x1] %v53
  %v55 = vld [vmem:[#allocation3] sm:$0x1]
  %v56 = vmul.f32 %v39, %v39
  %v57 = vmul.f32 %v40, %v40
  %v58 = vmul.f32 %v41, %v41
  %v59 = vmul.f32 %v42, %v42
  %v60 = vadd.f32 %v56, %v57
  %v61 = vadd.f32 %v60, %v58
  %v62 = vadd.f32 %v61, %v59
  %v63 = vrot.slane %v62, 4
  %v64 = vadd.f32 %v62, %v63
  %v65 = vrot.slane %v64, 2
  %v66 = vadd.f32 %v64, %v65
  %v67 = vrot.slane %v66, 1
  %v68 = vadd.f32 %v66, %v67
  %v69 = vadd.f32 %v55, %v68
  %70 = vst [vmem:[#allocation3] sm:$0x1] %v69
  // Predicated region
  $region10: #{_lambda_.25} parent=0 // pred_check
    %p71 = pneg %p10
  $region11: #{_lambda_.25} parent=0 // pred_check_branch
    %73 = sbr.rel (%p71) target = $region13
  $region12: #{_lambda_.25} parent=0 // pred_region
    %v74 = vld [vmem:[#allocation2] sm:$0x1]
    %75 = vst [vmem:[%s1] sm:$0x1] %v74
    %v76 = vld [vmem:[#allocation3] sm:$0x1]
    %77 = vst [vmem:[%s2] sm:$0x1] %v76
  $region13: #{_lambda_.25} parent=0 // pred_fallthru
    _
  // Predicated region
  $region14: #{_lambda_.25} parent=0 // pred_check
    _
  $region15: #{_lambda_.25} parent=0 // pred_check_branch
    %79 = sbr.rel (0) target = $region17
  $region16: #{_lambda_.25} parent=0 // pred_region
    _
  $region17: #{_lambda_.25} parent=0 // pred_fallthru
    _
  // Predicated region
  $region18: #{_lambda_.25} parent=0 // pred_check
    _
  $region19: #{_lambda_.25} parent=0 // pred_check_branch
    %81 = sbr.rel (0) target = $region21
  $region20: #{_lambda_.25} parent=0 // pred_region
    _
  $region21: #{_lambda_.25} parent=0 // pred_fallthru
    _
  // Predicated region
  $region22: #{_lambda_.25} parent=0 // pred_check
    _
  $region23: #{_lambda_.25} parent=0 // pred_check_branch
    %83 = sbr.rel (0) target = $region25
  $region24: #{_lambda_.25} parent=0 // pred_region
    _
  $region25: #{_lambda_.25} parent=0 // pred_fallthru
    _
  // Predicated region
  $region26: #{_lambda_.25} parent=0 // pred_check
    _
  $region27: #{_lambda_.25} parent=0 // pred_check_branch
    %85 = sbr.rel (0) target = $region29
  $region28: #{_lambda_.25} parent=0 // pred_region
    _
  $region29: #{_lambda_.25} parent=0 // pred_fallthru
    _

// kernel: _lambda_.28
$region0: #{_lambda_.28}
  #allocation0 [shape = 'u32[]', space=smem, size = 0x4, offset = 0x4, fixed_abs, tag = 'smem constant byte address 0x4 - core index']
  #allocation1 [shape = 'u32[144,128]{1,0:T(1,128)}', space=vmem, size = 0x12000, scoped, tag = 'internal scratch']
  #allocation2 [shape = 'f32[8,128]{1,0:T(8,128)}', space=vmem, size = 0x1000, scoped, tag = 'scratch operand']
  %s0 = inlined_call_operand.vmem [shape: bf16[8,128], index: 0, kind: input, shape index: {}]
  %s1 = inlined_call_operand.vmem [shape: bf16[128,128], index: 1, kind: input, shape index: {}]
  %s2 = inlined_call_operand.vmem [shape: f32[1,128], index: 2, kind: input, shape index: {}]
  %s3 = inlined_call_operand.vmem [shape: bf16[8,128], index: 3, kind: output, shape index: {}]
  %s4 = sld [smem:[#allocation0]]
  $region30: #{_lambda_.28} parent=0
    _
  %s6 = ssub.s32 1, %s4
  %s7 = scalar_select 0, %s6, %s4
  // Predicated region
  $region2: #{_lambda_.28} parent=0 // pred_check
    _
  $region3: #{_lambda_.28} parent=0 // pred_check_branch
    %9 = sbr.rel (0) target = $region5
  $region4: #{_lambda_.28} parent=0 // pred_region
    _
  $region5: #{_lambda_.28} parent=0 // pred_fallthru
    _
  // Predicated region
  $region6: #{_lambda_.28} parent=0 // pred_check
    _
  $region7: #{_lambda_.28} parent=0 // pred_check_branch
    %11 = sbr.rel (0) target = $region9
  $region8: #{_lambda_.28} parent=0 // pred_region
    _
  $region9: #{_lambda_.28} parent=0 // pred_fallthru
    _
  // Predicated region
  $region10: #{_lambda_.28} parent=0 // pred_check
    _
  $region11: #{_lambda_.28} parent=0 // pred_check_branch
    %13 = sbr.rel (0) target = $region13
  $region12: #{_lambda_.28} parent=0 // pred_region
    _
  $region13: #{_lambda_.28} parent=0 // pred_fallthru
    _
  %p15 = scmp.eq.s32.totalorder 0, 0
  // Predicated region
  $region14: #{_lambda_.28} parent=0 // pred_check
    %p16 = pneg %p15
  $region15: #{_lambda_.28} parent=0 // pred_check_branch
    %18 = sbr.rel (%p16) target = $region17
  $region16: #{_lambda_.28} parent=0 // pred_region
    %19 = vst [vmem:[#allocation2] sm:$0xff] 0.0
  $region17: #{_lambda_.28} parent=0 // pred_fallthru
    _
  %v20 = vld [vmem:[%s0] sm:$0xf]
  %v21 = vld [vmem:[#allocation2] sm:$0xff]
  %v22 = vld [vmem:[%s1] sm:$0xf]
  %v23 = vld [vmem:[%s1 + $0x4] sm:$0xf]
  %v24 = vld [vmem:[%s1 + $0x8] sm:$0xf]
  %v25 = vld [vmem:[%s1 + $0xc] sm:$0xf]
  %v26 = vld [vmem:[%s1 + $0x10] sm:$0xf]
  %v27 = vld [vmem:[%s1 + $0x14] sm:$0xf]
  %v28 = vld [vmem:[%s1 + $0x18] sm:$0xf]
  %v29 = vld [vmem:[%s1 + $0x1c] sm:$0xf]
  %v30 = vld [vmem:[%s1 + $0x20] sm:$0xf]
  %v31 = vld [vmem:[%s1 + $0x24] sm:$0xf]
  %v32 = vld [vmem:[%s1 + $0x28] sm:$0xf]
  %v33 = vld [vmem:[%s1 + $0x2c] sm:$0xf]
  %v34 = vld [vmem:[%s1 + $0x30] sm:$0xf]
  %v35 = vld [vmem:[%s1 + $0x34] sm:$0xf]
  %v36 = vld [vmem:[%s1 + $0x38] sm:$0xf]
  %v37 = vld [vmem:[%s1 + $0x3c] sm:$0xf]
  %v54 = vunpack.c.l.b16 %v22
  %v55 = vunpack.c.l.b16 %v23
  %v56 = vunpack.c.l.b16 %v24
  %v57 = vunpack.c.l.b16 %v25
  %v58 = vunpack.c.l.b16 %v26
  %v59 = vunpack.c.l.b16 %v27
  %v60 = vunpack.c.l.b16 %v28
  %v61 = vunpack.c.l.b16 %v29
  %v62 = vunpack.c.l.b16 %v30
  %v63 = vunpack.c.l.b16 %v31
  %v64 = vunpack.c.l.b16 %v32
  %v65 = vunpack.c.l.b16 %v33
  %v66 = vunpack.c.l.b16 %v34
  %v67 = vunpack.c.l.b16 %v35
  %v68 = vunpack.c.l.b16 %v36
  %v69 = vunpack.c.l.b16 %v37
  %v70 = vpack.c.b16 %v55, %v54
  %v71 = vpack.c.b16 %v57, %v56
  %v72 = vpack.c.b16 %v59, %v58
  %v73 = vpack.c.b16 %v61, %v60
  %v74 = vpack.c.b16 %v63, %v62
  %v75 = vpack.c.b16 %v65, %v64
  %v76 = vpack.c.b16 %v67, %v66
  %v77 = vpack.c.b16 %v69, %v68
  %86 = vmatprep.subr.bf16.mxu0 0
  %87 = vmatpush1.bf16.msra.mxu0 %v70
  %88 = vmatprep.subr.bf16.mxu0 0
  %89 = vmatpush1.bf16.msra.mxu0 %v71
  %90 = vmatprep.subr.bf16.mxu0 0
  %91 = vmatpush1.bf16.msra.mxu0 %v72
  %92 = vmatprep.subr.bf16.mxu0 0
  %93 = vmatpush1.bf16.msra.mxu0 %v73
  %94 = vmatprep.subr.bf16.mxu0 0
  %95 = vmatpush1.bf16.msra.mxu0 %v74
  %96 = vmatprep.subr.bf16.mxu0 0
  %97 = vmatpush1.bf16.msra.mxu0 %v75
  %98 = vmatprep.subr.bf16.mxu0 0
  %99 = vmatpush1.bf16.msra.mxu0 %v76
  %100 = vmatprep.subr.bf16.mxu0 0
  %101 = vmatpush1.bf16.msra.mxu0 %v77
  %102 = vmatprep.subr.bf16.mxu0 0
  %103 = vmatpush1.bf16.msra.mxu0 0
  %104 = vmatprep.subr.bf16.mxu0 0
  %105 = vmatpush1.bf16.msra.mxu0 0
  %106 = vmatprep.subr.bf16.mxu0 0
  %107 = vmatpush1.bf16.msra.mxu0 0
  %108 = vmatprep.subr.bf16.mxu0 0
  %109 = vmatpush1.bf16.msra.mxu0 0
  %110 = vmatprep.subr.bf16.mxu0 0
  %111 = vmatpush1.bf16.msra.mxu0 0
  %112 = vmatprep.subr.bf16.mxu0 0
  %113 = vmatpush1.bf16.msra.mxu0 0
  %114 = vmatprep.subr.bf16.mxu0 0
  %115 = vmatpush1.bf16.msra.mxu0 0
  %116 = vmatprep.subr.bf16.mxu0 0
  %117 = vmatpush1.bf16.msra.mxu0 0
  %118 = vmatprep.mubr.bf16.mxu0 0
  %119 = vmatmul.mubr.bf16.gmra.mrb[0].mxu0 %v20
  %v120 = vpop.f32.mrb[0].mxu0
  %v121 = vadd.f32 0.0, %v120
  %v122 = vpop.f32.mrb[0].mxu0
  %v123 = vpop.f32.mrb[0].mxu0
  %v124 = vpop.f32.mrb[0].mxu0
  %125 = vdwg.mxu0
  %v126 = vadd.f32 %v21, %v121
  %127 = vst [vmem:[#allocation2] sm:$0xff] %v126
  // Predicated region
  $region18: #{_lambda_.28} parent=0 // pred_check
    %p128 = pneg %p15
  $region19: #{_lambda_.28} parent=0 // pred_check_branch
    %130 = sbr.rel (%p128) target = $region21
  $region20: #{_lambda_.28} parent=0 // pred_region
    %v131 = vld [vmem:[#allocation2] sm:$0xff]
    %v132 = vld [vmem:[%s2] sm:$0x1]
    %v134 = vlaneseq
    %v135 = vshrl.u32 %v134, 7
    %v136 = vsub.s32 0, %v135
    %v137 = vrot.slane %v132, %v136
    %v139 = vadd.f32 %v131, %v137
    %v140 = vpack.c.bf16 %v139, %v139
    %141 = vst [vmem:[%s3] sm:$0xf] %v140
  $region21: #{_lambda_.28} parent=0 // pred_fallthru
    _
  // Predicated region
  $region22: #{_lambda_.28} parent=0 // pred_check
    _
  $region23: #{_lambda_.28} parent=0 // pred_check_branch
    %143 = sbr.rel (0) target = $region25
  $region24: #{_lambda_.28} parent=0 // pred_region
    _
  $region25: #{_lambda_.28} parent=0 // pred_fallthru
    _
  // Predicated region
  $region26: #{_lambda_.28} parent=0 // pred_check
    _
  $region27: #{_lambda_.28} parent=0 // pred_check_branch
    %145 = sbr.rel (0) target = $region29
  $region28: #{_lambda_.28} parent=0 // pred_region
    _
  $region29: #{_lambda_.28} parent=0 // pred_fallthru
    _

// kernel: _lambda_.31
$region0: #{_lambda_.31}
  #allocation0 [shape = 'u32[]', space=smem, size = 0x4, offset = 0x4, fixed_abs, tag = 'smem constant byte address 0x4 - core index']
  #allocation1 [shape = 'u32[144,128]{1,0:T(1,128)}', space=vmem, size = 0x12000, scoped, tag = 'internal scratch']
  %s0 = inlined_call_operand.vmem [shape: bf16[32,128], index: 0, kind: input, shape index: {}]
  %s1 = inlined_call_operand.vmem [shape: f32[1,128], index: 1, kind: input, shape index: {}]
  %s2 = inlined_call_operand.vmem [shape: f32[1,128], index: 2, kind: input, shape index: {}]
  %s3 = inlined_call_operand.vmem [shape: f32[32,128], index: 3, kind: output, shape index: {}]
  %s4 = sld [smem:[#allocation0]]
  $region22: #{_lambda_.31} parent=0
    _
  %s6 = ssub.s32 1, %s4
  %s7 = scalar_select 0, %s6, %s4
  // Predicated region
  $region2: #{_lambda_.31} parent=0 // pred_check
    _
  $region3: #{_lambda_.31} parent=0 // pred_check_branch
    %9 = sbr.rel (0) target = $region5
  $region4: #{_lambda_.31} parent=0 // pred_region
    _
  $region5: #{_lambda_.31} parent=0 // pred_fallthru
    _
  // Predicated region
  $region6: #{_lambda_.31} parent=0 // pred_check
    _
  $region7: #{_lambda_.31} parent=0 // pred_check_branch
    %11 = sbr.rel (0) target = $region9
  $region8: #{_lambda_.31} parent=0 // pred_region
    _
  $region9: #{_lambda_.31} parent=0 // pred_fallthru
    _
  // Predicated region
  $region10: #{_lambda_.31} parent=0 // pred_check
    _
  $region11: #{_lambda_.31} parent=0 // pred_check_branch
    %13 = sbr.rel (0) target = $region13
  $region12: #{_lambda_.31} parent=0 // pred_region
    _
  $region13: #{_lambda_.31} parent=0 // pred_fallthru
    _
  %v14 = vld [vmem:[%s0] sm:$0xf]
  %v15 = vld [vmem:[%s0 + $0x4] sm:$0xf]
  %v16 = vld [vmem:[%s0 + $0x8] sm:$0xf]
  %v17 = vld [vmem:[%s0 + $0xc] sm:$0xf]
  %v18 = vunpack.c.l.bf16 %v14
  %v19 = vunpack.c.l.bf16 %v15
  %v20 = vunpack.c.l.bf16 %v16
  %v21 = vunpack.c.l.bf16 %v17
  %v22 = vld [vmem:[%s1] sm:$0x1]
  %v24 = vlaneseq
  %v25 = vshrl.u32 %v24, 7
  %v26 = vsub.s32 0, %v25
  %v27 = vrot.slane %v22, %v26
  %v29 = vmul.f32 %v18, %v27
  %v30 = vmul.f32 %v19, %v27
  %v31 = vmul.f32 %v20, %v27
  %v32 = vmul.f32 %v21, %v27
  %v33 = vld [vmem:[%s2] sm:$0x1]
  %v35 = vlaneseq
  %v36 = vshrl.u32 %v35, 7
  %v37 = vsub.s32 0, %v36
  %v38 = vrot.slane %v33, %v37
  %v40 = vadd.f32 %v29, %v38
  %v41 = vadd.f32 %v30, %v38
  %v42 = vadd.f32 %v31, %v38
  %v43 = vadd.f32 %v32, %v38
  %44 = vst [vmem:[%s3] sm:$0xff] %v40
  %45 = vst [vmem:[%s3 + $0x8] sm:$0xff] %v41
  %46 = vst [vmem:[%s3 + $0x10] sm:$0xff] %v42
  %47 = vst [vmem:[%s3 + $0x18] sm:$0xff] %v43
  // Predicated region
  $region14: #{_lambda_.31} parent=0 // pred_check
    _
  $region15: #{_lambda_.31} parent=0 // pred_check_branch
    %49 = sbr.rel (0) target = $region17
  $region16: #{_lambda_.31} parent=0 // pred_region
    _
  $region17: #{_lambda_.31} parent=0 // pred_fallthru
    _
  // Predicated region
  $region18: #{_lambda_.31} parent=0 // pred_check
    _
  $region19: #{_lambda_.31} parent=0 // pred_check_branch
    %51 = sbr.rel (0) target = $region21
  $region20: #{_lambda_.31} parent=0 // pred_region
    _
  $region21: #{_lambda_.31} parent=0 // pred_fallthru
    _

// kernel: _lambda_.26
$region0: #{_lambda_.26}
  #allocation0 [shape = 'u32[]', space=smem, size = 0x4, offset = 0x4, fixed_abs, tag = 'smem constant byte address 0x4 - core index']
  #allocation1 [shape = 'u32[144,128]{1,0:T(1,128)}', space=vmem, size = 0x12000, scoped, tag = 'internal scratch']
  #allocation2 [shape = 'f32[32,128]{1,0:T(8,128)}', space=vmem, size = 0x4000, scoped, tag = 'scratch operand']
  %s0 = inlined_call_operand.vmem [shape: bf16[32,128], index: 0, kind: input, shape index: {}]
  %s1 = inlined_call_operand.vmem [shape: bf16[128,128], index: 1, kind: input, shape index: {}]
  %s2 = inlined_call_operand.vmem [shape: f32[1,128], index: 2, kind: input, shape index: {}]
  %s3 = inlined_call_operand.vmem [shape: f32[1,128], index: 3, kind: input, shape index: {}]
  %s4 = inlined_call_operand.vmem [shape: f32[1,128], index: 4, kind: input, shape index: {}]
  %s5 = inlined_call_operand.vmem [shape: bf16[32,128], index: 5, kind: output, shape index: {}]
  %s6 = sld [smem:[#allocation0]]
  $region38: #{_lambda_.26} parent=0
    _
  %s8 = ssub.s32 1, %s6
  %s9 = scalar_select 0, %s8, %s6
  // Predicated region
  $region2: #{_lambda_.26} parent=0 // pred_check
    _
  $region3: #{_lambda_.26} parent=0 // pred_check_branch
    %11 = sbr.rel (0) target = $region5
  $region4: #{_lambda_.26} parent=0 // pred_region
    _
  $region5: #{_lambda_.26} parent=0 // pred_fallthru
    _
  // Predicated region
  $region6: #{_lambda_.26} parent=0 // pred_check
    _
  $region7: #{_lambda_.26} parent=0 // pred_check_branch
    %13 = sbr.rel (0) target = $region9
  $region8: #{_lambda_.26} parent=0 // pred_region
    _
  $region9: #{_lambda_.26} parent=0 // pred_fallthru
    _
  // Predicated region
  $region10: #{_lambda_.26} parent=0 // pred_check
    _
  $region11: #{_lambda_.26} parent=0 // pred_check_branch
    %15 = sbr.rel (0) target = $region13
  $region12: #{_lambda_.26} parent=0 // pred_region
    _
  $region13: #{_lambda_.26} parent=0 // pred_fallthru
    _
  // Predicated region
  $region14: #{_lambda_.26} parent=0 // pred_check
    _
  $region15: #{_lambda_.26} parent=0 // pred_check_branch
    %17 = sbr.rel (0) target = $region17
  $region16: #{_lambda_.26} parent=0 // pred_region
    _
  $region17: #{_lambda_.26} parent=0 // pred_fallthru
    _
  // Predicated region
  $region18: #{_lambda_.26} parent=0 // pred_check
    _
  $region19: #{_lambda_.26} parent=0 // pred_check_branch
    %19 = sbr.rel (0) target = $region21
  $region20: #{_lambda_.26} parent=0 // pred_region
    _
  $region21: #{_lambda_.26} parent=0 // pred_fallthru
    _
  %p21 = scmp.eq.s32.totalorder 0, 0
  // Predicated region
  $region22: #{_lambda_.26} parent=0 // pred_check
    %p22 = pneg %p21
  $region23: #{_lambda_.26} parent=0 // pred_check_branch
    %24 = sbr.rel (%p22) target = $region25
  $region24: #{_lambda_.26} parent=0 // pred_region
    %25 = vst [vmem:[#allocation2] sm:$0xff] 0.0
    %26 = vst [vmem:[#allocation2 + $0x8] sm:$0xff] 0.0
    %27 = vst [vmem:[#allocation2 + $0x10] sm:$0xff] 0.0
    %28 = vst [vmem:[#allocation2 + $0x18] sm:$0xff] 0.0
  $region25: #{_lambda_.26} parent=0 // pred_fallthru
    _
  %v29 = vld [vmem:[%s0] sm:$0xf]
  %v30 = vld [vmem:[%s0 + $0x4] sm:$0xf]
  %v31 = vld [vmem:[%s0 + $0x8] sm:$0xf]
  %v32 = vld [vmem:[%s0 + $0xc] sm:$0xf]
  %v33 = vunpack.c.l.bf16 %v29
  %v34 = vunpack.c.l.bf16 %v30
  %v35 = vunpack.c.l.bf16 %v31
  %v36 = vunpack.c.l.bf16 %v32
  %v37 = vld [vmem:[%s3] sm:$0x1]
  %v39 = vlaneseq
  %v40 = vshrl.u32 %v39, 7
  %v41 = vsub.s32 0, %v40
  %v42 = vrot.slane %v37, %v41
  %v44 = vmul.f32 %v33, %v42
  %v45 = vmul.f32 %v34, %v42
  %v46 = vmul.f32 %v35, %v42
  %v47 = vmul.f32 %v36, %v42
  %v48 = vld [vmem:[%s4] sm:$0x1]
  %v50 = vlaneseq
  %v51 = vshrl.u32 %v50, 7
  %v52 = vsub.s32 0, %v51
  %v53 = vrot.slane %v48, %v52
  %v55 = vadd.f32 %v44, %v53
  %v56 = vadd.f32 %v45, %v53
  %v57 = vadd.f32 %v46, %v53
  %v58 = vadd.f32 %v47, %v53
  %v59 = vmax.f32 %v55, 0.0
  %v60 = vmax.f32 %v56, 0.0
  %v61 = vmax.f32 %v57, 0.0
  %v62 = vmax.f32 %v58, 0.0
  %v63 = vpack.c.bf16 %v60, %v59
  %v64 = vpack.c.bf16 %v62, %v61
  %v65 = vld [vmem:[#allocation2] sm:$0xff]
  %v66 = vld [vmem:[#allocation2 + $0x8] sm:$0xff]
  %v67 = vld [vmem:[#allocation2 + $0x10] sm:$0xff]
  %v68 = vld [vmem:[#allocation2 + $0x18] sm:$0xff]
  %v69 = vld [vmem:[%s1] sm:$0xf]
  %v70 = vld [vmem:[%s1 + $0x4] sm:$0xf]
  %v71 = vld [vmem:[%s1 + $0x8] sm:$0xf]
  %v72 = vld [vmem:[%s1 + $0xc] sm:$0xf]
  %v73 = vld [vmem:[%s1 + $0x10] sm:$0xf]
  %v74 = vld [vmem:[%s1 + $0x14] sm:$0xf]
  %v75 = vld [vmem:[%s1 + $0x18] sm:$0xf]
  %v76 = vld [vmem:[%s1 + $0x1c] sm:$0xf]
  %v77 = vld [vmem:[%s1 + $0x20] sm:$0xf]
  %v78 = vld [vmem:[%s1 + $0x24] sm:$0xf]
  %v79 = vld [vmem:[%s1 + $0x28] sm:$0xf]
  %v80 = vld [vmem:[%s1 + $0x2c] sm:$0xf]
  %v81 = vld [vmem:[%s1 + $0x30] sm:$0xf]
  %v82 = vld [vmem:[%s1 + $0x34] sm:$0xf]
  %v83 = vld [vmem:[%s1 + $0x38] sm:$0xf]
  %v84 = vld [vmem:[%s1 + $0x3c] sm:$0xf]
  %v101 = vunpack.c.l.b16 %v69
  %v102 = vunpack.c.l.b16 %v70
  %v103 = vunpack.c.l.b16 %v71
  %v104 = vunpack.c.l.b16 %v72
  %v105 = vunpack.c.l.b16 %v73
  %v106 = vunpack.c.l.b16 %v74
  %v107 = vunpack.c.l.b16 %v75
  %v108 = vunpack.c.l.b16 %v76
  %v109 = vunpack.c.l.b16 %v77
  %v110 = vunpack.c.l.b16 %v78
  %v111 = vunpack.c.l.b16 %v79
  %v112 = vunpack.c.l.b16 %v80
  %v113 = vunpack.c.l.b16 %v81
  %v114 = vunpack.c.l.b16 %v82
  %v115 = vunpack.c.l.b16 %v83
  %v116 = vunpack.c.l.b16 %v84
  %v117 = vpack.c.b16 %v102, %v101
  %v118 = vpack.c.b16 %v104, %v103
  %v119 = vpack.c.b16 %v106, %v105
  %v120 = vpack.c.b16 %v108, %v107
  %v121 = vpack.c.b16 %v110, %v109
  %v122 = vpack.c.b16 %v112, %v111
  %v123 = vpack.c.b16 %v114, %v113
  %v124 = vpack.c.b16 %v116, %v115
  %133 = vmatprep.subr.bf16.mxu0 0
  %134 = vmatpush1.bf16.msra.mxu0 %v117
  %135 = vmatprep.subr.bf16.mxu0 0
  %136 = vmatpush1.bf16.msra.mxu0 %v118
  %137 = vmatprep.subr.bf16.mxu0 0
  %138 = vmatpush1.bf16.msra.mxu0 %v119
  %139 = vmatprep.subr.bf16.mxu0 0
  %140 = vmatpush1.bf16.msra.mxu0 %v120
  %141 = vmatprep.subr.bf16.mxu0 0
  %142 = vmatpush1.bf16.msra.mxu0 %v121
  %143 = vmatprep.subr.bf16.mxu0 0
  %144 = vmatpush1.bf16.msra.mxu0 %v122
  %145 = vmatprep.subr.bf16.mxu0 0
  %146 = vmatpush1.bf16.msra.mxu0 %v123
  %147 = vmatprep.subr.bf16.mxu0 0
  %148 = vmatpush1.bf16.msra.mxu0 %v124
  %149 = vmatprep.subr.bf16.mxu0 0
  %150 = vmatpush1.bf16.msra.mxu0 0
  %151 = vmatprep.subr.bf16.mxu0 0
  %152 = vmatpush1.bf16.msra.mxu0 0
  %153 = vmatprep.subr.bf16.mxu0 0
  %154 = vmatpush1.bf16.msra.mxu0 0
  %155 = vmatprep.subr.bf16.mxu0 0
  %156 = vmatpush1.bf16.msra.mxu0 0
  %157 = vmatprep.subr.bf16.mxu0 0
  %158 = vmatpush1.bf16.msra.mxu0 0
  %159 = vmatprep.subr.bf16.mxu0 0
  %160 = vmatpush1.bf16.msra.mxu0 0
  %161 = vmatprep.subr.bf16.mxu0 0
  %162 = vmatpush1.bf16.msra.mxu0 0
  %163 = vmatprep.subr.bf16.mxu0 0
  %164 = vmatpush1.bf16.msra.mxu0 0
  %165 = vmatprep.mubr.bf16.mxu0 0
  %166 = vmatmul.mubr.bf16.gmra.mrb[0].mxu0 %v63
  %v167 = vpop.f32.mrb[0].mxu0
  %v168 = vadd.f32 0.0, %v167
  %v169 = vpop.f32.mrb[0].mxu0
  %v170 = vpop.f32.mrb[0].mxu0
  %v171 = vadd.f32 0.0, %v170
  %v172 = vpop.f32.mrb[0].mxu0
  %173 = vmatprep.mubr.bf16.mxu0 0
  %174 = vmatmul.mubr.bf16.gmra.mrb[0].mxu0 %v64
  %v175 = vpop.f32.mrb[0].mxu0
  %v176 = vadd.f32 0.0, %v175
  %v177 = vpop.f32.mrb[0].mxu0
  %v178 = vpop.f32.mrb[0].mxu0
  %v179 = vadd.f32 0.0, %v178
  %v180 = vpop.f32.mrb[0].mxu0
  %181 = vdwg.mxu0
  %v182 = vadd.f32 %v65, %v168
  %v183 = vadd.f32 %v66, %v171
  %v184 = vadd.f32 %v67, %v176
  %v185 = vadd.f32 %v68, %v179
  %186 = vst [vmem:[#allocation2] sm:$0xff] %v182
  %187 = vst [vmem:[#allocation2 + $0x8] sm:$0xff] %v183
  %188 = vst [vmem:[#allocation2 + $0x10] sm:$0xff] %v184
  %189 = vst [vmem:[#allocation2 + $0x18] sm:$0xff] %v185
  // Predicated region
  $region26: #{_lambda_.26} parent=0 // pred_check
    %p190 = pneg %p21
  $region27: #{_lambda_.26} parent=0 // pred_check_branch
    %192 = sbr.rel (%p190) target = $region29
  $region28: #{_lambda_.26} parent=0 // pred_region
    %v193 = vld [vmem:[#allocation2] sm:$0xff]
    %v194 = vld [vmem:[#allocation2 + $0x8] sm:$0xff]
    %v195 = vld [vmem:[#allocation2 + $0x10] sm:$0xff]
    %v196 = vld [vmem:[#allocation2 + $0x18] sm:$0xff]
    %v197 = vld [vmem:[%s2] sm:$0x1]
    %v199 = vlaneseq
    %v200 = vshrl.u32 %v199, 7
    %v201 = vsub.s32 0, %v200
    %v202 = vrot.slane %v197, %v201
    %v204 = vadd.f32 %v193, %v202
    %v205 = vadd.f32 %v194, %v202
    %v206 = vadd.f32 %v195, %v202
    %v207 = vadd.f32 %v196, %v202
    %v208 = vpack.c.bf16 %v205, %v204
    %v209 = vpack.c.bf16 %v207, %v206
    %v212 = vunpack.c.l.b16 %v208
    %v213 = vunpack.c.h.b16 %v208
    %v214 = vunpack.c.l.b16 %v209
    %v215 = vunpack.c.h.b16 %v209
    %v216 = vpack.c.b16 %v212, %v212
    %v217 = vpack.c.b16 %v213, %v213
    %v218 = vpack.c.b16 %v214, %v214
    %v219 = vpack.c.b16 %v215, %v215
    %224 = vst [vmem:[%s5] sm:$0xf] %v216
    %225 = vst [vmem:[%s5 + $0x4] sm:$0xf] %v217
    %226 = vst [vmem:[%s5 + $0x8] sm:$0xf] %v218
    %227 = vst [vmem:[%s5 + $0xc] sm:$0xf] %v219
  $region29: #{_lambda_.26} parent=0 // pred_fallthru
    _
  // Predicated region
  $region30: #{_lambda_.26} parent=0 // pred_check
    _
  $region31: #{_lambda_.26} parent=0 // pred_check_branch
    %229 = sbr.rel (0) target = $region33
  $region32: #{_lambda_.26} parent=0 // pred_region
    _
  $region33: #{_lambda_.26} parent=0 // pred_fallthru
    _
  // Predicated region
  $region34: #{_lambda_.26} parent=0 // pred_check
    _
  $region35: #{_lambda_.26} parent=0 // pred_check_branch
    %231 = sbr.rel (0) target = $region37
  $region36: #{_lambda_.26} parent=0 // pred_region
    _
  $region37: #{_lambda_.26} parent=0 // pred_fallthru
    _

// kernel: _lambda_.32
$region0: #{_lambda_.32}
  #allocation0 [shape = 'u32[]', space=smem, size = 0x4, offset = 0x4, fixed_abs, tag = 'smem constant byte address 0x4 - core index']
  #allocation1 [shape = 'u32[144,128]{1,0:T(1,128)}', space=vmem, size = 0x12000, scoped, tag = 'internal scratch']
  #allocation2 [shape = 'f32[1,128]{1,0:T(1,128)}', space=vmem, size = 0x200, scoped, tag = 'scratch operand']
  #allocation3 [shape = 'f32[1,128]{1,0:T(1,128)}', space=vmem, size = 0x200, scoped, tag = 'scratch operand']
  %s0 = inlined_call_operand.vmem [shape: f32[32,128], index: 0, kind: input, shape index: {}]
  %s1 = inlined_call_operand.vmem [shape: f32[1,128], index: 1, kind: output, shape index: {0}]
  %s2 = inlined_call_operand.vmem [shape: f32[1,128], index: 2, kind: output, shape index: {1}]
  %3 = xla_tuple %s1, %s2
  %s4 = sld [smem:[#allocation0]]
  $region30: #{_lambda_.32} parent=0
    _
  %s6 = ssub.s32 1, %s4
  %s7 = scalar_select 0, %s6, %s4
  // Predicated region
  $region2: #{_lambda_.32} parent=0 // pred_check
    _
  $region3: #{_lambda_.32} parent=0 // pred_check_branch
    %9 = sbr.rel (0) target = $region5
  $region4: #{_lambda_.32} parent=0 // pred_region
    _
  $region5: #{_lambda_.32} parent=0 // pred_fallthru
    _
  %p10 = scmp.eq.s32.totalorder 0, 0
  // Predicated region
  $region6: #{_lambda_.32} parent=0 // pred_check
    %p11 = pneg %p10
  $region7: #{_lambda_.32} parent=0 // pred_check_branch
    %13 = sbr.rel (%p11) target = $region9
  $region8: #{_lambda_.32} parent=0 // pred_region
    %14 = vst [vmem:[#allocation2] sm:$0x1] 0.0
    %15 = vst [vmem:[#allocation3] sm:$0x1] 0.0
  $region9: #{_lambda_.32} parent=0 // pred_fallthru
    _
  %v16 = vld [vmem:[%s0] sm:$0xff]
  %v17 = vld [vmem:[%s0 + $0x8] sm:$0xff]
  %v18 = vld [vmem:[%s0 + $0x10] sm:$0xff]
  %v19 = vld [vmem:[%s0 + $0x18] sm:$0xff]
  %v20 = vlaneseq
  %v21 = vshrl.u32 %v20, 7
  %v22 = vadd.s32 %v21, 8
  %v23 = vadd.s32 %v21, 16
  %v24 = vadd.s32 %v21, 24
  %s25 = smul.u32 0, 32
  %v26 = vstv %s25
  %v27 = vadd.s32 %v21, %v26
  %v28 = vadd.s32 %v22, %v26
  %v29 = vadd.s32 %v23, %v26
  %v30 = vadd.s32 %v24, %v26
  %vm31 = vcmp.lt.s32.totalorder %v27, 32
  %vm32 = vcmp.lt.s32.totalorder %v28, 32
  %vm33 = vcmp.lt.s32.totalorder %v29, 32
  %vm34 = vcmp.lt.s32.totalorder %v30, 32
  %v35 = vsel %vm31, %v16, 0.0
  %v36 = vsel %vm32, %v17, 0.0
  %v37 = vsel %vm33, %v18, 0.0
  %v38 = vsel %vm34, %v19, 0.0
  %v39 = vld [vmem:[#allocation2] sm:$0x1]
  %v40 = vadd.f32 %v35, %v36
  %v41 = vadd.f32 %v40, %v37
  %v42 = vadd.f32 %v41, %v38
  %v43 = vrot.slane %v42, 4
  %v44 = vadd.f32 %v42, %v43
  %v45 = vrot.slane %v44, 2
  %v46 = vadd.f32 %v44, %v45
  %v47 = vrot.slane %v46, 1
  %v48 = vadd.f32 %v46, %v47
  %v49 = vadd.f32 %v39, %v48
  %50 = vst [vmem:[#allocation2] sm:$0x1] %v49
  %v51 = vld [vmem:[#allocation3] sm:$0x1]
  %v52 = vmul.f32 %v35, %v35
  %v53 = vmul.f32 %v36, %v36
  %v54 = vmul.f32 %v37, %v37
  %v55 = vmul.f32 %v38, %v38
  %v56 = vadd.f32 %v52, %v53
  %v57 = vadd.f32 %v56, %v54
  %v58 = vadd.f32 %v57, %v55
  %v59 = vrot.slane %v58, 4
  %v60 = vadd.f32 %v58, %v59
  %v61 = vrot.slane %v60, 2
  %v62 = vadd.f32 %v60, %v61
  %v63 = vrot.slane %v62, 1
  %v64 = vadd.f32 %v62, %v63
  %v65 = vadd.f32 %v51, %v64
  %66 = vst [vmem:[#allocation3] sm:$0x1] %v65
  // Predicated region
  $region10: #{_lambda_.32} parent=0 // pred_check
    %p67 = pneg %p10
  $region11: #{_lambda_.32} parent=0 // pred_check_branch
    %69 = sbr.rel (%p67) target = $region13
  $region12: #{_lambda_.32} parent=0 // pred_region
    %v70 = vld [vmem:[#allocation2] sm:$0x1]
    %71 = vst [vmem:[%s1] sm:$0x1] %v70
    %v72 = vld [vmem:[#allocation3] sm:$0x1]
    %73 = vst [vmem:[%s2] sm:$0x1] %v72
  $region13: #{_lambda_.32} parent=0 // pred_fallthru
    _
  // Predicated region
  $region14: #{_lambda_.32} parent=0 // pred_check
    _
  $region15: #{_lambda_.32} parent=0 // pred_check_branch
    %75 = sbr.rel (0) target = $region17
  $region16: #{_lambda_.32} parent=0 // pred_region
    _
  $region17: #{_lambda_.32} parent=0 // pred_fallthru
    _
  // Predicated region
  $region18: #{_lambda_.32} parent=0 // pred_check
    _
  $region19: #{_lambda_.32} parent=0 // pred_check_branch
    %77 = sbr.rel (0) target = $region21
  $region20: #{_lambda_.32} parent=0 // pred_region
    _
  $region21: #{_lambda_.32} parent=0 // pred_fallthru
    _
  // Predicated region
  $region22: #{_lambda_.32} parent=0 // pred_check
    _
  $region23: #{_lambda_.32} parent=0 // pred_check_branch
    %79 = sbr.rel (0) target = $region25
  $region24: #{_lambda_.32} parent=0 // pred_region
    _
  $region25: #{_lambda_.32} parent=0 // pred_fallthru
    _
  // Predicated region
  $region26: #{_lambda_.32} parent=0 // pred_check
    _
  $region27: #{_lambda_.32} parent=0 // pred_check_branch
    %81 = sbr.rel (0) target = $region29
  $region28: #{_lambda_.32} parent=0 // pred_region
    _
  $region29: #{_lambda_.32} parent=0 // pred_fallthru
    _

// kernel: _lambda_.30
$region0: #{_lambda_.30}
  #allocation0 [shape = 'u32[]', space=smem, size = 0x4, offset = 0x4, fixed_abs, tag = 'smem constant byte address 0x4 - core index']
  #allocation1 [shape = 'u32[144,128]{1,0:T(1,128)}', space=vmem, size = 0x12000, scoped, tag = 'internal scratch']
  %s0 = inlined_call_operand.vmem [shape: bf16[8,128], index: 0, kind: input, shape index: {}]
  %s1 = inlined_call_operand.vmem [shape: bf16[128,128], index: 1, kind: input, shape index: {}]
  %s2 = inlined_call_operand.vmem [shape: f32[1,128], index: 2, kind: input, shape index: {}]
  %s3 = inlined_call_operand.vmem [shape: f32[1,128], index: 3, kind: input, shape index: {}]
  %s4 = inlined_call_operand.vmem [shape: f32[1,128], index: 4, kind: input, shape index: {}]
  %s5 = inlined_call_operand.vmem [shape: bf16[128,128], index: 5, kind: input, shape index: {}]
  %s6 = inlined_call_operand.vmem [shape: f32[1,128], index: 6, kind: input, shape index: {}]
  %s7 = inlined_call_operand.vmem [shape: f32[1,128], index: 7, kind: input, shape index: {}]
  %s8 = inlined_call_operand.vmem [shape: f32[1,128], index: 8, kind: input, shape index: {}]
  %s9 = inlined_call_operand.vmem [shape: f32[8,128], index: 9, kind: output, shape index: {}]
  %s10 = sld [smem:[#allocation0]]
  $region46: #{_lambda_.30} parent=0
    _
  %s12 = ssub.s32 1, %s10
  %s13 = scalar_select 0, %s12, %s10
  // Predicated region
  $region2: #{_lambda_.30} parent=0 // pred_check
    _
  $region3: #{_lambda_.30} parent=0 // pred_check_branch
    %15 = sbr.rel (0) target = $region5
  $region4: #{_lambda_.30} parent=0 // pred_region
    _
  $region5: #{_lambda_.30} parent=0 // pred_fallthru
    _
  // Predicated region
  $region6: #{_lambda_.30} parent=0 // pred_check
    _
  $region7: #{_lambda_.30} parent=0 // pred_check_branch
    %17 = sbr.rel (0) target = $region9
  $region8: #{_lambda_.30} parent=0 // pred_region
    _
  $region9: #{_lambda_.30} parent=0 // pred_fallthru
    _
  // Predicated region
  $region10: #{_lambda_.30} parent=0 // pred_check
    _
  $region11: #{_lambda_.30} parent=0 // pred_check_branch
    %19 = sbr.rel (0) target = $region13
  $region12: #{_lambda_.30} parent=0 // pred_region
    _
  $region13: #{_lambda_.30} parent=0 // pred_fallthru
    _
  // Predicated region
  $region14: #{_lambda_.30} parent=0 // pred_check
    _
  $region15: #{_lambda_.30} parent=0 // pred_check_branch
    %21 = sbr.rel (0) target = $region17
  $region16: #{_lambda_.30} parent=0 // pred_region
    _
  $region17: #{_lambda_.30} parent=0 // pred_fallthru
    _
  // Predicated region
  $region18: #{_lambda_.30} parent=0 // pred_check
    _
  $region19: #{_lambda_.30} parent=0 // pred_check_branch
    %23 = sbr.rel (0) target = $region21
  $region20: #{_lambda_.30} parent=0 // pred_region
    _
  $region21: #{_lambda_.30} parent=0 // pred_fallthru
    _
  // Predicated region
  $region22: #{_lambda_.30} parent=0 // pred_check
    _
  $region23: #{_lambda_.30} parent=0 // pred_check_branch
    %25 = sbr.rel (0) target = $region25
  $region24: #{_lambda_.30} parent=0 // pred_region
    _
  $region25: #{_lambda_.30} parent=0 // pred_fallthru
    _
  // Predicated region
  $region26: #{_lambda_.30} parent=0 // pred_check
    _
  $region27: #{_lambda_.30} parent=0 // pred_check_branch
    %27 = sbr.rel (0) target = $region29
  $region28: #{_lambda_.30} parent=0 // pred_region
    _
  $region29: #{_lambda_.30} parent=0 // pred_fallthru
    _
  // Predicated region
  $region30: #{_lambda_.30} parent=0 // pred_check
    _
  $region31: #{_lambda_.30} parent=0 // pred_check_branch
    %29 = sbr.rel (0) target = $region33
  $region32: #{_lambda_.30} parent=0 // pred_region
    _
  $region33: #{_lambda_.30} parent=0 // pred_fallthru
    _
  // Predicated region
  $region34: #{_lambda_.30} parent=0 // pred_check
    _
  $region35: #{_lambda_.30} parent=0 // pred_check_branch
    %31 = sbr.rel (0) target = $region37
  $region36: #{_lambda_.30} parent=0 // pred_region
    _
  $region37: #{_lambda_.30} parent=0 // pred_fallthru
    _
  %v33 = vld [vmem:[%s0] sm:$0xf]
  %v34 = vld [vmem:[%s1] sm:$0xf]
  %v35 = vld [vmem:[%s1 + $0x4] sm:$0xf]
  %v36 = vld [vmem:[%s1 + $0x8] sm:$0xf]
  %v37 = vld [vmem:[%s1 + $0xc] sm:$0xf]
  %v38 = vld [vmem:[%s1 + $0x10] sm:$0xf]
  %v39 = vld [vmem:[%s1 + $0x14] sm:$0xf]
  %v40 = vld [vmem:[%s1 + $0x18] sm:$0xf]
  %v41 = vld [vmem:[%s1 + $0x1c] sm:$0xf]
  %v42 = vld [vmem:[%s1 + $0x20] sm:$0xf]
  %v43 = vld [vmem:[%s1 + $0x24] sm:$0xf]
  %v44 = vld [vmem:[%s1 + $0x28] sm:$0xf]
  %v45 = vld [vmem:[%s1 + $0x2c] sm:$0xf]
  %v46 = vld [vmem:[%s1 + $0x30] sm:$0xf]
  %v47 = vld [vmem:[%s1 + $0x34] sm:$0xf]
  %v48 = vld [vmem:[%s1 + $0x38] sm:$0xf]
  %v49 = vld [vmem:[%s1 + $0x3c] sm:$0xf]
  %v50 = vld [vmem:[%s2] sm:$0x1]
  %v52 = vlaneseq
  %v53 = vshrl.u32 %v52, 7
  %v54 = vsub.s32 0, %v53
  %v55 = vrot.slane %v50, %v54
  %v73 = vunpack.c.l.b16 %v34
  %v74 = vunpack.c.l.b16 %v35
  %v75 = vunpack.c.l.b16 %v36
  %v76 = vunpack.c.l.b16 %v37
  %v77 = vunpack.c.l.b16 %v38
  %v78 = vunpack.c.l.b16 %v39
  %v79 = vunpack.c.l.b16 %v40
  %v80 = vunpack.c.l.b16 %v41
  %v81 = vunpack.c.l.b16 %v42
  %v82 = vunpack.c.l.b16 %v43
  %v83 = vunpack.c.l.b16 %v44
  %v84 = vunpack.c.l.b16 %v45
  %v85 = vunpack.c.l.b16 %v46
  %v86 = vunpack.c.l.b16 %v47
  %v87 = vunpack.c.l.b16 %v48
  %v88 = vunpack.c.l.b16 %v49
  %v89 = vpack.c.b16 %v74, %v73
  %v90 = vpack.c.b16 %v76, %v75
  %v91 = vpack.c.b16 %v78, %v77
  %v92 = vpack.c.b16 %v80, %v79
  %v93 = vpack.c.b16 %v82, %v81
  %v94 = vpack.c.b16 %v84, %v83
  %v95 = vpack.c.b16 %v86, %v85
  %v96 = vpack.c.b16 %v88, %v87
  %105 = vmatprep.subr.bf16.mxu0 0
  %106 = vmatpush1.bf16.msra.mxu0 %v89
  %107 = vmatprep.subr.bf16.mxu0 0
  %108 = vmatpush1.bf16.msra.mxu0 %v90
  %109 = vmatprep.subr.bf16.mxu0 0
  %110 = vmatpush1.bf16.msra.mxu0 %v91
  %111 = vmatprep.subr.bf16.mxu0 0
  %112 = vmatpush1.bf16.msra.mxu0 %v92
  %113 = vmatprep.subr.bf16.mxu0 0
  %114 = vmatpush1.bf16.msra.mxu0 %v93
  %115 = vmatprep.subr.bf16.mxu0 0
  %116 = vmatpush1.bf16.msra.mxu0 %v94
  %117 = vmatprep.subr.bf16.mxu0 0
  %118 = vmatpush1.bf16.msra.mxu0 %v95
  %119 = vmatprep.subr.bf16.mxu0 0
  %120 = vmatpush1.bf16.msra.mxu0 %v96
  %121 = vmatprep.subr.bf16.mxu0 0
  %122 = vmatpush1.bf16.msra.mxu0 0
  %123 = vmatprep.subr.bf16.mxu0 0
  %124 = vmatpush1.bf16.msra.mxu0 0
  %125 = vmatprep.subr.bf16.mxu0 0
  %126 = vmatpush1.bf16.msra.mxu0 0
  %127 = vmatprep.subr.bf16.mxu0 0
  %128 = vmatpush1.bf16.msra.mxu0 0
  %129 = vmatprep.subr.bf16.mxu0 0
  %130 = vmatpush1.bf16.msra.mxu0 0
  %131 = vmatprep.subr.bf16.mxu0 0
  %132 = vmatpush1.bf16.msra.mxu0 0
  %133 = vmatprep.subr.bf16.mxu0 0
  %134 = vmatpush1.bf16.msra.mxu0 0
  %135 = vmatprep.subr.bf16.mxu0 0
  %136 = vmatpush1.bf16.msra.mxu0 0
  %137 = vmatprep.mubr.bf16.mxu0 0
  %138 = vmatmul.mubr.bf16.gmra.mrb[0].mxu0 %v33
  %v139 = vpop.f32.mrb[0].mxu0
  %v140 = vadd.f32 %v55, %v139
  %v141 = vpop.f32.mrb[0].mxu0
  %v142 = vpop.f32.mrb[0].mxu0
  %v143 = vpop.f32.mrb[0].mxu0
  %144 = vdwg.mxu0
  %v145 = vlaneseq
  %v146 = vshrl.u32 %v145, 7
  %vm147 = vcmp.lt.s32.totalorder %v146, 2
  %v148 = vsel %vm147, 1, 0
  %v149 = vcvt.s32.f32 %v148
  %v150 = vmul.f32 %v140, %v149
  %v151 = vrot.slane %v150, 4
  %v152 = vadd.f32 %v150, %v151
  %v153 = vrot.slane %v152, 2
  %v154 = vadd.f32 %v152, %v153
  %v155 = vrot.slane %v154, 1
  %v156 = vadd.f32 %v154, %v155
  %v157 = vmul.f32 %v156, 0.5
  %v158 = vmul.f32 %v140, %v140
  %v159 = vmul.f32 %v158, %v149
  %v160 = vrot.slane %v159, 4
  %v161 = vadd.f32 %v159, %v160
  %v162 = vrot.slane %v161, 2
  %v163 = vadd.f32 %v161, %v162
  %v164 = vrot.slane %v163, 1
  %v165 = vadd.f32 %v163, %v164
  %v166 = vmul.f32 %v165, 0.5
  %v167 = vmul.f32 %v157, %v157
  %v168 = vsub.f32 %v166, %v167
  %v169 = vmax.f32 %v168, 0.0
  %v170 = vsub.f32 %v140, %v157
  %v171 = vadd.f32 %v169, 1e-05
  %v172 = vrsqrt.pop %v171
  %v173 = vmul.f32 %v170, %v172
  %v174 = vld [vmem:[%s3] sm:$0x1]
  %v176 = vlaneseq
  %v177 = vshrl.u32 %v176, 7
  %v178 = vsub.s32 0, %v177
  %v179 = vrot.slane %v174, %v178
  %v181 = vmul.f32 %v173, %v179
  %v182 = vld [vmem:[%s4] sm:$0x1]
  %v184 = vlaneseq
  %v185 = vshrl.u32 %v184, 7
  %v186 = vsub.s32 0, %v185
  %v187 = vrot.slane %v182, %v186
  %v189 = vadd.f32 %v181, %v187
  %v190 = vmax.f32 %v189, 0.0
  %v191 = vpack.c.bf16 %v190, %v190
  %v192 = vld [vmem:[%s5] sm:$0xf]
  %v193 = vld [vmem:[%s5 + $0x4] sm:$0xf]
  %v194 = vld [vmem:[%s5 + $0x8] sm:$0xf]
  %v195 = vld [vmem:[%s5 + $0xc] sm:$0xf]
  %v196 = vld [vmem:[%s5 + $0x10] sm:$0xf]
  %v197 = vld [vmem:[%s5 + $0x14] sm:$0xf]
  %v198 = vld [vmem:[%s5 + $0x18] sm:$0xf]
  %v199 = vld [vmem:[%s5 + $0x1c] sm:$0xf]
  %v200 = vld [vmem:[%s5 + $0x20] sm:$0xf]
  %v201 = vld [vmem:[%s5 + $0x24] sm:$0xf]
  %v202 = vld [vmem:[%s5 + $0x28] sm:$0xf]
  %v203 = vld [vmem:[%s5 + $0x2c] sm:$0xf]
  %v204 = vld [vmem:[%s5 + $0x30] sm:$0xf]
  %v205 = vld [vmem:[%s5 + $0x34] sm:$0xf]
  %v206 = vld [vmem:[%s5 + $0x38] sm:$0xf]
  %v207 = vld [vmem:[%s5 + $0x3c] sm:$0xf]
  %v208 = vld [vmem:[%s6] sm:$0x1]
  %v210 = vlaneseq
  %v211 = vshrl.u32 %v210, 7
  %v212 = vsub.s32 0, %v211
  %v213 = vrot.slane %v208, %v212
  %v231 = vunpack.c.l.b16 %v192
  %v232 = vunpack.c.l.b16 %v193
  %v233 = vunpack.c.l.b16 %v194
  %v234 = vunpack.c.l.b16 %v195
  %v235 = vunpack.c.l.b16 %v196
  %v236 = vunpack.c.l.b16 %v197
  %v237 = vunpack.c.l.b16 %v198
  %v238 = vunpack.c.l.b16 %v199
  %v239 = vunpack.c.l.b16 %v200
  %v240 = vunpack.c.l.b16 %v201
  %v241 = vunpack.c.l.b16 %v202
  %v242 = vunpack.c.l.b16 %v203
  %v243 = vunpack.c.l.b16 %v204
  %v244 = vunpack.c.l.b16 %v205
  %v245 = vunpack.c.l.b16 %v206
  %v246 = vunpack.c.l.b16 %v207
  %v247 = vpack.c.b16 %v232, %v231
  %v248 = vpack.c.b16 %v234, %v233
  %v249 = vpack.c.b16 %v236, %v235
  %v250 = vpack.c.b16 %v238, %v237
  %v251 = vpack.c.b16 %v240, %v239
  %v252 = vpack.c.b16 %v242, %v241
  %v253 = vpack.c.b16 %v244, %v243
  %v254 = vpack.c.b16 %v246, %v245
  %263 = vmatprep.subr.bf16.mxu0 0
  %264 = vmatpush1.bf16.msra.mxu0 %v247
  %265 = vmatprep.subr.bf16.mxu0 0
  %266 = vmatpush1.bf16.msra.mxu0 %v248
  %267 = vmatprep.subr.bf16.mxu0 0
  %268 = vmatpush1.bf16.msra.mxu0 %v249
  %269 = vmatprep.subr.bf16.mxu0 0
  %270 = vmatpush1.bf16.msra.mxu0 %v250
  %271 = vmatprep.subr.bf16.mxu0 0
  %272 = vmatpush1.bf16.msra.mxu0 %v251
  %273 = vmatprep.subr.bf16.mxu0 0
  %274 = vmatpush1.bf16.msra.mxu0 %v252
  %275 = vmatprep.subr.bf16.mxu0 0
  %276 = vmatpush1.bf16.msra.mxu0 %v253
  %277 = vmatprep.subr.bf16.mxu0 0
  %278 = vmatpush1.bf16.msra.mxu0 %v254
  %279 = vmatprep.subr.bf16.mxu0 0
  %280 = vmatpush1.bf16.msra.mxu0 0
  %281 = vmatprep.subr.bf16.mxu0 0
  %282 = vmatpush1.bf16.msra.mxu0 0
  %283 = vmatprep.subr.bf16.mxu0 0
  %284 = vmatpush1.bf16.msra.mxu0 0
  %285 = vmatprep.subr.bf16.mxu0 0
  %286 = vmatpush1.bf16.msra.mxu0 0
  %287 = vmatprep.subr.bf16.mxu0 0
  %288 = vmatpush1.bf16.msra.mxu0 0
  %289 = vmatprep.subr.bf16.mxu0 0
  %290 = vmatpush1.bf16.msra.mxu0 0
  %291 = vmatprep.subr.bf16.mxu0 0
  %292 = vmatpush1.bf16.msra.mxu0 0
  %293 = vmatprep.subr.bf16.mxu0 0
  %294 = vmatpush1.bf16.msra.mxu0 0
  %295 = vmatprep.mubr.bf16.mxu0 0
  %296 = vmatmul.mubr.bf16.gmra.mrb[0].mxu0 %v191
  %v297 = vpop.f32.mrb[0].mxu0
  %v298 = vadd.f32 %v213, %v297
  %v299 = vpop.f32.mrb[0].mxu0
  %v300 = vpop.f32.mrb[0].mxu0
  %v301 = vpop.f32.mrb[0].mxu0
  %302 = vdwg.mxu0
  %v303 = vmul.f32 %v298, %v149
  %v304 = vrot.slane %v303, 4
  %v305 = vadd.f32 %v303, %v304
  %v306 = vrot.slane %v305, 2
  %v307 = vadd.f32 %v305, %v306
  %v308 = vrot.slane %v307, 1
  %v309 = vadd.f32 %v307, %v308
  %v310 = vmul.f32 %v309, 0.5
  %v311 = vmul.f32 %v298, %v298
  %v312 = vmul.f32 %v311, %v149
  %v313 = vrot.slane %v312, 4
  %v314 = vadd.f32 %v312, %v313
  %v315 = vrot.slane %v314, 2
  %v316 = vadd.f32 %v314, %v315
  %v317 = vrot.slane %v316, 1
  %v318 = vadd.f32 %v316, %v317
  %v319 = vmul.f32 %v318, 0.5
  %v320 = vmul.f32 %v310, %v310
  %v321 = vsub.f32 %v319, %v320
  %v322 = vmax.f32 %v321, 0.0
  %v323 = vsub.f32 %v298, %v310
  %v324 = vadd.f32 %v322, 1e-05
  %v325 = vrsqrt.pop %v324
  %v326 = vmul.f32 %v323, %v325
  %v327 = vld [vmem:[%s7] sm:$0x1]
  %v329 = vlaneseq
  %v330 = vshrl.u32 %v329, 7
  %v331 = vsub.s32 0, %v330
  %v332 = vrot.slane %v327, %v331
  %v334 = vmul.f32 %v326, %v332
  %v335 = vld [vmem:[%s8] sm:$0x1]
  %v337 = vlaneseq
  %v338 = vshrl.u32 %v337, 7
  %v339 = vsub.s32 0, %v338
  %v340 = vrot.slane %v335, %v339
  %v342 = vadd.f32 %v334, %v340
  %343 = vst [vmem:[%s9] sm:$0xff] %v342
  // Predicated region
  $region38: #{_lambda_.30} parent=0 // pred_check
    _
  $region39: #{_lambda_.30} parent=0 // pred_check_branch
    %345 = sbr.rel (0) target = $region41
  $region40: #{_lambda_.30} parent=0 // pred_region
    _
  $region41: #{_lambda_.30} parent=0 // pred_fallthru
    _
  // Predicated region
  $region42: #{_lambda_.30} parent=0 // pred_check
    _
  $region43: #{_lambda_.30} parent=0 // pred_check_branch
    %347 = sbr.rel (0) target = $region45
  $region44: #{_lambda_.30} parent=0 // pred_region
    _
  $region45: #{_lambda_.30} parent=0 // pred_fallthru
    _

// kernel: _lambda_.37
$region0: #{_lambda_.37}
  #allocation0 [shape = 'u32[]', space=smem, size = 0x4, offset = 0x4, fixed_abs, tag = 'smem constant byte address 0x4 - core index']
  #allocation1 [shape = 'u32[144,128]{1,0:T(1,128)}', space=vmem, size = 0x12000, scoped, tag = 'internal scratch']
  %s0 = inlined_call_operand.vmem [shape: bf16[2,16,128], index: 0, kind: input, shape index: {}]
  %s1 = inlined_call_operand.vmem [shape: f32[16,128], index: 1, kind: input, shape index: {}]
  %s2 = inlined_call_operand.vmem [shape: f32[1,16], index: 2, kind: input, shape index: {}]
  %s3 = inlined_call_operand.vmem [shape: f32[2,1,16], index: 3, kind: output, shape index: {}]
  %s4 = sld [smem:[#allocation0]]
  $region45: #{_lambda_.37} parent=0
    _
  %s6 = ssub.s32 1, %s4
  %s7 = scalar_select 0, %s6, %s4
  loop: start=0, step=1, limit=4
  $region2: #{_lambda_.37} parent=0 // loop_pre_header
    _
  $region3: #{_lambda_.37} parent=0 // loop_header
    %s9 = sphi 0, %s13
    %p10 = scmp.ge.s32.totalorder %s9, 4
    %s19 = sphi 0, %s21
    %s22 = sphi 0, %s19
    %s23 = sphi 0, %s22
    %s39 = sphi 0, %s23
    %s43 = sphi 0, %s43
    %s45 = sphi 0, %s43
    %s46 = sphi 0, %s45
    %s60 = sphi 0, %s46
    %s64 = sphi 0, %s64
    %s66 = sphi 0, %s64
    %s67 = sphi 0, %s66
    %s81 = sphi 0, %s67
    %s87 = sphi 0, %s89
    %s90 = sphi 0, %s87
    %s91 = sphi 0, %s90
    %s107 = sphi 0, %s91
  $region4: #{_lambda_.37} parent=0 // loop_header_branch
    %12 = sbr.rel (%p10) target = $region8
  $region5: #{_lambda_.37} parent=0 // loop_body
    %s14 = ssub.s32 %s9, 1
    %s15 = ssub.s32 %s9, 2
    %s16 = sadd.s32 %s9, 1
    %s17 = ssub.s32 %s9, %s16
    %p18 = scmp.eq.s32.totalorder %s17, 0
    %s20 = sadd.s32 %s19, 1
    %s21 = scalar_select %p18, %s19, %s20
    %p24 = pneg %p18
    %p25 = scmp.eq.s32.totalorder %s9, 1
    %p26 = por %p24, %p25
    %p27 = scmp.ne.s32.totalorder %s19, %s22
    %p28 = scmp.eq.s32.totalorder %s9, 0
    %p29 = por %p27, %p28
    %p30 = scmp.ne.s32.totalorder %s19, %s22
    %p31 = scmp.eq.s32.totalorder %s14, 1
    %p32 = por %p30, %p31
    %p33 = scmp.ne.s32.totalorder %s22, %s23
    %p34 = scmp.eq.s32.totalorder %s14, 0
    %p35 = por %p33, %p34
    %p36 = scmp.ne.s32.totalorder %s22, %s23
    %p37 = scmp.eq.s32.totalorder %s15, 1
    %p38 = por %p36, %p37
    %p40 = scmp.ne.s32.totalorder %s23, %s39
    %p41 = scmp.eq.s32.totalorder %s15, 0
    %p42 = por %p40, %p41
    %s44 = sadd.s32 %s43, 1
    %p47 = scmp.eq.s32.totalorder %s9, 1
    %p48 = scmp.ne.s32.totalorder %s43, %s45
    %p49 = scmp.eq.s32.totalorder %s9, 0
    %p50 = por %p48, %p49
    %p51 = scmp.ne.s32.totalorder %s43, %s45
    %p52 = scmp.eq.s32.totalorder %s14, 1
    %p53 = por %p51, %p52
    %p54 = scmp.ne.s32.totalorder %s45, %s46
    %p55 = scmp.eq.s32.totalorder %s14, 0
    %p56 = por %p54, %p55
    %p57 = scmp.ne.s32.totalorder %s45, %s46
    %p58 = scmp.eq.s32.totalorder %s15, 1
    %p59 = por %p57, %p58
    %p61 = scmp.ne.s32.totalorder %s46, %s60
    %p62 = scmp.eq.s32.totalorder %s15, 0
    %p63 = por %p61, %p62
    %s65 = sadd.s32 %s64, 1
    %p68 = scmp.eq.s32.totalorder %s9, 1
    %p69 = scmp.ne.s32.totalorder %s64, %s66
    %p70 = scmp.eq.s32.totalorder %s9, 0
    %p71 = por %p69, %p70
    %p72 = scmp.ne.s32.totalorder %s64, %s66
    %p73 = scmp.eq.s32.totalorder %s14, 1
    %p74 = por %p72, %p73
    %p75 = scmp.ne.s32.totalorder %s66, %s67
    %p76 = scmp.eq.s32.totalorder %s14, 0
    %p77 = por %p75, %p76
    %p78 = scmp.ne.s32.totalorder %s66, %s67
    %p79 = scmp.eq.s32.totalorder %s15, 1
    %p80 = por %p78, %p79
    %p82 = scmp.ne.s32.totalorder %s67, %s81
    %p83 = scmp.eq.s32.totalorder %s15, 0
    %p84 = por %p82, %p83
    %s85 = ssub.s32 %s9, %s16
    %p86 = scmp.eq.s32.totalorder %s85, 0
    %s88 = sadd.s32 %s87, 1
    %s89 = scalar_select %p86, %s87, %s88
    %p92 = pneg %p86
    %p93 = scmp.eq.s32.totalorder %s9, 1
    %p94 = por %p92, %p93
    %p95 = scmp.ne.s32.totalorder %s87, %s90
    %p96 = scmp.eq.s32.totalorder %s9, 0
    %p97 = por %p95, %p96
    %p98 = scmp.ne.s32.totalorder %s87, %s90
    %p99 = scmp.eq.s32.totalorder %s14, 1
    %p100 = por %p98, %p99
    %p101 = scmp.ne.s32.totalorder %s90, %s91
    %p102 = scmp.eq.s32.totalorder %s14, 0
    %p103 = por %p101, %p102
    %p104 = scmp.ne.s32.totalorder %s90, %s91
    %p105 = scmp.eq.s32.totalorder %s15, 1
    %p106 = por %p104, %p105
    %p108 = scmp.ne.s32.totalorder %s91, %s107
    %p109 = scmp.eq.s32.totalorder %s15, 0
    %p110 = por %p108, %p109
    %p111 = scmp.le.s32.totalorder 1, %s9
    %p112 = scmp.lt.s32.totalorder %s9, 3
    %p113 = pnand %p111, %p112
    %p114 = pneg %p113
    // Predicated region
    $region9: #{_lambda_.37} parent=5 // pred_check
      _
    $region10: #{_lambda_.37} parent=5 // pred_check_branch
      %116 = sbr.rel (%p113) target = $region12
    $region11: #{_lambda_.37} parent=5 // pred_region
      %s117 = ssub.s32 %s9, 1
      // Predicated region
      $region13: #{_lambda_.37} parent=11 // pred_check
        %p118 = pneg %p56
      $region14: #{_lambda_.37} parent=11 // pred_check_branch
        %120 = sbr.rel (%p118) target = $region16
      $region15: #{_lambda_.37} parent=11 // pred_region
        _
      $region16: #{_lambda_.37} parent=11 // pred_fallthru
        _
      // Predicated region
      $region17: #{_lambda_.37} parent=11 // pred_check
        %p121 = pneg %p77
      $region18: #{_lambda_.37} parent=11 // pred_check_branch
        %123 = sbr.rel (%p121) target = $region20
      $region19: #{_lambda_.37} parent=11 // pred_region
        _
      $region20: #{_lambda_.37} parent=11 // pred_fallthru
        _
    $region12: #{_lambda_.37} parent=5 // pred_fallthru
      _
    %p124 = scmp.lt.s32.totalorder %s9, 2
    // Predicated region
    $region21: #{_lambda_.37} parent=5 // pred_check
      %p125 = pneg %p124
    $region22: #{_lambda_.37} parent=5 // pred_check_branch
      %127 = sbr.rel (%p125) target = $region24
    $region23: #{_lambda_.37} parent=5 // pred_region
      // Predicated region
      $region25: #{_lambda_.37} parent=23 // pred_check
        %p128 = pneg %p29
      $region26: #{_lambda_.37} parent=23 // pred_check_branch
        %130 = sbr.rel (%p128) target = $region28
      $region27: #{_lambda_.37} parent=23 // pred_region
        %p131 = scmp.lt.s32.totalorder %s9, 1
        %s132 = scalar_select %p131, %s9, 1
        %s133 = smul.addr %s132, 2
        %s134 = smul.addr %s133, 4
        %s135 = scalar_lea.vmem %s0, %s134
      $region28: #{_lambda_.37} parent=23 // pred_fallthru
        _
    $region24: #{_lambda_.37} parent=5 // pred_fallthru
      _
    %p136 = scmp.le.s32.totalorder 1, %s9
    %p137 = scmp.lt.s32.totalorder %s9, 3
    %p138 = pnand %p136, %p137
    %p139 = pneg %p138
    // Predicated region
    $region29: #{_lambda_.37} parent=5 // pred_check
      _
    $region30: #{_lambda_.37} parent=5 // pred_check_branch
      %141 = sbr.rel (%p138) target = $region32
    $region31: #{_lambda_.37} parent=5 // pred_region
      %s142 = ssub.s32 %s9, 1
      %p143 = scmp.lt.s32.totalorder %s14, 1
      %s144 = scalar_select %p143, %s14, 1
      %s145 = smul.addr %s144, 2
      %s146 = smul.addr %s145, 4
      %s147 = scalar_lea.vmem %s0, %s146
      %p148 = pneg %p35
      %p149 = pneg %p32
      %p150 = pneg %p56
      %p151 = pneg %p53
      %p152 = pneg %p77
      %p153 = pneg %p74
      %p154 = pneg %p103
      %p155 = pneg %p100
      %p156 = scmp.lt.s32.totalorder %s14, 1
      %s157 = scalar_select %p156, %s14, 1
      %s158 = scalar_lea.vmem %s3, %s157
      %p159 = scmp.lt.s32.totalorder %s14, 1
      %s160 = scalar_select %p159, %s14, 1
      %s161 = smul.addr %s160, 2
      %s162 = smul.addr %s161, 4
      %s163 = scalar_lea.vmem %s0, %s162
      %p164 = scmp.lt.s32.totalorder %s14, 1
      %s165 = scalar_select %p164, %s14, 1
      %s166 = scalar_lea.vmem %s3, %s165
      %v167 = vld [vmem:[%s163] sm:$0xf]
      %v168 = vld [vmem:[%s163 + $0x4] sm:$0xf]
      %v169 = vunpack.c.l.bf16 %v167
      %v170 = vunpack.c.l.bf16 %v168
      %v171 = vld [vmem:[%s1] sm:$0xff]
      %v172 = vld [vmem:[%s1 + $0x8] sm:$0xff]
      %v173 = vmul.f32 %v169, %v171
      %v174 = vmul.f32 %v170, %v172
      %175 = vadd.xlane.f32.xlu0 %v173
      %v176 = vpop.xlane.xlu0 %175
      %177 = vadd.xlane.f32.xlu0 %v174
      %v178 = vpop.xlane.xlu0 %177
      %v179 = vld [vmem:[%s2] sm:$0x1]
      %v181 = vlaneseq
      %v182 = vshrl.u32 %v181, 7
      %v183 = vsub.s32 0, %v182
      %v184 = vrot.slane %v179, %v183
      %186 = vbcast.lane.b32.xlu0 %v184, 256
      %v187 = vpop.permute.xlu0 %186
      %s189 = sor.u32 256, 8
      %190 = vbcast.lane.b32.xlu0 %v184, %s189
      %v191 = vpop.permute.xlu0 %190
      %v194 = vadd.f32 %v176, %v187
      %v195 = vadd.f32 %v178, %v191
      %198 = vset.pattern.permute.xlu0 0
      %199 = vperm.xlu0 %198, %v194
      %v200 = vpop.permute.xlu0 %199
      %201 = vset.pattern.permute.xlu0 0
      %202 = vperm.xlu0 %201, %v195
      %v203 = vpop.permute.xlu0 %202
      %v204 = vlaneseq
      %v205 = vand.u32 %v204, 127
      %v206 = vlaneseq
      %v207 = vshrl.u32 %v206, 7
      %v208 = vsub.s32 %v205, %v207
      %v209 = vrot.slane %v200, %v208
      %v210 = vadd.s32 %v205, 4294967288
      %v211 = vlaneseq
      %v212 = vshrl.u32 %v211, 7
      %v213 = vsub.s32 %v210, %v212
      %v214 = vrot.slane %v203, %v213
      %vm215 = vcmask 130112
      %v216 = vsel %vm215, %v214, %v209
      %vm218 = vcmask 122880
      %219 = vst.msk [vmem:[%s166] sm:$0x1] %vm218, %v216
      %p220 = scmp.lt.s32.totalorder %s14, 1
      %s221 = scalar_select %p220, %s14, 1
      %s222 = scalar_lea.vmem %s3, %s221
      // Predicated region
      $region33: #{_lambda_.37} parent=31 // pred_check
        %p223 = pneg %p100
      $region34: #{_lambda_.37} parent=31 // pred_check_branch
        %225 = sbr.rel (%p223) target = $region36
      $region35: #{_lambda_.37} parent=31 // pred_region
        _
      $region36: #{_lambda_.37} parent=31 // pred_fallthru
        _
    $region32: #{_lambda_.37} parent=5 // pred_fallthru
      _
    %p226 = scmp.le.s32.totalorder 2, %s9
    // Predicated region
    $region37: #{_lambda_.37} parent=5 // pred_check
      %p227 = pneg %p226
    $region38: #{_lambda_.37} parent=5 // pred_check_branch
      %229 = sbr.rel (%p227) target = $region40
    $region39: #{_lambda_.37} parent=5 // pred_region
      %s230 = ssub.s32 %s9, 2
      // Predicated region
      $region41: #{_lambda_.37} parent=39 // pred_check
        %p231 = pneg %p106
      $region42: #{_lambda_.37} parent=39 // pred_check_branch
        %233 = sbr.rel (%p231) target = $region44
      $region43: #{_lambda_.37} parent=39 // pred_region
        %p234 = scmp.lt.s32.totalorder %s15, 1
        %s235 = scalar_select %p234, %s15, 1
        %s236 = scalar_lea.vmem %s3, %s235
      $region44: #{_lambda_.37} parent=39 // pred_fallthru
        _
    $region40: #{_lambda_.37} parent=5 // pred_fallthru
      _
  $region6: #{_lambda_.37} parent=0 // loop_footer
    %s13 = sadd.s32 1, %s9
  $region7: #{_lambda_.37} parent=0 // loop_footer_branch
    %8 = sbr.rel target = $region3
  $region8: #{_lambda_.37} parent=0 // loop_exit
    _

// kernel: _lambda_.39
$region0: #{_lambda_.39}
  #allocation0 [shape = 'u32[]', space=smem, size = 0x4, offset = 0x4, fixed_abs, tag = 'smem constant byte address 0x4 - core index']
  #allocation1 [shape = 'u32[144,128]{1,0:T(1,128)}', space=vmem, size = 0x12000, scoped, tag = 'internal scratch']
  %s0 = inlined_call_operand.vmem [shape: f32[8,128], index: 0, kind: input, shape index: {}]
  %s1 = inlined_call_operand.vmem [shape: bf16[8,128], index: 1, kind: input, shape index: {}]
  %s2 = inlined_call_operand.vmem [shape: f32[1,128], index: 2, kind: input, shape index: {}]
  %s3 = inlined_call_operand.vmem [shape: bf16[128,128], index: 3, kind: input, shape index: {}]
  %s4 = inlined_call_operand.vmem [shape: f32[1,128], index: 4, kind: input, shape index: {}]
  %s5 = inlined_call_operand.vmem [shape: f32[8,128], index: 5, kind: input, shape index: {}]
  %s6 = inlined_call_operand.vmem [shape: f32[8,128], index: 6, kind: output, shape index: {}]
  %s7 = sld [smem:[#allocation0]]
  $region34: #{_lambda_.39} parent=0
    _
  %s9 = ssub.s32 1, %s7
  %s10 = scalar_select 0, %s9, %s7
  // Predicated region
  $region2: #{_lambda_.39} parent=0 // pred_check
    _
  $region3: #{_lambda_.39} parent=0 // pred_check_branch
    %12 = sbr.rel (0) target = $region5
  $region4: #{_lambda_.39} parent=0 // pred_region
    _
  $region5: #{_lambda_.39} parent=0 // pred_fallthru
    _
  // Predicated region
  $region6: #{_lambda_.39} parent=0 // pred_check
    _
  $region7: #{_lambda_.39} parent=0 // pred_check_branch
    %14 = sbr.rel (0) target = $region9
  $region8: #{_lambda_.39} parent=0 // pred_region
    _
  $region9: #{_lambda_.39} parent=0 // pred_fallthru
    _
  // Predicated region
  $region10: #{_lambda_.39} parent=0 // pred_check
    _
  $region11: #{_lambda_.39} parent=0 // pred_check_branch
    %16 = sbr.rel (0) target = $region13
  $region12: #{_lambda_.39} parent=0 // pred_region
    _
  $region13: #{_lambda_.39} parent=0 // pred_fallthru
    _
  // Predicated region
  $region14: #{_lambda_.39} parent=0 // pred_check
    _
  $region15: #{_lambda_.39} parent=0 // pred_check_branch
    %18 = sbr.rel (0) target = $region17
  $region16: #{_lambda_.39} parent=0 // pred_region
    _
  $region17: #{_lambda_.39} parent=0 // pred_fallthru
    _
  // Predicated region
  $region18: #{_lambda_.39} parent=0 // pred_check
    _
  $region19: #{_lambda_.39} parent=0 // pred_check_branch
    %20 = sbr.rel (0) target = $region21
  $region20: #{_lambda_.39} parent=0 // pred_region
    _
  $region21: #{_lambda_.39} parent=0 // pred_fallthru
    _
  // Predicated region
  $region22: #{_lambda_.39} parent=0 // pred_check
    _
  $region23: #{_lambda_.39} parent=0 // pred_check_branch
    %22 = sbr.rel (0) target = $region25
  $region24: #{_lambda_.39} parent=0 // pred_region
    _
  $region25: #{_lambda_.39} parent=0 // pred_fallthru
    _
  %v24 = vld [vmem:[%s1] sm:$0xf]
  %v25 = vld [vmem:[%s3] sm:$0xf]
  %v26 = vld [vmem:[%s3 + $0x4] sm:$0xf]
  %v27 = vld [vmem:[%s3 + $0x8] sm:$0xf]
  %v28 = vld [vmem:[%s3 + $0xc] sm:$0xf]
  %v29 = vld [vmem:[%s3 + $0x10] sm:$0xf]
  %v30 = vld [vmem:[%s3 + $0x14] sm:$0xf]
  %v31 = vld [vmem:[%s3 + $0x18] sm:$0xf]
  %v32 = vld [vmem:[%s3 + $0x1c] sm:$0xf]
  %v33 = vld [vmem:[%s3 + $0x20] sm:$0xf]
  %v34 = vld [vmem:[%s3 + $0x24] sm:$0xf]
  %v35 = vld [vmem:[%s3 + $0x28] sm:$0xf]
  %v36 = vld [vmem:[%s3 + $0x2c] sm:$0xf]
  %v37 = vld [vmem:[%s3 + $0x30] sm:$0xf]
  %v38 = vld [vmem:[%s3 + $0x34] sm:$0xf]
  %v39 = vld [vmem:[%s3 + $0x38] sm:$0xf]
  %v40 = vld [vmem:[%s3 + $0x3c] sm:$0xf]
  %v57 = vunpack.c.l.b16 %v25
  %v58 = vunpack.c.l.b16 %v26
  %v59 = vunpack.c.l.b16 %v27
  %v60 = vunpack.c.l.b16 %v28
  %v61 = vunpack.c.l.b16 %v29
  %v62 = vunpack.c.l.b16 %v30
  %v63 = vunpack.c.l.b16 %v31
  %v64 = vunpack.c.l.b16 %v32
  %v65 = vunpack.c.l.b16 %v33
  %v66 = vunpack.c.l.b16 %v34
  %v67 = vunpack.c.l.b16 %v35
  %v68 = vunpack.c.l.b16 %v36
  %v69 = vunpack.c.l.b16 %v37
  %v70 = vunpack.c.l.b16 %v38
  %v71 = vunpack.c.l.b16 %v39
  %v72 = vunpack.c.l.b16 %v40
  %v73 = vpack.c.b16 %v58, %v57
  %v74 = vpack.c.b16 %v60, %v59
  %v75 = vpack.c.b16 %v62, %v61
  %v76 = vpack.c.b16 %v64, %v63
  %v77 = vpack.c.b16 %v66, %v65
  %v78 = vpack.c.b16 %v68, %v67
  %v79 = vpack.c.b16 %v70, %v69
  %v80 = vpack.c.b16 %v72, %v71
  %89 = vmatprep.subr.bf16.mxu0 0
  %90 = vmatpush1.bf16.msra.mxu0 %v73
  %91 = vmatprep.subr.bf16.mxu0 0
  %92 = vmatpush1.bf16.msra.mxu0 %v74
  %93 = vmatprep.subr.bf16.mxu0 0
  %94 = vmatpush1.bf16.msra.mxu0 %v75
  %95 = vmatprep.subr.bf16.mxu0 0
  %96 = vmatpush1.bf16.msra.mxu0 %v76
  %97 = vmatprep.subr.bf16.mxu0 0
  %98 = vmatpush1.bf16.msra.mxu0 %v77
  %99 = vmatprep.subr.bf16.mxu0 0
  %100 = vmatpush1.bf16.msra.mxu0 %v78
  %101 = vmatprep.subr.bf16.mxu0 0
  %102 = vmatpush1.bf16.msra.mxu0 %v79
  %103 = vmatprep.subr.bf16.mxu0 0
  %104 = vmatpush1.bf16.msra.mxu0 %v80
  %105 = vmatprep.subr.bf16.mxu0 0
  %106 = vmatpush1.bf16.msra.mxu0 0
  %107 = vmatprep.subr.bf16.mxu0 0
  %108 = vmatpush1.bf16.msra.mxu0 0
  %109 = vmatprep.subr.bf16.mxu0 0
  %110 = vmatpush1.bf16.msra.mxu0 0
  %111 = vmatprep.subr.bf16.mxu0 0
  %112 = vmatpush1.bf16.msra.mxu0 0
  %113 = vmatprep.subr.bf16.mxu0 0
  %114 = vmatpush1.bf16.msra.mxu0 0
  %115 = vmatprep.subr.bf16.mxu0 0
  %116 = vmatpush1.bf16.msra.mxu0 0
  %117 = vmatprep.subr.bf16.mxu0 0
  %118 = vmatpush1.bf16.msra.mxu0 0
  %119 = vmatprep.subr.bf16.mxu0 0
  %120 = vmatpush1.bf16.msra.mxu0 0
  %121 = vmatprep.mubr.bf16.mxu0 0
  %122 = vmatmul.mubr.bf16.gmra.mrb[0].mxu0 %v24
  %v123 = vpop.f32.mrb[0].mxu0
  %v124 = vadd.f32 0.0, %v123
  %v125 = vpop.f32.mrb[0].mxu0
  %v126 = vpop.f32.mrb[0].mxu0
  %v127 = vpop.f32.mrb[0].mxu0
  %128 = vdwg.mxu0
  %v129 = vld [vmem:[%s0] sm:$0xff]
  %v130 = vld [vmem:[%s2] sm:$0x1]
  %v132 = vlaneseq
  %v133 = vshrl.u32 %v132, 7
  %v134 = vsub.s32 0, %v133
  %v135 = vrot.slane %v130, %v134
  %v137 = vmul.f32 %v129, %v135
  %v138 = vadd.f32 %v137, %v124
  %v139 = vld [vmem:[%s4] sm:$0x1]
  %v141 = vlaneseq
  %v142 = vshrl.u32 %v141, 7
  %v143 = vsub.s32 0, %v142
  %v144 = vrot.slane %v139, %v143
  %v146 = vadd.f32 %v138, %v144
  %v147 = vld [vmem:[%s5] sm:$0xff]
  %v148 = vadd.f32 %v146, %v147
  %149 = vst [vmem:[%s6] sm:$0xff] %v148
  // Predicated region
  $region26: #{_lambda_.39} parent=0 // pred_check
    _
  $region27: #{_lambda_.39} parent=0 // pred_check_branch
    %151 = sbr.rel (0) target = $region29
  $region28: #{_lambda_.39} parent=0 // pred_region
    _
  $region29: #{_lambda_.39} parent=0 // pred_fallthru
    _
  // Predicated region
  $region30: #{_lambda_.39} parent=0 // pred_check
    _
  $region31: #{_lambda_.39} parent=0 // pred_check_branch
    %153 = sbr.rel (0) target = $region33
  $region32: #{_lambda_.39} parent=0 // pred_region
    _
  $region33: #{_lambda_.39} parent=0 // pred_fallthru
    _

</llo_original>
